<compile_context>
chip_gen: v6e
topology: v6e:2x2x1
jax: 0.10.0
libtpu: 0.0.40
codegen_flags: <defaults>
</compile_context>

<pallas_src>
import math

import jax
import jax.numpy as jnp
from jax.experimental import pallas as pl
from jax.experimental.pallas import tpu as pltpu

# ----------------------------- model config (small) -----------------------------
BATCH = 2
TGT_LEN = 8
SRC_LEN = 8
D_MODEL = 32
N_HEADS = 2
D_K = 16
D_V = 16
D_FF = 64
NUM_BLOCKS = 2          # model_config.dec_num_block
LN_EPS = 1e-5

_VMEM = pl.BlockSpec(memory_space=pltpu.MemorySpace.VMEM)


# --------------------------------- fused kernel ----------------------------------
def _layer_norm(h, g, b):
    # LayerNorm over last axis (population variance, eps=1e-5) — matches torch.
    mean = jnp.mean(h, axis=-1, keepdims=True)
    var = jnp.mean(jnp.square(h - mean), axis=-1, keepdims=True)
    return (h - mean) * jax.lax.rsqrt(var + LN_EPS) * g + b


def _decoder_kernel(dec_ref, enc_ref, sbias_ref, ebias_ref,
                    wqkv_s_ref, wo_s_ref, g1_ref, b1_ref,
                    wq_e_ref, wkv_e_ref, wo_e_ref, g2_ref, b2_ref,
                    w1_ref, w2_ref, g3_ref, b3_ref,
                    out_ref, sattn_ref, eattn_ref):
    """Whole decoder forward (all layers) in a single invocation.

    dec_ref:   [B*Lt, D]     enc_ref: [B*Ls, D]
    sbias/ebias: additive mask bias [B, Lt, Lt] / [B, Lt, Ls] (-1e9 where masked)
    Weights stacked over layers (leading axis = layer); 1/sqrt(d_k) is pre-folded
    into the Q columns of wqkv_s / wq_e.
    sattn_ref: [NUM_BLOCKS, B, H*Lt*Lt]   eattn_ref: [NUM_BLOCKS, B, H*Lt*Ls]
      (flat (h, q, k) minor layout -> lane-dense stores; wrapper just reshapes)
    """
    x = dec_ref[...]           # running decoder state, [B*Lt, D]
    enc = enc_ref[...]         # [B*Ls, D]
    sbias = sbias_ref[...]     # [B, Lt, Lt]
    ebias = ebias_ref[...]     # [B, Lt, Ls]
    B = sbias.shape[0]

    def mha(q_lin, k_lin, v_lin, bias, wo, attn_ref, layer):
        # q_lin [B*Lq, H*dk], k_lin [B*Lk, H*dk], v_lin [B*Lk, H*dv], bias [B, Lq, Lk]
        Lq, Lk = bias.shape[1], bias.shape[2]
        qk = Lq * Lk
        out = None
        for h in range(N_HEADS):
            qh = q_lin[:, h * D_K:(h + 1) * D_K].reshape(B, Lq, D_K)
            kh = k_lin[:, h * D_K:(h + 1) * D_K].reshape(B, Lk, D_K)
            vh = v_lin[:, h * D_V:(h + 1) * D_V].reshape(B, Lk, D_V)
            # scale already folded into the Q projection weights
            scores = jnp.einsum('bqd,bkd->bqk', qh, kh,
                                preferred_element_type=jnp.float32) + bias
            smax = jnp.max(scores, axis=-1, keepdims=True)
            e = jnp.exp(scores - smax)
            # exact normalization: attention maps are returned to the caller,
            # so keep them matching torch.softmax (no approx reciprocal drift).
            attn = e / jnp.sum(e, axis=-1, keepdims=True)
            # lane-dense store: (layer, b, h*Lq*Lk) slab layout; 64-lane chunks
            # instead of 8-lane masked partial stores, no wrapper transpose needed.
            attn_ref[layer, :, h * qk:(h + 1) * qk] = attn.reshape(B, qk)
            ctx = jnp.einsum('bqk,bkd->bqd', attn, vh,
                             preferred_element_type=jnp.float32)
            # fold the output projection in per head:  sum_h ctx_h @ wo_h
            contrib = jnp.dot(ctx.reshape(B * Lq, D_V),
                              wo[h * D_V:(h + 1) * D_V, :],
                              preferred_element_type=jnp.float32)
            out = contrib if out is None else out + contrib
        return out

    for l in range(NUM_BLOCKS):
        # ---------------- masked self-attention (fused QKV matmul) ----------------
        qkv = jnp.dot(x, wqkv_s_ref[l], preferred_element_type=jnp.float32)
        q = qkv[:, :N_HEADS * D_K]
        k = qkv[:, N_HEADS * D_K:2 * N_HEADS * D_K]
        v = qkv[:, 2 * N_HEADS * D_K:]
        sa = mha(q, k, v, sbias, wo_s_ref[l], sattn_ref, l)
        x = _layer_norm(sa + x, g1_ref[l], b1_ref[l])

        # ---------------- encoder-decoder attention (fused KV matmul) -------------
        q2 = jnp.dot(x, wq_e_ref[l], preferred_element_type=jnp.float32)
        kv2 = jnp.dot(enc, wkv_e_ref[l], preferred_element_type=jnp.float32)
        k2 = kv2[:, :N_HEADS * D_K]
        v2 = kv2[:, N_HEADS * D_K:]
        ea = mha(q2, k2, v2, ebias, wo_e_ref[l], eattn_ref, l)
        x = _layer_norm(ea + x, g2_ref[l], b2_ref[l])

        # ---------------- position-wise FFN ---------------------------------------
        hid = jnp.maximum(
            jnp.dot(x, w1_ref[l], preferred_element_type=jnp.float32), 0.0)
        ff = jnp.dot(hid, w2_ref[l], preferred_element_type=jnp.float32)
        x = _layer_norm(ff + x, g3_ref[l], b3_ref[l])

    out_ref[...] = x


# ------------------------------- forward wrapper ----------------------------------
@jax.jit
def decoder_forward(params, dec_input, enc_output, dec_self_attn_mask, dec_enc_attn_mask):
    B, Lt, D = dec_input.shape
    Ls = enc_output.shape[1]

    # additive mask bias (matches torch masked_fill(mask, -1e9)), computed once here
    sbias = jnp.where(dec_self_attn_mask > 0, -1e9, 0.0).astype(jnp.float32)
    ebias = jnp.where(dec_enc_attn_mask > 0, -1e9, 0.0).astype(jnp.float32)

    inputs = (
        dec_input.reshape(B * Lt, D).astype(jnp.float32),
        enc_output.reshape(B * Ls, D).astype(jnp.float32),
        sbias, ebias,
        params["w_self_qkv"], params["w_self_o"], params["ln1_g"], params["ln1_b"],
        params["w_enc_q"], params["w_enc_kv"], params["w_enc_o"],
        params["ln2_g"], params["ln2_b"],
        params["w_ffn1"], params["w_ffn2"], params["ln3_g"], params["ln3_b"],
    )
    out_shapes = [
        jax.ShapeDtypeStruct((B * Lt, D), jnp.float32),
        # flat (h, q, k) minor layout -> last dim is N_HEADS*Lt*Lt (=128 here): lane dense
        jax.ShapeDtypeStruct((NUM_BLOCKS, B, N_HEADS * Lt * Lt), jnp.float32),
        jax.ShapeDtypeStruct((NUM_BLOCKS, B, N_HEADS * Lt * Ls), jnp.float32),
    ]
    dec_out, sattn, eattn = pl.pallas_call(
        _decoder_kernel,
        out_shape=out_shapes,
        in_specs=[_VMEM] * len(inputs),
        out_specs=[_VMEM] * 3,
    )(*inputs)

    dec_out = dec_out.reshape(B, Lt, D)
    # stored as [layer, b, h, q, k] flat -> pure reshape, no transposes
    sattn = sattn.reshape(NUM_BLOCKS, B, N_HEADS, Lt, Lt)
    eattn = eattn.reshape(NUM_BLOCKS, B, N_HEADS, Lt, Ls)
    dec_self_attns = [sattn[l] for l in range(NUM_BLOCKS)]
    dec_enc_attns = [eattn[l] for l in range(NUM_BLOCKS)]
    return dec_out, dec_self_attns, dec_enc_attns


# ------------------------------- parameter init -----------------------------------
def init_params(key):
    def rnd(k, shape):
        return jax.random.normal(k, shape, jnp.float32) * 0.02

    scale = 1.0 / math.sqrt(D_K)   # pre-folded into Q projections (stored_wq = wq * scale)
    ks = jax.random.split(key, 10)

    wq_s = rnd(ks[0], (NUM_BLOCKS, D_MODEL, N_HEADS * D_K)) * scale
    wk_s = rnd(ks[1], (NUM_BLOCKS, D_MODEL, N_HEADS * D_K))
    wv_s = rnd(ks[2], (NUM_BLOCKS, D_MODEL, N_HEADS * D_V))
    wq_e = rnd(ks[3], (NUM_BLOCKS, D_MODEL, N_HEADS * D_K)) * scale
    wk_e = rnd(ks[4], (NUM_BLOCKS, D_MODEL, N_HEADS * D_K))
    wv_e = rnd(ks[5], (NUM_BLOCKS, D_MODEL, N_HEADS * D_V))

    return {
        # self-attention: [wq | wk | wv] concatenated into one matmul weight
        "w_self_qkv": jnp.concatenate([wq_s, wk_s, wv_s], axis=-1),
        "w_self_o":   rnd(ks[6], (NUM_BLOCKS, N_HEADS * D_V, D_MODEL)),
        "ln1_g": jnp.ones((NUM_BLOCKS, 1, D_MODEL), jnp.float32),
        "ln1_b": jnp.zeros((NUM_BLOCKS, 1, D_MODEL), jnp.float32),
        # enc-dec attention: q from decoder state, [wk | wv] concatenated for enc_output
        "w_enc_q":  wq_e,
        "w_enc_kv": jnp.concatenate([wk_e, wv_e], axis=-1),
        "w_enc_o":  rnd(ks[7], (NUM_BLOCKS, N_HEADS * D_V, D_MODEL)),
        "ln2_g": jnp.ones((NUM_BLOCKS, 1, D_MODEL), jnp.float32),
        "ln2_b": jnp.zeros((NUM_BLOCKS, 1, D_MODEL), jnp.float32),
        # position-wise FFN
        "w_ffn1": rnd(ks[8], (NUM_BLOCKS, D_MODEL, D_FF)),
        "w_ffn2": rnd(ks[9], (NUM_BLOCKS, D_FF, D_MODEL)),
        "ln3_g": jnp.ones((NUM_BLOCKS, 1, D_MODEL), jnp.float32),
        "ln3_b": jnp.zeros((NUM_BLOCKS, 1, D_MODEL), jnp.float32),
    }


# ------------------------------------- main ---------------------------------------
if __name__ == "__main__":
    key = jax.random.PRNGKey(0)
    key, kp, kd, ke = jax.random.split(key, 4)

    params = init_params(kp)
    dec_input = jax.random.normal(kd, (BATCH, TGT_LEN, D_MODEL), jnp.float32)
    enc_output = jax.random.normal(ke, (BATCH, SRC_LEN, D_MODEL), jnp.float32)

    # decoder self-attention mask = causal (subsequent) mask; 1 == masked position
    subseq = jnp.triu(jnp.ones((TGT_LEN, TGT_LEN), jnp.float32), k=1)
    dec_self_attn_mask = jnp.broadcast_to(subseq, (BATCH, TGT_LEN, TGT_LEN))
    # enc-dec attention mask: nothing masked (no padding in this synthetic example)
    dec_enc_attn_mask = jnp.zeros((BATCH, TGT_LEN, SRC_LEN), jnp.float32)

    dec_output, dec_self_attns, dec_enc_attns = decoder_forward(
        params, dec_input, enc_output, dec_self_attn_mask, dec_enc_attn_mask)

    jax.block_until_ready(dec_output)
    jax.block_until_ready(dec_self_attns)
    jax.block_until_ready(dec_enc_attns)

    assert dec_output.shape == (BATCH, TGT_LEN, D_MODEL)
    assert len(dec_self_attns) == NUM_BLOCKS and len(dec_enc_attns) == NUM_BLOCKS
    assert dec_self_attns[0].shape == (BATCH, N_HEADS, TGT_LEN, TGT_LEN)
    assert dec_enc_attns[0].shape == (BATCH, N_HEADS, TGT_LEN, SRC_LEN)
    # attention rows must be proper distributions (exact softmax normalization)
    row_sums = jnp.sum(dec_self_attns[0], axis=-1)
    assert bool(jnp.all(jnp.abs(row_sums - 1.0) < 1e-5))
    print("KERNEL_OK")
</pallas_src>

<mosaic_0001>
module attributes {stable_mosaic.version = 11 : i64} {
  func.func @_decoder_kernel(%arg0: memref<16x32xf32, #tpu.memory_space<vmem>>, %arg1: memref<16x32xf32, #tpu.memory_space<vmem>>, %arg2: memref<2x8x8xf32, #tpu.memory_space<vmem>>, %arg3: memref<2x8x8xf32, #tpu.memory_space<vmem>>, %arg4: memref<2x32x96xf32, #tpu.memory_space<vmem>>, %arg5: memref<2x32x32xf32, #tpu.memory_space<vmem>>, %arg6: memref<2x1x32xf32, #tpu.memory_space<vmem>>, %arg7: memref<2x1x32xf32, #tpu.memory_space<vmem>>, %arg8: memref<2x32x32xf32, #tpu.memory_space<vmem>>, %arg9: memref<2x32x64xf32, #tpu.memory_space<vmem>>, %arg10: memref<2x32x32xf32, #tpu.memory_space<vmem>>, %arg11: memref<2x1x32xf32, #tpu.memory_space<vmem>>, %arg12: memref<2x1x32xf32, #tpu.memory_space<vmem>>, %arg13: memref<2x32x64xf32, #tpu.memory_space<vmem>>, %arg14: memref<2x64x32xf32, #tpu.memory_space<vmem>>, %arg15: memref<2x1x32xf32, #tpu.memory_space<vmem>>, %arg16: memref<2x1x32xf32, #tpu.memory_space<vmem>>, %arg17: memref<16x32xf32, #tpu.memory_space<vmem>>, %arg18: memref<2x2x128xf32, #tpu.memory_space<vmem>>, %arg19: memref<2x2x128xf32, #tpu.memory_space<vmem>>) attributes {dimension_semantics = [], scalar_prefetch = 0 : i64, scratch_operands = 0 : i64, tpu.core_type = #tpu.core_type<tc>} {
    %c0 = arith.constant 0 : index
    %c0_0 = arith.constant 0 : index
    %0 = vector.load %arg0[%c0, %c0_0] : memref<16x32xf32, #tpu.memory_space<vmem>>, vector<16x32xf32>
    %c0_1 = arith.constant 0 : index
    %c0_2 = arith.constant 0 : index
    %1 = vector.load %arg1[%c0_1, %c0_2] : memref<16x32xf32, #tpu.memory_space<vmem>>, vector<16x32xf32>
    %c0_3 = arith.constant 0 : index
    %c0_4 = arith.constant 0 : index
    %c0_5 = arith.constant 0 : index
    %2 = vector.load %arg2[%c0_3, %c0_4, %c0_5] : memref<2x8x8xf32, #tpu.memory_space<vmem>>, vector<2x8x8xf32>
    %c0_6 = arith.constant 0 : index
    %c0_7 = arith.constant 0 : index
    %c0_8 = arith.constant 0 : index
    %3 = vector.load %arg3[%c0_6, %c0_7, %c0_8] : memref<2x8x8xf32, #tpu.memory_space<vmem>>, vector<2x8x8xf32>
    %c0_9 = arith.constant 0 : index
    %c0_10 = arith.constant 0 : index
    %c0_11 = arith.constant 0 : index
    %4 = vector.load %arg4[%c0_9, %c0_10, %c0_11] : memref<2x32x96xf32, #tpu.memory_space<vmem>>, vector<1x32x96xf32>
    %5 = vector.shape_cast %4 : vector<1x32x96xf32> to vector<32x96xf32>
    %cst = arith.constant dense<0.000000e+00> : vector<16x96xf32>
    %6 = tpu.matmul %0, %5, %cst {dimension_numbers = #tpu.dot_dimension_numbers<[1], [0], [0], [1], [0, 0, 1, 1], [], []>} : vector<16x32xf32>, vector<32x96xf32>, vector<16x96xf32> -> vector<16x96xf32>
    %7 = vector.extract_strided_slice %6 {offsets = [0, 0], sizes = [16, 32], strides = [1, 1]} : vector<16x96xf32> to vector<16x32xf32>
    %8 = vector.extract_strided_slice %6 {offsets = [0, 32], sizes = [16, 32], strides = [1, 1]} : vector<16x96xf32> to vector<16x32xf32>
    %9 = vector.extract_strided_slice %6 {offsets = [0, 64], sizes = [16, 32], strides = [1, 1]} : vector<16x96xf32> to vector<16x32xf32>
    %c0_12 = arith.constant 0 : index
    %c0_13 = arith.constant 0 : index
    %c0_14 = arith.constant 0 : index
    %10 = vector.load %arg5[%c0_12, %c0_13, %c0_14] : memref<2x32x32xf32, #tpu.memory_space<vmem>>, vector<1x32x32xf32>
    %11 = vector.shape_cast %10 : vector<1x32x32xf32> to vector<32x32xf32>
    %12 = vector.extract_strided_slice %7 {offsets = [0, 0], sizes = [16, 16], strides = [1, 1]} : vector<16x32xf32> to vector<16x16xf32>
    %13 = vector.shape_cast %12 : vector<16x16xf32> to vector<2x8x16xf32>
    %14 = vector.extract_strided_slice %8 {offsets = [0, 0], sizes = [16, 16], strides = [1, 1]} : vector<16x32xf32> to vector<16x16xf32>
    %15 = vector.shape_cast %14 : vector<16x16xf32> to vector<2x8x16xf32>
    %16 = vector.extract_strided_slice %9 {offsets = [0, 0], sizes = [16, 16], strides = [1, 1]} : vector<16x32xf32> to vector<16x16xf32>
    %17 = vector.shape_cast %16 : vector<16x16xf32> to vector<2x8x16xf32>
    "tpu.trace_start"() <{level = 10 : i32, message = "bqd,bkd->bqk"}> : () -> ()
    %cst_15 = arith.constant dense<0.000000e+00> : vector<2x8x8xf32>
    %18 = tpu.matmul %13, %15, %cst_15 {dimension_numbers = #tpu.dot_dimension_numbers<[2], [2], [1], [1], [0, 0, 0, 1, 1, 1], [0], [0]>} : vector<2x8x16xf32>, vector<2x8x16xf32>, vector<2x8x8xf32> -> vector<2x8x8xf32>
    "tpu.trace_stop"() : () -> ()
    %19 = arith.addf %18, %2 : vector<2x8x8xf32>
    %cst_16 = arith.constant dense<0xFF800000> : vector<2x8xf32>
    %20 = vector.multi_reduction <maximumf>, %19, %cst_16 [2] : vector<2x8x8xf32> to vector<2x8xf32>
    %21 = vector.shape_cast %20 : vector<2x8xf32> to vector<2x8x1xf32>
    %22 = vector.broadcast %21 : vector<2x8x1xf32> to vector<2x8x8xf32>
    %23 = arith.subf %19, %22 : vector<2x8x8xf32>
    %24 = math.exp %23 : vector<2x8x8xf32>
    %cst_17 = arith.constant dense<0.000000e+00> : vector<2x8xf32>
    %25 = vector.multi_reduction <add>, %24, %cst_17 [2] : vector<2x8x8xf32> to vector<2x8xf32>
    %26 = vector.shape_cast %25 : vector<2x8xf32> to vector<2x8x1xf32>
    %27 = vector.broadcast %26 : vector<2x8x1xf32> to vector<2x8x8xf32>
    %28 = arith.divf %24, %27 : vector<2x8x8xf32>
    %29 = vector.shape_cast %28 : vector<2x8x8xf32> to vector<2x64xf32>
    %c0_18 = arith.constant 0 : index
    %c0_19 = arith.constant 0 : index
    %c0_20 = arith.constant 0 : index
    %30 = vector.load %arg18[%c0_18, %c0_19, %c0_20] : memref<2x2x128xf32, #tpu.memory_space<vmem>>, vector<1x2x64xf32>
    %31 = vector.shape_cast %30 : vector<1x2x64xf32> to vector<2x64xf32>
    %32 = vector.shape_cast %29 : vector<2x64xf32> to vector<1x2x64xf32>
    tpu.vector_store %arg18[%c0_18, %c0_19, %c0_20], %32 {strides = array<i32>} : memref<2x2x128xf32, #tpu.memory_space<vmem>>, vector<1x2x64xf32>,
    "tpu.trace_start"() <{level = 10 : i32, message = "bqk,bkd->bqd"}> : () -> ()
    %cst_21 = arith.constant dense<0.000000e+00> : vector<2x8x16xf32>
    %33 = tpu.matmul %28, %17, %cst_21 {dimension_numbers = #tpu.dot_dimension_numbers<[2], [1], [1], [2], [0, 0, 0, 1, 1, 2], [0], [0]>} : vector<2x8x8xf32>, vector<2x8x16xf32>, vector<2x8x16xf32> -> vector<2x8x16xf32>
    "tpu.trace_stop"() : () -> ()
    %34 = vector.shape_cast %33 : vector<2x8x16xf32> to vector<16x16xf32>
    %35 = vector.extract_strided_slice %11 {offsets = [0, 0], sizes = [16, 32], strides = [1, 1]} : vector<32x32xf32> to vector<16x32xf32>
    %cst_22 = arith.constant dense<0.000000e+00> : vector<16x32xf32>
    %36 = tpu.matmul %34, %35, %cst_22 {dimension_numbers = #tpu.dot_dimension_numbers<[1], [0], [0], [1], [0, 0, 1, 1], [], []>} : vector<16x16xf32>, vector<16x32xf32>, vector<16x32xf32> -> vector<16x32xf32>
    %37 = vector.extract_strided_slice %7 {offsets = [0, 16], sizes = [16, 16], strides = [1, 1]} : vector<16x32xf32> to vector<16x16xf32>
    %38 = vector.shape_cast %37 : vector<16x16xf32> to vector<2x8x16xf32>
    %39 = vector.extract_strided_slice %8 {offsets = [0, 16], sizes = [16, 16], strides = [1, 1]} : vector<16x32xf32> to vector<16x16xf32>
    %40 = vector.shape_cast %39 : vector<16x16xf32> to vector<2x8x16xf32>
    %41 = vector.extract_strided_slice %9 {offsets = [0, 16], sizes = [16, 16], strides = [1, 1]} : vector<16x32xf32> to vector<16x16xf32>
    %42 = vector.shape_cast %41 : vector<16x16xf32> to vector<2x8x16xf32>
    "tpu.trace_start"() <{level = 10 : i32, message = "bqd,bkd->bqk"}> : () -> ()
    %cst_23 = arith.constant dense<0.000000e+00> : vector<2x8x8xf32>
    %43 = tpu.matmul %38, %40, %cst_23 {dimension_numbers = #tpu.dot_dimension_numbers<[2], [2], [1], [1], [0, 0, 0, 1, 1, 1], [0], [0]>} : vector<2x8x16xf32>, vector<2x8x16xf32>, vector<2x8x8xf32> -> vector<2x8x8xf32>
    "tpu.trace_stop"() : () -> ()
    %44 = arith.addf %43, %2 : vector<2x8x8xf32>
    %cst_24 = arith.constant dense<0xFF800000> : vector<2x8xf32>
    %45 = vector.multi_reduction <maximumf>, %44, %cst_24 [2] : vector<2x8x8xf32> to vector<2x8xf32>
    %46 = vector.shape_cast %45 : vector<2x8xf32> to vector<2x8x1xf32>
    %47 = vector.broadcast %46 : vector<2x8x1xf32> to vector<2x8x8xf32>
    %48 = arith.subf %44, %47 : vector<2x8x8xf32>
    %49 = math.exp %48 : vector<2x8x8xf32>
    %cst_25 = arith.constant dense<0.000000e+00> : vector<2x8xf32>
    %50 = vector.multi_reduction <add>, %49, %cst_25 [2] : vector<2x8x8xf32> to vector<2x8xf32>
    %51 = vector.shape_cast %50 : vector<2x8xf32> to vector<2x8x1xf32>
    %52 = vector.broadcast %51 : vector<2x8x1xf32> to vector<2x8x8xf32>
    %53 = arith.divf %49, %52 : vector<2x8x8xf32>
    %54 = vector.shape_cast %53 : vector<2x8x8xf32> to vector<2x64xf32>
    %c0_26 = arith.constant 0 : index
    %c0_27 = arith.constant 0 : index
    %c64 = arith.constant 64 : index
    %55 = vector.load %arg18[%c0_26, %c0_27, %c64] : memref<2x2x128xf32, #tpu.memory_space<vmem>>, vector<1x2x64xf32>
    %56 = vector.shape_cast %55 : vector<1x2x64xf32> to vector<2x64xf32>
    %57 = vector.shape_cast %54 : vector<2x64xf32> to vector<1x2x64xf32>
    tpu.vector_store %arg18[%c0_26, %c0_27, %c64], %57 {strides = array<i32>} : memref<2x2x128xf32, #tpu.memory_space<vmem>>, vector<1x2x64xf32>,
    "tpu.trace_start"() <{level = 10 : i32, message = "bqk,bkd->bqd"}> : () -> ()
    %cst_28 = arith.constant dense<0.000000e+00> : vector<2x8x16xf32>
    %58 = tpu.matmul %53, %42, %cst_28 {dimension_numbers = #tpu.dot_dimension_numbers<[2], [1], [1], [2], [0, 0, 0, 1, 1, 2], [0], [0]>} : vector<2x8x8xf32>, vector<2x8x16xf32>, vector<2x8x16xf32> -> vector<2x8x16xf32>
    "tpu.trace_stop"() : () -> ()
    %59 = vector.shape_cast %58 : vector<2x8x16xf32> to vector<16x16xf32>
    %60 = vector.extract_strided_slice %11 {offsets = [16, 0], sizes = [16, 32], strides = [1, 1]} : vector<32x32xf32> to vector<16x32xf32>
    %cst_29 = arith.constant dense<0.000000e+00> : vector<16x32xf32>
    %61 = tpu.matmul %59, %60, %cst_29 {dimension_numbers = #tpu.dot_dimension_numbers<[1], [0], [0], [1], [0, 0, 1, 1], [], []>} : vector<16x16xf32>, vector<16x32xf32>, vector<16x32xf32> -> vector<16x32xf32>
    %62 = arith.addf %36, %61 : vector<16x32xf32>
    %63 = arith.addf %62, %0 : vector<16x32xf32>
    %c0_30 = arith.constant 0 : index
    %c0_31 = arith.constant 0 : index
    %c0_32 = arith.constant 0 : index
    %64 = vector.load %arg6[%c0_30, %c0_31, %c0_32] : memref<2x1x32xf32, #tpu.memory_space<vmem>>, vector<1x1x32xf32>
    %65 = vector.shape_cast %64 : vector<1x1x32xf32> to vector<1x32xf32>
    %c0_33 = arith.constant 0 : index
    %c0_34 = arith.constant 0 : index
    %c0_35 = arith.constant 0 : index
    %66 = vector.load %arg7[%c0_33, %c0_34, %c0_35] : memref<2x1x32xf32, #tpu.memory_space<vmem>>, vector<1x1x32xf32>
    %67 = vector.shape_cast %66 : vector<1x1x32xf32> to vector<1x32xf32>
    %cst_36 = arith.constant dense<0.000000e+00> : vector<16xf32>
    %68 = vector.multi_reduction <add>, %63, %cst_36 [1] : vector<16x32xf32> to vector<16xf32>
    %69 = vector.shape_cast %68 : vector<16xf32> to vector<16x1xf32>
    %cst_37 = arith.constant 3.200000e+01 : f32
    %70 = vector.broadcast %cst_37 : f32 to vector<16x1xf32>
    %71 = arith.divf %69, %70 : vector<16x1xf32>
    %72 = vector.broadcast %71 : vector<16x1xf32> to vector<16x32xf32>
    %73 = arith.subf %63, %72 : vector<16x32xf32>
    %74 = arith.mulf %73, %73 : vector<16x32xf32>
    %cst_38 = arith.constant dense<0.000000e+00> : vector<16xf32>
    %75 = vector.multi_reduction <add>, %74, %cst_38 [1] : vector<16x32xf32> to vector<16xf32>
    %76 = vector.shape_cast %75 : vector<16xf32> to vector<16x1xf32>
    %cst_39 = arith.constant 3.200000e+01 : f32
    %77 = vector.broadcast %cst_39 : f32 to vector<16x1xf32>
    %78 = arith.divf %76, %77 : vector<16x1xf32>
    %79 = vector.broadcast %71 : vector<16x1xf32> to vector<16x32xf32>
    %80 = arith.subf %63, %79 : vector<16x32xf32>
    %cst_40 = arith.constant 9.99999974E-6 : f32
    %81 = vector.broadcast %cst_40 : f32 to vector<16x1xf32>
    %82 = arith.addf %78, %81 : vector<16x1xf32>
    %83 = math.rsqrt %82 : vector<16x1xf32>
    %84 = vector.broadcast %83 : vector<16x1xf32> to vector<16x32xf32>
    %85 = arith.mulf %80, %84 : vector<16x32xf32>
    %86 = vector.broadcast %65 : vector<1x32xf32> to vector<16x32xf32>
    %87 = arith.mulf %85, %86 : vector<16x32xf32>
    %88 = vector.broadcast %67 : vector<1x32xf32> to vector<16x32xf32>
    %89 = arith.addf %87, %88 : vector<16x32xf32>
    %c0_41 = arith.constant 0 : index
    %c0_42 = arith.constant 0 : index
    %c0_43 = arith.constant 0 : index
    %90 = vector.load %arg8[%c0_41, %c0_42, %c0_43] : memref<2x32x32xf32, #tpu.memory_space<vmem>>, vector<1x32x32xf32>
    %91 = vector.shape_cast %90 : vector<1x32x32xf32> to vector<32x32xf32>
    %cst_44 = arith.constant dense<0.000000e+00> : vector<16x32xf32>
    %92 = tpu.matmul %89, %91, %cst_44 {dimension_numbers = #tpu.dot_dimension_numbers<[1], [0], [0], [1], [0, 0, 1, 1], [], []>} : vector<16x32xf32>, vector<32x32xf32>, vector<16x32xf32> -> vector<16x32xf32>
    %c0_45 = arith.constant 0 : index
    %c0_46 = arith.constant 0 : index
    %c0_47 = arith.constant 0 : index
    %93 = vector.load %arg9[%c0_45, %c0_46, %c0_47] : memref<2x32x64xf32, #tpu.memory_space<vmem>>, vector<1x32x64xf32>
    %94 = vector.shape_cast %93 : vector<1x32x64xf32> to vector<32x64xf32>
    %cst_48 = arith.constant dense<0.000000e+00> : vector<16x64xf32>
    %95 = tpu.matmul %1, %94, %cst_48 {dimension_numbers = #tpu.dot_dimension_numbers<[1], [0], [0], [1], [0, 0, 1, 1], [], []>} : vector<16x32xf32>, vector<32x64xf32>, vector<16x64xf32> -> vector<16x64xf32>
    %96 = vector.extract_strided_slice %95 {offsets = [0, 0], sizes = [16, 32], strides = [1, 1]} : vector<16x64xf32> to vector<16x32xf32>
    %97 = vector.extract_strided_slice %95 {offsets = [0, 32], sizes = [16, 32], strides = [1, 1]} : vector<16x64xf32> to vector<16x32xf32>
    %c0_49 = arith.constant 0 : index
    %c0_50 = arith.constant 0 : index
    %c0_51 = arith.constant 0 : index
    %98 = vector.load %arg10[%c0_49, %c0_50, %c0_51] : memref<2x32x32xf32, #tpu.memory_space<vmem>>, vector<1x32x32xf32>
    %99 = vector.shape_cast %98 : vector<1x32x32xf32> to vector<32x32xf32>
    %100 = vector.extract_strided_slice %92 {offsets = [0, 0], sizes = [16, 16], strides = [1, 1]} : vector<16x32xf32> to vector<16x16xf32>
    %101 = vector.shape_cast %100 : vector<16x16xf32> to vector<2x8x16xf32>
    %102 = vector.extract_strided_slice %96 {offsets = [0, 0], sizes = [16, 16], strides = [1, 1]} : vector<16x32xf32> to vector<16x16xf32>
    %103 = vector.shape_cast %102 : vector<16x16xf32> to vector<2x8x16xf32>
    %104 = vector.extract_strided_slice %97 {offsets = [0, 0], sizes = [16, 16], strides = [1, 1]} : vector<16x32xf32> to vector<16x16xf32>
    %105 = vector.shape_cast %104 : vector<16x16xf32> to vector<2x8x16xf32>
    "tpu.trace_start"() <{level = 10 : i32, message = "bqd,bkd->bqk"}> : () -> ()
    %cst_52 = arith.constant dense<0.000000e+00> : vector<2x8x8xf32>
    %106 = tpu.matmul %101, %103, %cst_52 {dimension_numbers = #tpu.dot_dimension_numbers<[2], [2], [1], [1], [0, 0, 0, 1, 1, 1], [0], [0]>} : vector<2x8x16xf32>, vector<2x8x16xf32>, vector<2x8x8xf32> -> vector<2x8x8xf32>
    "tpu.trace_stop"() : () -> ()
    %107 = arith.addf %106, %3 : vector<2x8x8xf32>
    %cst_53 = arith.constant dense<0xFF800000> : vector<2x8xf32>
    %108 = vector.multi_reduction <maximumf>, %107, %cst_53 [2] : vector<2x8x8xf32> to vector<2x8xf32>
    %109 = vector.shape_cast %108 : vector<2x8xf32> to vector<2x8x1xf32>
    %110 = vector.broadcast %109 : vector<2x8x1xf32> to vector<2x8x8xf32>
    %111 = arith.subf %107, %110 : vector<2x8x8xf32>
    %112 = math.exp %111 : vector<2x8x8xf32>
    %cst_54 = arith.constant dense<0.000000e+00> : vector<2x8xf32>
    %113 = vector.multi_reduction <add>, %112, %cst_54 [2] : vector<2x8x8xf32> to vector<2x8xf32>
    %114 = vector.shape_cast %113 : vector<2x8xf32> to vector<2x8x1xf32>
    %115 = vector.broadcast %114 : vector<2x8x1xf32> to vector<2x8x8xf32>
    %116 = arith.divf %112, %115 : vector<2x8x8xf32>
    %117 = vector.shape_cast %116 : vector<2x8x8xf32> to vector<2x64xf32>
    %c0_55 = arith.constant 0 : index
    %c0_56 = arith.constant 0 : index
    %c0_57 = arith.constant 0 : index
    %118 = vector.load %arg19[%c0_55, %c0_56, %c0_57] : memref<2x2x128xf32, #tpu.memory_space<vmem>>, vector<1x2x64xf32>
    %119 = vector.shape_cast %118 : vector<1x2x64xf32> to vector<2x64xf32>
    %120 = vector.shape_cast %117 : vector<2x64xf32> to vector<1x2x64xf32>
    tpu.vector_store %arg19[%c0_55, %c0_56, %c0_57], %120 {strides = array<i32>} : memref<2x2x128xf32, #tpu.memory_space<vmem>>, vector<1x2x64xf32>,
    "tpu.trace_start"() <{level = 10 : i32, message = "bqk,bkd->bqd"}> : () -> ()
    %cst_58 = arith.constant dense<0.000000e+00> : vector<2x8x16xf32>
    %121 = tpu.matmul %116, %105, %cst_58 {dimension_numbers = #tpu.dot_dimension_numbers<[2], [1], [1], [2], [0, 0, 0, 1, 1, 2], [0], [0]>} : vector<2x8x8xf32>, vector<2x8x16xf32>, vector<2x8x16xf32> -> vector<2x8x16xf32>
    "tpu.trace_stop"() : () -> ()
    %122 = vector.shape_cast %121 : vector<2x8x16xf32> to vector<16x16xf32>
    %123 = vector.extract_strided_slice %99 {offsets = [0, 0], sizes = [16, 32], strides = [1, 1]} : vector<32x32xf32> to vector<16x32xf32>
    %cst_59 = arith.constant dense<0.000000e+00> : vector<16x32xf32>
    %124 = tpu.matmul %122, %123, %cst_59 {dimension_numbers = #tpu.dot_dimension_numbers<[1], [0], [0], [1], [0, 0, 1, 1], [], []>} : vector<16x16xf32>, vector<16x32xf32>, vector<16x32xf32> -> vector<16x32xf32>
    %125 = vector.extract_strided_slice %92 {offsets = [0, 16], sizes = [16, 16], strides = [1, 1]} : vector<16x32xf32> to vector<16x16xf32>
    %126 = vector.shape_cast %125 : vector<16x16xf32> to vector<2x8x16xf32>
    %127 = vector.extract_strided_slice %96 {offsets = [0, 16], sizes = [16, 16], strides = [1, 1]} : vector<16x32xf32> to vector<16x16xf32>
    %128 = vector.shape_cast %127 : vector<16x16xf32> to vector<2x8x16xf32>
    %129 = vector.extract_strided_slice %97 {offsets = [0, 16], sizes = [16, 16], strides = [1, 1]} : vector<16x32xf32> to vector<16x16xf32>
    %130 = vector.shape_cast %129 : vector<16x16xf32> to vector<2x8x16xf32>
    "tpu.trace_start"() <{level = 10 : i32, message = "bqd,bkd->bqk"}> : () -> ()
    %cst_60 = arith.constant dense<0.000000e+00> : vector<2x8x8xf32>
    %131 = tpu.matmul %126, %128, %cst_60 {dimension_numbers = #tpu.dot_dimension_numbers<[2], [2], [1], [1], [0, 0, 0, 1, 1, 1], [0], [0]>} : vector<2x8x16xf32>, vector<2x8x16xf32>, vector<2x8x8xf32> -> vector<2x8x8xf32>
    "tpu.trace_stop"() : () -> ()
    %132 = arith.addf %131, %3 : vector<2x8x8xf32>
    %cst_61 = arith.constant dense<0xFF800000> : vector<2x8xf32>
    %133 = vector.multi_reduction <maximumf>, %132, %cst_61 [2] : vector<2x8x8xf32> to vector<2x8xf32>
    %134 = vector.shape_cast %133 : vector<2x8xf32> to vector<2x8x1xf32>
    %135 = vector.broadcast %134 : vector<2x8x1xf32> to vector<2x8x8xf32>
    %136 = arith.subf %132, %135 : vector<2x8x8xf32>
    %137 = math.exp %136 : vector<2x8x8xf32>
    %cst_62 = arith.constant dense<0.000000e+00> : vector<2x8xf32>
    %138 = vector.multi_reduction <add>, %137, %cst_62 [2] : vector<2x8x8xf32> to vector<2x8xf32>
    %139 = vector.shape_cast %138 : vector<2x8xf32> to vector<2x8x1xf32>
    %140 = vector.broadcast %139 : vector<2x8x1xf32> to vector<2x8x8xf32>
    %141 = arith.divf %137, %140 : vector<2x8x8xf32>
    %142 = vector.shape_cast %141 : vector<2x8x8xf32> to vector<2x64xf32>
    %c0_63 = arith.constant 0 : index
    %c0_64 = arith.constant 0 : index
    %c64_65 = arith.constant 64 : index
    %143 = vector.load %arg19[%c0_63, %c0_64, %c64_65] : memref<2x2x128xf32, #tpu.memory_space<vmem>>, vector<1x2x64xf32>
    %144 = vector.shape_cast %143 : vector<1x2x64xf32> to vector<2x64xf32>
    %145 = vector.shape_cast %142 : vector<2x64xf32> to vector<1x2x64xf32>
    tpu.vector_store %arg19[%c0_63, %c0_64, %c64_65], %145 {strides = array<i32>} : memref<2x2x128xf32, #tpu.memory_space<vmem>>, vector<1x2x64xf32>,
    "tpu.trace_start"() <{level = 10 : i32, message = "bqk,bkd->bqd"}> : () -> ()
    %cst_66 = arith.constant dense<0.000000e+00> : vector<2x8x16xf32>
    %146 = tpu.matmul %141, %130, %cst_66 {dimension_numbers = #tpu.dot_dimension_numbers<[2], [1], [1], [2], [0, 0, 0, 1, 1, 2], [0], [0]>} : vector<2x8x8xf32>, vector<2x8x16xf32>, vector<2x8x16xf32> -> vector<2x8x16xf32>
    "tpu.trace_stop"() : () -> ()
    %147 = vector.shape_cast %146 : vector<2x8x16xf32> to vector<16x16xf32>
    %148 = vector.extract_strided_slice %99 {offsets = [16, 0], sizes = [16, 32], strides = [1, 1]} : vector<32x32xf32> to vector<16x32xf32>
    %cst_67 = arith.constant dense<0.000000e+00> : vector<16x32xf32>
    %149 = tpu.matmul %147, %148, %cst_67 {dimension_numbers = #tpu.dot_dimension_numbers<[1], [0], [0], [1], [0, 0, 1, 1], [], []>} : vector<16x16xf32>, vector<16x32xf32>, vector<16x32xf32> -> vector<16x32xf32>
    %150 = arith.addf %124, %149 : vector<16x32xf32>
    %151 = arith.addf %150, %89 : vector<16x32xf32>
    %c0_68 = arith.constant 0 : index
    %c0_69 = arith.constant 0 : index
    %c0_70 = arith.constant 0 : index
    %152 = vector.load %arg11[%c0_68, %c0_69, %c0_70] : memref<2x1x32xf32, #tpu.memory_space<vmem>>, vector<1x1x32xf32>
    %153 = vector.shape_cast %152 : vector<1x1x32xf32> to vector<1x32xf32>
    %c0_71 = arith.constant 0 : index
    %c0_72 = arith.constant 0 : index
    %c0_73 = arith.constant 0 : index
    %154 = vector.load %arg12[%c0_71, %c0_72, %c0_73] : memref<2x1x32xf32, #tpu.memory_space<vmem>>, vector<1x1x32xf32>
    %155 = vector.shape_cast %154 : vector<1x1x32xf32> to vector<1x32xf32>
    %cst_74 = arith.constant dense<0.000000e+00> : vector<16xf32>
    %156 = vector.multi_reduction <add>, %151, %cst_74 [1] : vector<16x32xf32> to vector<16xf32>
    %157 = vector.shape_cast %156 : vector<16xf32> to vector<16x1xf32>
    %cst_75 = arith.constant 3.200000e+01 : f32
    %158 = vector.broadcast %cst_75 : f32 to vector<16x1xf32>
    %159 = arith.divf %157, %158 : vector<16x1xf32>
    %160 = vector.broadcast %159 : vector<16x1xf32> to vector<16x32xf32>
    %161 = arith.subf %151, %160 : vector<16x32xf32>
    %162 = arith.mulf %161, %161 : vector<16x32xf32>
    %cst_76 = arith.constant dense<0.000000e+00> : vector<16xf32>
    %163 = vector.multi_reduction <add>, %162, %cst_76 [1] : vector<16x32xf32> to vector<16xf32>
    %164 = vector.shape_cast %163 : vector<16xf32> to vector<16x1xf32>
    %cst_77 = arith.constant 3.200000e+01 : f32
    %165 = vector.broadcast %cst_77 : f32 to vector<16x1xf32>
    %166 = arith.divf %164, %165 : vector<16x1xf32>
    %167 = vector.broadcast %159 : vector<16x1xf32> to vector<16x32xf32>
    %168 = arith.subf %151, %167 : vector<16x32xf32>
    %cst_78 = arith.constant 9.99999974E-6 : f32
    %169 = vector.broadcast %cst_78 : f32 to vector<16x1xf32>
    %170 = arith.addf %166, %169 : vector<16x1xf32>
    %171 = math.rsqrt %170 : vector<16x1xf32>
    %172 = vector.broadcast %171 : vector<16x1xf32> to vector<16x32xf32>
    %173 = arith.mulf %168, %172 : vector<16x32xf32>
    %174 = vector.broadcast %153 : vector<1x32xf32> to vector<16x32xf32>
    %175 = arith.mulf %173, %174 : vector<16x32xf32>
    %176 = vector.broadcast %155 : vector<1x32xf32> to vector<16x32xf32>
    %177 = arith.addf %175, %176 : vector<16x32xf32>
    %c0_79 = arith.constant 0 : index
    %c0_80 = arith.constant 0 : index
    %c0_81 = arith.constant 0 : index
    %178 = vector.load %arg13[%c0_79, %c0_80, %c0_81] : memref<2x32x64xf32, #tpu.memory_space<vmem>>, vector<1x32x64xf32>
    %179 = vector.shape_cast %178 : vector<1x32x64xf32> to vector<32x64xf32>
    %cst_82 = arith.constant dense<0.000000e+00> : vector<16x64xf32>
    %180 = tpu.matmul %177, %179, %cst_82 {dimension_numbers = #tpu.dot_dimension_numbers<[1], [0], [0], [1], [0, 0, 1, 1], [], []>} : vector<16x32xf32>, vector<32x64xf32>, vector<16x64xf32> -> vector<16x64xf32>
    %cst_83 = arith.constant 0.000000e+00 : f32
    %181 = vector.broadcast %cst_83 : f32 to vector<16x64xf32>
    %182 = arith.maximumf %180, %181 : vector<16x64xf32>
    %c0_84 = arith.constant 0 : index
    %c0_85 = arith.constant 0 : index
    %c0_86 = arith.constant 0 : index
    %183 = vector.load %arg14[%c0_84, %c0_85, %c0_86] : memref<2x64x32xf32, #tpu.memory_space<vmem>>, vector<1x64x32xf32>
    %184 = vector.shape_cast %183 : vector<1x64x32xf32> to vector<64x32xf32>
    %cst_87 = arith.constant dense<0.000000e+00> : vector<16x32xf32>
    %185 = tpu.matmul %182, %184, %cst_87 {dimension_numbers = #tpu.dot_dimension_numbers<[1], [0], [0], [1], [0, 0, 1, 1], [], []>} : vector<16x64xf32>, vector<64x32xf32>, vector<16x32xf32> -> vector<16x32xf32>
    %186 = arith.addf %185, %177 : vector<16x32xf32>
    %c0_88 = arith.constant 0 : index
    %c0_89 = arith.constant 0 : index
    %c0_90 = arith.constant 0 : index
    %187 = vector.load %arg15[%c0_88, %c0_89, %c0_90] : memref<2x1x32xf32, #tpu.memory_space<vmem>>, vector<1x1x32xf32>
    %188 = vector.shape_cast %187 : vector<1x1x32xf32> to vector<1x32xf32>
    %c0_91 = arith.constant 0 : index
    %c0_92 = arith.constant 0 : index
    %c0_93 = arith.constant 0 : index
    %189 = vector.load %arg16[%c0_91, %c0_92, %c0_93] : memref<2x1x32xf32, #tpu.memory_space<vmem>>, vector<1x1x32xf32>
    %190 = vector.shape_cast %189 : vector<1x1x32xf32> to vector<1x32xf32>
    %cst_94 = arith.constant dense<0.000000e+00> : vector<16xf32>
    %191 = vector.multi_reduction <add>, %186, %cst_94 [1] : vector<16x32xf32> to vector<16xf32>
    %192 = vector.shape_cast %191 : vector<16xf32> to vector<16x1xf32>
    %cst_95 = arith.constant 3.200000e+01 : f32
    %193 = vector.broadcast %cst_95 : f32 to vector<16x1xf32>
    %194 = arith.divf %192, %193 : vector<16x1xf32>
    %195 = vector.broadcast %194 : vector<16x1xf32> to vector<16x32xf32>
    %196 = arith.subf %186, %195 : vector<16x32xf32>
    %197 = arith.mulf %196, %196 : vector<16x32xf32>
    %cst_96 = arith.constant dense<0.000000e+00> : vector<16xf32>
    %198 = vector.multi_reduction <add>, %197, %cst_96 [1] : vector<16x32xf32> to vector<16xf32>
    %199 = vector.shape_cast %198 : vector<16xf32> to vector<16x1xf32>
    %cst_97 = arith.constant 3.200000e+01 : f32
    %200 = vector.broadcast %cst_97 : f32 to vector<16x1xf32>
    %201 = arith.divf %199, %200 : vector<16x1xf32>
    %202 = vector.broadcast %194 : vector<16x1xf32> to vector<16x32xf32>
    %203 = arith.subf %186, %202 : vector<16x32xf32>
    %cst_98 = arith.constant 9.99999974E-6 : f32
    %204 = vector.broadcast %cst_98 : f32 to vector<16x1xf32>
    %205 = arith.addf %201, %204 : vector<16x1xf32>
    %206 = math.rsqrt %205 : vector<16x1xf32>
    %207 = vector.broadcast %206 : vector<16x1xf32> to vector<16x32xf32>
    %208 = arith.mulf %203, %207 : vector<16x32xf32>
    %209 = vector.broadcast %188 : vector<1x32xf32> to vector<16x32xf32>
    %210 = arith.mulf %208, %209 : vector<16x32xf32>
    %211 = vector.broadcast %190 : vector<1x32xf32> to vector<16x32xf32>
    %212 = arith.addf %210, %211 : vector<16x32xf32>
    %c1 = arith.constant 1 : index
    %c0_99 = arith.constant 0 : index
    %c0_100 = arith.constant 0 : index
    %213 = vector.load %arg4[%c1, %c0_99, %c0_100] : memref<2x32x96xf32, #tpu.memory_space<vmem>>, vector<1x32x96xf32>
    %214 = vector.shape_cast %213 : vector<1x32x96xf32> to vector<32x96xf32>
    %cst_101 = arith.constant dense<0.000000e+00> : vector<16x96xf32>
    %215 = tpu.matmul %212, %214, %cst_101 {dimension_numbers = #tpu.dot_dimension_numbers<[1], [0], [0], [1], [0, 0, 1, 1], [], []>} : vector<16x32xf32>, vector<32x96xf32>, vector<16x96xf32> -> vector<16x96xf32>
    %216 = vector.extract_strided_slice %215 {offsets = [0, 0], sizes = [16, 32], strides = [1, 1]} : vector<16x96xf32> to vector<16x32xf32>
    %217 = vector.extract_strided_slice %215 {offsets = [0, 32], sizes = [16, 32], strides = [1, 1]} : vector<16x96xf32> to vector<16x32xf32>
    %218 = vector.extract_strided_slice %215 {offsets = [0, 64], sizes = [16, 32], strides = [1, 1]} : vector<16x96xf32> to vector<16x32xf32>
    %c1_102 = arith.constant 1 : index
    %c0_103 = arith.constant 0 : index
    %c0_104 = arith.constant 0 : index
    %219 = vector.load %arg5[%c1_102, %c0_103, %c0_104] : memref<2x32x32xf32, #tpu.memory_space<vmem>>, vector<1x32x32xf32>
    %220 = vector.shape_cast %219 : vector<1x32x32xf32> to vector<32x32xf32>
    %221 = vector.extract_strided_slice %216 {offsets = [0, 0], sizes = [16, 16], strides = [1, 1]} : vector<16x32xf32> to vector<16x16xf32>
    %222 = vector.shape_cast %221 : vector<16x16xf32> to vector<2x8x16xf32>
    %223 = vector.extract_strided_slice %217 {offsets = [0, 0], sizes = [16, 16], strides = [1, 1]} : vector<16x32xf32> to vector<16x16xf32>
    %224 = vector.shape_cast %223 : vector<16x16xf32> to vector<2x8x16xf32>
    %225 = vector.extract_strided_slice %218 {offsets = [0, 0], sizes = [16, 16], strides = [1, 1]} : vector<16x32xf32> to vector<16x16xf32>
    %226 = vector.shape_cast %225 : vector<16x16xf32> to vector<2x8x16xf32>
    "tpu.trace_start"() <{level = 10 : i32, message = "bqd,bkd->bqk"}> : () -> ()
    %cst_105 = arith.constant dense<0.000000e+00> : vector<2x8x8xf32>
    %227 = tpu.matmul %222, %224, %cst_105 {dimension_numbers = #tpu.dot_dimension_numbers<[2], [2], [1], [1], [0, 0, 0, 1, 1, 1], [0], [0]>} : vector<2x8x16xf32>, vector<2x8x16xf32>, vector<2x8x8xf32> -> vector<2x8x8xf32>
    "tpu.trace_stop"() : () -> ()
    %228 = arith.addf %227, %2 : vector<2x8x8xf32>
    %cst_106 = arith.constant dense<0xFF800000> : vector<2x8xf32>
    %229 = vector.multi_reduction <maximumf>, %228, %cst_106 [2] : vector<2x8x8xf32> to vector<2x8xf32>
    %230 = vector.shape_cast %229 : vector<2x8xf32> to vector<2x8x1xf32>
    %231 = vector.broadcast %230 : vector<2x8x1xf32> to vector<2x8x8xf32>
    %232 = arith.subf %228, %231 : vector<2x8x8xf32>
    %233 = math.exp %232 : vector<2x8x8xf32>
    %cst_107 = arith.constant dense<0.000000e+00> : vector<2x8xf32>
    %234 = vector.multi_reduction <add>, %233, %cst_107 [2] : vector<2x8x8xf32> to vector<2x8xf32>
    %235 = vector.shape_cast %234 : vector<2x8xf32> to vector<2x8x1xf32>
    %236 = vector.broadcast %235 : vector<2x8x1xf32> to vector<2x8x8xf32>
    %237 = arith.divf %233, %236 : vector<2x8x8xf32>
    %238 = vector.shape_cast %237 : vector<2x8x8xf32> to vector<2x64xf32>
    %c1_108 = arith.constant 1 : index
    %c0_109 = arith.constant 0 : index
    %c0_110 = arith.constant 0 : index
    %239 = vector.load %arg18[%c1_108, %c0_109, %c0_110] : memref<2x2x128xf32, #tpu.memory_space<vmem>>, vector<1x2x64xf32>
    %240 = vector.shape_cast %239 : vector<1x2x64xf32> to vector<2x64xf32>
    %241 = vector.shape_cast %238 : vector<2x64xf32> to vector<1x2x64xf32>
    tpu.vector_store %arg18[%c1_108, %c0_109, %c0_110], %241 {strides = array<i32>} : memref<2x2x128xf32, #tpu.memory_space<vmem>>, vector<1x2x64xf32>,
    "tpu.trace_start"() <{level = 10 : i32, message = "bqk,bkd->bqd"}> : () -> ()
    %cst_111 = arith.constant dense<0.000000e+00> : vector<2x8x16xf32>
    %242 = tpu.matmul %237, %226, %cst_111 {dimension_numbers = #tpu.dot_dimension_numbers<[2], [1], [1], [2], [0, 0, 0, 1, 1, 2], [0], [0]>} : vector<2x8x8xf32>, vector<2x8x16xf32>, vector<2x8x16xf32> -> vector<2x8x16xf32>
    "tpu.trace_stop"() : () -> ()
    %243 = vector.shape_cast %242 : vector<2x8x16xf32> to vector<16x16xf32>
    %244 = vector.extract_strided_slice %220 {offsets = [0, 0], sizes = [16, 32], strides = [1, 1]} : vector<32x32xf32> to vector<16x32xf32>
    %cst_112 = arith.constant dense<0.000000e+00> : vector<16x32xf32>
    %245 = tpu.matmul %243, %244, %cst_112 {dimension_numbers = #tpu.dot_dimension_numbers<[1], [0], [0], [1], [0, 0, 1, 1], [], []>} : vector<16x16xf32>, vector<16x32xf32>, vector<16x32xf32> -> vector<16x32xf32>
    %246 = vector.extract_strided_slice %216 {offsets = [0, 16], sizes = [16, 16], strides = [1, 1]} : vector<16x32xf32> to vector<16x16xf32>
    %247 = vector.shape_cast %246 : vector<16x16xf32> to vector<2x8x16xf32>
    %248 = vector.extract_strided_slice %217 {offsets = [0, 16], sizes = [16, 16], strides = [1, 1]} : vector<16x32xf32> to vector<16x16xf32>
    %249 = vector.shape_cast %248 : vector<16x16xf32> to vector<2x8x16xf32>
    %250 = vector.extract_strided_slice %218 {offsets = [0, 16], sizes = [16, 16], strides = [1, 1]} : vector<16x32xf32> to vector<16x16xf32>
    %251 = vector.shape_cast %250 : vector<16x16xf32> to vector<2x8x16xf32>
    "tpu.trace_start"() <{level = 10 : i32, message = "bqd,bkd->bqk"}> : () -> ()
    %cst_113 = arith.constant dense<0.000000e+00> : vector<2x8x8xf32>
    %252 = tpu.matmul %247, %249, %cst_113 {dimension_numbers = #tpu.dot_dimension_numbers<[2], [2], [1], [1], [0, 0, 0, 1, 1, 1], [0], [0]>} : vector<2x8x16xf32>, vector<2x8x16xf32>, vector<2x8x8xf32> -> vector<2x8x8xf32>
    "tpu.trace_stop"() : () -> ()
    %253 = arith.addf %252, %2 : vector<2x8x8xf32>
    %cst_114 = arith.constant dense<0xFF800000> : vector<2x8xf32>
    %254 = vector.multi_reduction <maximumf>, %253, %cst_114 [2] : vector<2x8x8xf32> to vector<2x8xf32>
    %255 = vector.shape_cast %254 : vector<2x8xf32> to vector<2x8x1xf32>
    %256 = vector.broadcast %255 : vector<2x8x1xf32> to vector<2x8x8xf32>
    %257 = arith.subf %253, %256 : vector<2x8x8xf32>
    %258 = math.exp %257 : vector<2x8x8xf32>
    %cst_115 = arith.constant dense<0.000000e+00> : vector<2x8xf32>
    %259 = vector.multi_reduction <add>, %258, %cst_115 [2] : vector<2x8x8xf32> to vector<2x8xf32>
    %260 = vector.shape_cast %259 : vector<2x8xf32> to vector<2x8x1xf32>
    %261 = vector.broadcast %260 : vector<2x8x1xf32> to vector<2x8x8xf32>
    %262 = arith.divf %258, %261 : vector<2x8x8xf32>
    %263 = vector.shape_cast %262 : vector<2x8x8xf32> to vector<2x64xf32>
    %c1_116 = arith.constant 1 : index
    %c0_117 = arith.constant 0 : index
    %c64_118 = arith.constant 64 : index
    %264 = vector.load %arg18[%c1_116, %c0_117, %c64_118] : memref<2x2x128xf32, #tpu.memory_space<vmem>>, vector<1x2x64xf32>
    %265 = vector.shape_cast %264 : vector<1x2x64xf32> to vector<2x64xf32>
    %266 = vector.shape_cast %263 : vector<2x64xf32> to vector<1x2x64xf32>
    tpu.vector_store %arg18[%c1_116, %c0_117, %c64_118], %266 {strides = array<i32>} : memref<2x2x128xf32, #tpu.memory_space<vmem>>, vector<1x2x64xf32>,
    "tpu.trace_start"() <{level = 10 : i32, message = "bqk,bkd->bqd"}> : () -> ()
    %cst_119 = arith.constant dense<0.000000e+00> : vector<2x8x16xf32>
    %267 = tpu.matmul %262, %251, %cst_119 {dimension_numbers = #tpu.dot_dimension_numbers<[2], [1], [1], [2], [0, 0, 0, 1, 1, 2], [0], [0]>} : vector<2x8x8xf32>, vector<2x8x16xf32>, vector<2x8x16xf32> -> vector<2x8x16xf32>
    "tpu.trace_stop"() : () -> ()
    %268 = vector.shape_cast %267 : vector<2x8x16xf32> to vector<16x16xf32>
    %269 = vector.extract_strided_slice %220 {offsets = [16, 0], sizes = [16, 32], strides = [1, 1]} : vector<32x32xf32> to vector<16x32xf32>
    %cst_120 = arith.constant dense<0.000000e+00> : vector<16x32xf32>
    %270 = tpu.matmul %268, %269, %cst_120 {dimension_numbers = #tpu.dot_dimension_numbers<[1], [0], [0], [1], [0, 0, 1, 1], [], []>} : vector<16x16xf32>, vector<16x32xf32>, vector<16x32xf32> -> vector<16x32xf32>
    %271 = arith.addf %245, %270 : vector<16x32xf32>
    %272 = arith.addf %271, %212 : vector<16x32xf32>
    %c1_121 = arith.constant 1 : index
    %c0_122 = arith.constant 0 : index
    %c0_123 = arith.constant 0 : index
    %273 = vector.load %arg6[%c1_121, %c0_122, %c0_123] : memref<2x1x32xf32, #tpu.memory_space<vmem>>, vector<1x1x32xf32>
    %274 = vector.shape_cast %273 : vector<1x1x32xf32> to vector<1x32xf32>
    %c1_124 = arith.constant 1 : index
    %c0_125 = arith.constant 0 : index
    %c0_126 = arith.constant 0 : index
    %275 = vector.load %arg7[%c1_124, %c0_125, %c0_126] : memref<2x1x32xf32, #tpu.memory_space<vmem>>, vector<1x1x32xf32>
    %276 = vector.shape_cast %275 : vector<1x1x32xf32> to vector<1x32xf32>
    %cst_127 = arith.constant dense<0.000000e+00> : vector<16xf32>
    %277 = vector.multi_reduction <add>, %272, %cst_127 [1] : vector<16x32xf32> to vector<16xf32>
    %278 = vector.shape_cast %277 : vector<16xf32> to vector<16x1xf32>
    %cst_128 = arith.constant 3.200000e+01 : f32
    %279 = vector.broadcast %cst_128 : f32 to vector<16x1xf32>
    %280 = arith.divf %278, %279 : vector<16x1xf32>
    %281 = vector.broadcast %280 : vector<16x1xf32> to vector<16x32xf32>
    %282 = arith.subf %272, %281 : vector<16x32xf32>
    %283 = arith.mulf %282, %282 : vector<16x32xf32>
    %cst_129 = arith.constant dense<0.000000e+00> : vector<16xf32>
    %284 = vector.multi_reduction <add>, %283, %cst_129 [1] : vector<16x32xf32> to vector<16xf32>
    %285 = vector.shape_cast %284 : vector<16xf32> to vector<16x1xf32>
    %cst_130 = arith.constant 3.200000e+01 : f32
    %286 = vector.broadcast %cst_130 : f32 to vector<16x1xf32>
    %287 = arith.divf %285, %286 : vector<16x1xf32>
    %288 = vector.broadcast %280 : vector<16x1xf32> to vector<16x32xf32>
    %289 = arith.subf %272, %288 : vector<16x32xf32>
    %cst_131 = arith.constant 9.99999974E-6 : f32
    %290 = vector.broadcast %cst_131 : f32 to vector<16x1xf32>
    %291 = arith.addf %287, %290 : vector<16x1xf32>
    %292 = math.rsqrt %291 : vector<16x1xf32>
    %293 = vector.broadcast %292 : vector<16x1xf32> to vector<16x32xf32>
    %294 = arith.mulf %289, %293 : vector<16x32xf32>
    %295 = vector.broadcast %274 : vector<1x32xf32> to vector<16x32xf32>
    %296 = arith.mulf %294, %295 : vector<16x32xf32>
    %297 = vector.broadcast %276 : vector<1x32xf32> to vector<16x32xf32>
    %298 = arith.addf %296, %297 : vector<16x32xf32>
    %c1_132 = arith.constant 1 : index
    %c0_133 = arith.constant 0 : index
    %c0_134 = arith.constant 0 : index
    %299 = vector.load %arg8[%c1_132, %c0_133, %c0_134] : memref<2x32x32xf32, #tpu.memory_space<vmem>>, vector<1x32x32xf32>
    %300 = vector.shape_cast %299 : vector<1x32x32xf32> to vector<32x32xf32>
    %cst_135 = arith.constant dense<0.000000e+00> : vector<16x32xf32>
    %301 = tpu.matmul %298, %300, %cst_135 {dimension_numbers = #tpu.dot_dimension_numbers<[1], [0], [0], [1], [0, 0, 1, 1], [], []>} : vector<16x32xf32>, vector<32x32xf32>, vector<16x32xf32> -> vector<16x32xf32>
    %c1_136 = arith.constant 1 : index
    %c0_137 = arith.constant 0 : index
    %c0_138 = arith.constant 0 : index
    %302 = vector.load %arg9[%c1_136, %c0_137, %c0_138] : memref<2x32x64xf32, #tpu.memory_space<vmem>>, vector<1x32x64xf32>
    %303 = vector.shape_cast %302 : vector<1x32x64xf32> to vector<32x64xf32>
    %cst_139 = arith.constant dense<0.000000e+00> : vector<16x64xf32>
    %304 = tpu.matmul %1, %303, %cst_139 {dimension_numbers = #tpu.dot_dimension_numbers<[1], [0], [0], [1], [0, 0, 1, 1], [], []>} : vector<16x32xf32>, vector<32x64xf32>, vector<16x64xf32> -> vector<16x64xf32>
    %305 = vector.extract_strided_slice %304 {offsets = [0, 0], sizes = [16, 32], strides = [1, 1]} : vector<16x64xf32> to vector<16x32xf32>
    %306 = vector.extract_strided_slice %304 {offsets = [0, 32], sizes = [16, 32], strides = [1, 1]} : vector<16x64xf32> to vector<16x32xf32>
    %c1_140 = arith.constant 1 : index
    %c0_141 = arith.constant 0 : index
    %c0_142 = arith.constant 0 : index
    %307 = vector.load %arg10[%c1_140, %c0_141, %c0_142] : memref<2x32x32xf32, #tpu.memory_space<vmem>>, vector<1x32x32xf32>
    %308 = vector.shape_cast %307 : vector<1x32x32xf32> to vector<32x32xf32>
    %309 = vector.extract_strided_slice %301 {offsets = [0, 0], sizes = [16, 16], strides = [1, 1]} : vector<16x32xf32> to vector<16x16xf32>
    %310 = vector.shape_cast %309 : vector<16x16xf32> to vector<2x8x16xf32>
    %311 = vector.extract_strided_slice %305 {offsets = [0, 0], sizes = [16, 16], strides = [1, 1]} : vector<16x32xf32> to vector<16x16xf32>
    %312 = vector.shape_cast %311 : vector<16x16xf32> to vector<2x8x16xf32>
    %313 = vector.extract_strided_slice %306 {offsets = [0, 0], sizes = [16, 16], strides = [1, 1]} : vector<16x32xf32> to vector<16x16xf32>
    %314 = vector.shape_cast %313 : vector<16x16xf32> to vector<2x8x16xf32>
    "tpu.trace_start"() <{level = 10 : i32, message = "bqd,bkd->bqk"}> : () -> ()
    %cst_143 = arith.constant dense<0.000000e+00> : vector<2x8x8xf32>
    %315 = tpu.matmul %310, %312, %cst_143 {dimension_numbers = #tpu.dot_dimension_numbers<[2], [2], [1], [1], [0, 0, 0, 1, 1, 1], [0], [0]>} : vector<2x8x16xf32>, vector<2x8x16xf32>, vector<2x8x8xf32> -> vector<2x8x8xf32>
    "tpu.trace_stop"() : () -> ()
    %316 = arith.addf %315, %3 : vector<2x8x8xf32>
    %cst_144 = arith.constant dense<0xFF800000> : vector<2x8xf32>
    %317 = vector.multi_reduction <maximumf>, %316, %cst_144 [2] : vector<2x8x8xf32> to vector<2x8xf32>
    %318 = vector.shape_cast %317 : vector<2x8xf32> to vector<2x8x1xf32>
    %319 = vector.broadcast %318 : vector<2x8x1xf32> to vector<2x8x8xf32>
    %320 = arith.subf %316, %319 : vector<2x8x8xf32>
    %321 = math.exp %320 : vector<2x8x8xf32>
    %cst_145 = arith.constant dense<0.000000e+00> : vector<2x8xf32>
    %322 = vector.multi_reduction <add>, %321, %cst_145 [2] : vector<2x8x8xf32> to vector<2x8xf32>
    %323 = vector.shape_cast %322 : vector<2x8xf32> to vector<2x8x1xf32>
    %324 = vector.broadcast %323 : vector<2x8x1xf32> to vector<2x8x8xf32>
    %325 = arith.divf %321, %324 : vector<2x8x8xf32>
    %326 = vector.shape_cast %325 : vector<2x8x8xf32> to vector<2x64xf32>
    %c1_146 = arith.constant 1 : index
    %c0_147 = arith.constant 0 : index
    %c0_148 = arith.constant 0 : index
    %327 = vector.load %arg19[%c1_146, %c0_147, %c0_148] : memref<2x2x128xf32, #tpu.memory_space<vmem>>, vector<1x2x64xf32>
    %328 = vector.shape_cast %327 : vector<1x2x64xf32> to vector<2x64xf32>
    %329 = vector.shape_cast %326 : vector<2x64xf32> to vector<1x2x64xf32>
    tpu.vector_store %arg19[%c1_146, %c0_147, %c0_148], %329 {strides = array<i32>} : memref<2x2x128xf32, #tpu.memory_space<vmem>>, vector<1x2x64xf32>,
    "tpu.trace_start"() <{level = 10 : i32, message = "bqk,bkd->bqd"}> : () -> ()
    %cst_149 = arith.constant dense<0.000000e+00> : vector<2x8x16xf32>
    %330 = tpu.matmul %325, %314, %cst_149 {dimension_numbers = #tpu.dot_dimension_numbers<[2], [1], [1], [2], [0, 0, 0, 1, 1, 2], [0], [0]>} : vector<2x8x8xf32>, vector<2x8x16xf32>, vector<2x8x16xf32> -> vector<2x8x16xf32>
    "tpu.trace_stop"() : () -> ()
    %331 = vector.shape_cast %330 : vector<2x8x16xf32> to vector<16x16xf32>
    %332 = vector.extract_strided_slice %308 {offsets = [0, 0], sizes = [16, 32], strides = [1, 1]} : vector<32x32xf32> to vector<16x32xf32>
    %cst_150 = arith.constant dense<0.000000e+00> : vector<16x32xf32>
    %333 = tpu.matmul %331, %332, %cst_150 {dimension_numbers = #tpu.dot_dimension_numbers<[1], [0], [0], [1], [0, 0, 1, 1], [], []>} : vector<16x16xf32>, vector<16x32xf32>, vector<16x32xf32> -> vector<16x32xf32>
    %334 = vector.extract_strided_slice %301 {offsets = [0, 16], sizes = [16, 16], strides = [1, 1]} : vector<16x32xf32> to vector<16x16xf32>
    %335 = vector.shape_cast %334 : vector<16x16xf32> to vector<2x8x16xf32>
    %336 = vector.extract_strided_slice %305 {offsets = [0, 16], sizes = [16, 16], strides = [1, 1]} : vector<16x32xf32> to vector<16x16xf32>
    %337 = vector.shape_cast %336 : vector<16x16xf32> to vector<2x8x16xf32>
    %338 = vector.extract_strided_slice %306 {offsets = [0, 16], sizes = [16, 16], strides = [1, 1]} : vector<16x32xf32> to vector<16x16xf32>
    %339 = vector.shape_cast %338 : vector<16x16xf32> to vector<2x8x16xf32>
    "tpu.trace_start"() <{level = 10 : i32, message = "bqd,bkd->bqk"}> : () -> ()
    %cst_151 = arith.constant dense<0.000000e+00> : vector<2x8x8xf32>
    %340 = tpu.matmul %335, %337, %cst_151 {dimension_numbers = #tpu.dot_dimension_numbers<[2], [2], [1], [1], [0, 0, 0, 1, 1, 1], [0], [0]>} : vector<2x8x16xf32>, vector<2x8x16xf32>, vector<2x8x8xf32> -> vector<2x8x8xf32>
    "tpu.trace_stop"() : () -> ()
    %341 = arith.addf %340, %3 : vector<2x8x8xf32>
    %cst_152 = arith.constant dense<0xFF800000> : vector<2x8xf32>
    %342 = vector.multi_reduction <maximumf>, %341, %cst_152 [2] : vector<2x8x8xf32> to vector<2x8xf32>
    %343 = vector.shape_cast %342 : vector<2x8xf32> to vector<2x8x1xf32>
    %344 = vector.broadcast %343 : vector<2x8x1xf32> to vector<2x8x8xf32>
    %345 = arith.subf %341, %344 : vector<2x8x8xf32>
    %346 = math.exp %345 : vector<2x8x8xf32>
    %cst_153 = arith.constant dense<0.000000e+00> : vector<2x8xf32>
    %347 = vector.multi_reduction <add>, %346, %cst_153 [2] : vector<2x8x8xf32> to vector<2x8xf32>
    %348 = vector.shape_cast %347 : vector<2x8xf32> to vector<2x8x1xf32>
    %349 = vector.broadcast %348 : vector<2x8x1xf32> to vector<2x8x8xf32>
    %350 = arith.divf %346, %349 : vector<2x8x8xf32>
    %351 = vector.shape_cast %350 : vector<2x8x8xf32> to vector<2x64xf32>
    %c1_154 = arith.constant 1 : index
    %c0_155 = arith.constant 0 : index
    %c64_156 = arith.constant 64 : index
    %352 = vector.load %arg19[%c1_154, %c0_155, %c64_156] : memref<2x2x128xf32, #tpu.memory_space<vmem>>, vector<1x2x64xf32>
    %353 = vector.shape_cast %352 : vector<1x2x64xf32> to vector<2x64xf32>
    %354 = vector.shape_cast %351 : vector<2x64xf32> to vector<1x2x64xf32>
    tpu.vector_store %arg19[%c1_154, %c0_155, %c64_156], %354 {strides = array<i32>} : memref<2x2x128xf32, #tpu.memory_space<vmem>>, vector<1x2x64xf32>,
    "tpu.trace_start"() <{level = 10 : i32, message = "bqk,bkd->bqd"}> : () -> ()
    %cst_157 = arith.constant dense<0.000000e+00> : vector<2x8x16xf32>
    %355 = tpu.matmul %350, %339, %cst_157 {dimension_numbers = #tpu.dot_dimension_numbers<[2], [1], [1], [2], [0, 0, 0, 1, 1, 2], [0], [0]>} : vector<2x8x8xf32>, vector<2x8x16xf32>, vector<2x8x16xf32> -> vector<2x8x16xf32>
    "tpu.trace_stop"() : () -> ()
    %356 = vector.shape_cast %355 : vector<2x8x16xf32> to vector<16x16xf32>
    %357 = vector.extract_strided_slice %308 {offsets = [16, 0], sizes = [16, 32], strides = [1, 1]} : vector<32x32xf32> to vector<16x32xf32>
    %cst_158 = arith.constant dense<0.000000e+00> : vector<16x32xf32>
    %358 = tpu.matmul %356, %357, %cst_158 {dimension_numbers = #tpu.dot_dimension_numbers<[1], [0], [0], [1], [0, 0, 1, 1], [], []>} : vector<16x16xf32>, vector<16x32xf32>, vector<16x32xf32> -> vector<16x32xf32>
    %359 = arith.addf %333, %358 : vector<16x32xf32>
    %360 = arith.addf %359, %298 : vector<16x32xf32>
    %c1_159 = arith.constant 1 : index
    %c0_160 = arith.constant 0 : index
    %c0_161 = arith.constant 0 : index
    %361 = vector.load %arg11[%c1_159, %c0_160, %c0_161] : memref<2x1x32xf32, #tpu.memory_space<vmem>>, vector<1x1x32xf32>
    %362 = vector.shape_cast %361 : vector<1x1x32xf32> to vector<1x32xf32>
    %c1_162 = arith.constant 1 : index
    %c0_163 = arith.constant 0 : index
    %c0_164 = arith.constant 0 : index
    %363 = vector.load %arg12[%c1_162, %c0_163, %c0_164] : memref<2x1x32xf32, #tpu.memory_space<vmem>>, vector<1x1x32xf32>
    %364 = vector.shape_cast %363 : vector<1x1x32xf32> to vector<1x32xf32>
    %cst_165 = arith.constant dense<0.000000e+00> : vector<16xf32>
    %365 = vector.multi_reduction <add>, %360, %cst_165 [1] : vector<16x32xf32> to vector<16xf32>
    %366 = vector.shape_cast %365 : vector<16xf32> to vector<16x1xf32>
    %cst_166 = arith.constant 3.200000e+01 : f32
    %367 = vector.broadcast %cst_166 : f32 to vector<16x1xf32>
    %368 = arith.divf %366, %367 : vector<16x1xf32>
    %369 = vector.broadcast %368 : vector<16x1xf32> to vector<16x32xf32>
    %370 = arith.subf %360, %369 : vector<16x32xf32>
    %371 = arith.mulf %370, %370 : vector<16x32xf32>
    %cst_167 = arith.constant dense<0.000000e+00> : vector<16xf32>
    %372 = vector.multi_reduction <add>, %371, %cst_167 [1] : vector<16x32xf32> to vector<16xf32>
    %373 = vector.shape_cast %372 : vector<16xf32> to vector<16x1xf32>
    %cst_168 = arith.constant 3.200000e+01 : f32
    %374 = vector.broadcast %cst_168 : f32 to vector<16x1xf32>
    %375 = arith.divf %373, %374 : vector<16x1xf32>
    %376 = vector.broadcast %368 : vector<16x1xf32> to vector<16x32xf32>
    %377 = arith.subf %360, %376 : vector<16x32xf32>
    %cst_169 = arith.constant 9.99999974E-6 : f32
    %378 = vector.broadcast %cst_169 : f32 to vector<16x1xf32>
    %379 = arith.addf %375, %378 : vector<16x1xf32>
    %380 = math.rsqrt %379 : vector<16x1xf32>
    %381 = vector.broadcast %380 : vector<16x1xf32> to vector<16x32xf32>
    %382 = arith.mulf %377, %381 : vector<16x32xf32>
    %383 = vector.broadcast %362 : vector<1x32xf32> to vector<16x32xf32>
    %384 = arith.mulf %382, %383 : vector<16x32xf32>
    %385 = vector.broadcast %364 : vector<1x32xf32> to vector<16x32xf32>
    %386 = arith.addf %384, %385 : vector<16x32xf32>
    %c1_170 = arith.constant 1 : index
    %c0_171 = arith.constant 0 : index
    %c0_172 = arith.constant 0 : index
    %387 = vector.load %arg13[%c1_170, %c0_171, %c0_172] : memref<2x32x64xf32, #tpu.memory_space<vmem>>, vector<1x32x64xf32>
    %388 = vector.shape_cast %387 : vector<1x32x64xf32> to vector<32x64xf32>
    %cst_173 = arith.constant dense<0.000000e+00> : vector<16x64xf32>
    %389 = tpu.matmul %386, %388, %cst_173 {dimension_numbers = #tpu.dot_dimension_numbers<[1], [0], [0], [1], [0, 0, 1, 1], [], []>} : vector<16x32xf32>, vector<32x64xf32>, vector<16x64xf32> -> vector<16x64xf32>
    %cst_174 = arith.constant 0.000000e+00 : f32
    %390 = vector.broadcast %cst_174 : f32 to vector<16x64xf32>
    %391 = arith.maximumf %389, %390 : vector<16x64xf32>
    %c1_175 = arith.constant 1 : index
    %c0_176 = arith.constant 0 : index
    %c0_177 = arith.constant 0 : index
    %392 = vector.load %arg14[%c1_175, %c0_176, %c0_177] : memref<2x64x32xf32, #tpu.memory_space<vmem>>, vector<1x64x32xf32>
    %393 = vector.shape_cast %392 : vector<1x64x32xf32> to vector<64x32xf32>
    %cst_178 = arith.constant dense<0.000000e+00> : vector<16x32xf32>
    %394 = tpu.matmul %391, %393, %cst_178 {dimension_numbers = #tpu.dot_dimension_numbers<[1], [0], [0], [1], [0, 0, 1, 1], [], []>} : vector<16x64xf32>, vector<64x32xf32>, vector<16x32xf32> -> vector<16x32xf32>
    %395 = arith.addf %394, %386 : vector<16x32xf32>
    %c1_179 = arith.constant 1 : index
    %c0_180 = arith.constant 0 : index
    %c0_181 = arith.constant 0 : index
    %396 = vector.load %arg15[%c1_179, %c0_180, %c0_181] : memref<2x1x32xf32, #tpu.memory_space<vmem>>, vector<1x1x32xf32>
    %397 = vector.shape_cast %396 : vector<1x1x32xf32> to vector<1x32xf32>
    %c1_182 = arith.constant 1 : index
    %c0_183 = arith.constant 0 : index
    %c0_184 = arith.constant 0 : index
    %398 = vector.load %arg16[%c1_182, %c0_183, %c0_184] : memref<2x1x32xf32, #tpu.memory_space<vmem>>, vector<1x1x32xf32>
    %399 = vector.shape_cast %398 : vector<1x1x32xf32> to vector<1x32xf32>
    %cst_185 = arith.constant dense<0.000000e+00> : vector<16xf32>
    %400 = vector.multi_reduction <add>, %395, %cst_185 [1] : vector<16x32xf32> to vector<16xf32>
    %401 = vector.shape_cast %400 : vector<16xf32> to vector<16x1xf32>
    %cst_186 = arith.constant 3.200000e+01 : f32
    %402 = vector.broadcast %cst_186 : f32 to vector<16x1xf32>
    %403 = arith.divf %401, %402 : vector<16x1xf32>
    %404 = vector.broadcast %403 : vector<16x1xf32> to vector<16x32xf32>
    %405 = arith.subf %395, %404 : vector<16x32xf32>
    %406 = arith.mulf %405, %405 : vector<16x32xf32>
    %cst_187 = arith.constant dense<0.000000e+00> : vector<16xf32>
    %407 = vector.multi_reduction <add>, %406, %cst_187 [1] : vector<16x32xf32> to vector<16xf32>
    %408 = vector.shape_cast %407 : vector<16xf32> to vector<16x1xf32>
    %cst_188 = arith.constant 3.200000e+01 : f32
    %409 = vector.broadcast %cst_188 : f32 to vector<16x1xf32>
    %410 = arith.divf %408, %409 : vector<16x1xf32>
    %411 = vector.broadcast %403 : vector<16x1xf32> to vector<16x32xf32>
    %412 = arith.subf %395, %411 : vector<16x32xf32>
    %cst_189 = arith.constant 9.99999974E-6 : f32
    %413 = vector.broadcast %cst_189 : f32 to vector<16x1xf32>
    %414 = arith.addf %410, %413 : vector<16x1xf32>
    %415 = math.rsqrt %414 : vector<16x1xf32>
    %416 = vector.broadcast %415 : vector<16x1xf32> to vector<16x32xf32>
    %417 = arith.mulf %412, %416 : vector<16x32xf32>
    %418 = vector.broadcast %397 : vector<1x32xf32> to vector<16x32xf32>
    %419 = arith.mulf %417, %418 : vector<16x32xf32>
    %420 = vector.broadcast %399 : vector<1x32xf32> to vector<16x32xf32>
    %421 = arith.addf %419, %420 : vector<16x32xf32>
    %c0_190 = arith.constant 0 : index
    %c0_191 = arith.constant 0 : index
    %422 = vector.load %arg17[%c0_190, %c0_191] : memref<16x32xf32, #tpu.memory_space<vmem>>, vector<16x32xf32>
    tpu.vector_store %arg17[%c0_190, %c0_191], %421 {strides = array<i32>} : memref<16x32xf32, #tpu.memory_space<vmem>>, vector<16x32xf32>,
    return
  }
}

</mosaic_0001>

<llo_original>
// kernel: squeeze.4
$region0: #{squeeze.4}
  %s0 = inlined_call_operand.vmem [shape: f32[1,2,128], index: 0, kind: input, shape index: {}]
  %s1 = inlined_call_operand.hbm [shape: f32[2,2,8,8], index: 1, kind: output, shape index: {}]
  $region1: #{squeeze.4} parent=0
    #allocation0 [shape = 'u8[16384]{0}', space=vmem, size = 0x4000, scoped, tag = 'operand span for operand 1']
    #allocation1 [shape = 's32[1]{0}', space=sflag, size = 0x4, scoped, tag = 'scoped memory for squeeze.4']
    #allocation2 [shape = 'u8[4096]{0}', space=vmem, size = 0x1000, scoped, tag = 'scoped mem for input reshape']
    %2 = vsyncpa [#allocation1], 0
    %s4 = sshll.u32 1, 2
    %s5 = ssub.s32 %s4, 1
    %v6 = vld [vmem:[%s0] sm:%s5]
    %7 = vst [vmem:[#allocation2] sm:%s5] %v6
    %v8 = vld [vmem:[#allocation2] sm:$0x3]
    %vm9 = vcmask 64512
    %10 = vst.msk [vmem:[#allocation0] ss:$16 sm:$0x3] %vm9, %v8
    %v11 = vld [vmem:[#allocation2] sm:$0x3]
    %12 = vrot.lane.b32.xlu0 %v11, 120
    %v13 = vpop.permute.xlu0 %12
    %vm14 = vcmask 64512
    %s15 = scalar_lea.vmem [#allocation0], 1
    %16 = vst.msk [vmem:[%s15] ss:$16 sm:$0x3] %vm14, %v13
    %v17 = vld [vmem:[#allocation2] sm:$0x3]
    %18 = vrot.lane.b32.xlu0 %v17, 112
    %v19 = vpop.permute.xlu0 %18
    %vm20 = vcmask 64512
    %s21 = scalar_lea.vmem [#allocation0], 2
    %22 = vst.msk [vmem:[%s21] ss:$16 sm:$0x3] %vm20, %v19
    %v23 = vld [vmem:[#allocation2] sm:$0x3]
    %24 = vrot.lane.b32.xlu0 %v23, 104
    %v25 = vpop.permute.xlu0 %24
    %vm26 = vcmask 64512
    %s27 = scalar_lea.vmem [#allocation0], 3
    %28 = vst.msk [vmem:[%s27] ss:$16 sm:$0x3] %vm26, %v25
    %v29 = vld [vmem:[#allocation2] sm:$0x3]
    %30 = vrot.lane.b32.xlu0 %v29, 96
    %v31 = vpop.permute.xlu0 %30
    %vm32 = vcmask 64512
    %s33 = scalar_lea.vmem [#allocation0], 4
    %34 = vst.msk [vmem:[%s33] ss:$16 sm:$0x3] %vm32, %v31
    %v35 = vld [vmem:[#allocation2] sm:$0x3]
    %36 = vrot.lane.b32.xlu0 %v35, 88
    %v37 = vpop.permute.xlu0 %36
    %vm38 = vcmask 64512
    %s39 = scalar_lea.vmem [#allocation0], 5
    %40 = vst.msk [vmem:[%s39] ss:$16 sm:$0x3] %vm38, %v37
    %v41 = vld [vmem:[#allocation2] sm:$0x3]
    %42 = vrot.lane.b32.xlu0 %v41, 80
    %v43 = vpop.permute.xlu0 %42
    %vm44 = vcmask 64512
    %s45 = scalar_lea.vmem [#allocation0], 6
    %46 = vst.msk [vmem:[%s45] ss:$16 sm:$0x3] %vm44, %v43
    %v47 = vld [vmem:[#allocation2] sm:$0x3]
    %48 = vrot.lane.b32.xlu0 %v47, 72
    %v49 = vpop.permute.xlu0 %48
    %vm50 = vcmask 64512
    %s51 = scalar_lea.vmem [#allocation0], 7
    %52 = vst.msk [vmem:[%s51] ss:$16 sm:$0x3] %vm50, %v49
    %v53 = vld [vmem:[#allocation2] sm:$0x3]
    %54 = vrot.lane.b32.xlu0 %v53, 64
    %v55 = vpop.permute.xlu0 %54
    %vm56 = vcmask 64512
    %s57 = scalar_lea.vmem [#allocation0], 8
    %58 = vst.msk [vmem:[%s57] ss:$16 sm:$0x3] %vm56, %v55
    %v59 = vld [vmem:[#allocation2] sm:$0x3]
    %60 = vrot.lane.b32.xlu0 %v59, 56
    %v61 = vpop.permute.xlu0 %60
    %vm62 = vcmask 64512
    %s63 = scalar_lea.vmem [#allocation0], 9
    %64 = vst.msk [vmem:[%s63] ss:$16 sm:$0x3] %vm62, %v61
    %v65 = vld [vmem:[#allocation2] sm:$0x3]
    %66 = vrot.lane.b32.xlu0 %v65, 48
    %v67 = vpop.permute.xlu0 %66
    %vm68 = vcmask 64512
    %s69 = scalar_lea.vmem [#allocation0], 10
    %70 = vst.msk [vmem:[%s69] ss:$16 sm:$0x3] %vm68, %v67
    %v71 = vld [vmem:[#allocation2] sm:$0x3]
    %72 = vrot.lane.b32.xlu0 %v71, 40
    %v73 = vpop.permute.xlu0 %72
    %vm74 = vcmask 64512
    %s75 = scalar_lea.vmem [#allocation0], 11
    %76 = vst.msk [vmem:[%s75] ss:$16 sm:$0x3] %vm74, %v73
    %v77 = vld [vmem:[#allocation2] sm:$0x3]
    %78 = vrot.lane.b32.xlu0 %v77, 32
    %v79 = vpop.permute.xlu0 %78
    %vm80 = vcmask 64512
    %s81 = scalar_lea.vmem [#allocation0], 12
    %82 = vst.msk [vmem:[%s81] ss:$16 sm:$0x3] %vm80, %v79
    %v83 = vld [vmem:[#allocation2] sm:$0x3]
    %84 = vrot.lane.b32.xlu0 %v83, 24
    %v85 = vpop.permute.xlu0 %84
    %vm86 = vcmask 64512
    %s87 = scalar_lea.vmem [#allocation0], 13
    %88 = vst.msk [vmem:[%s87] ss:$16 sm:$0x3] %vm86, %v85
    %v89 = vld [vmem:[#allocation2] sm:$0x3]
    %90 = vrot.lane.b32.xlu0 %v89, 16
    %v91 = vpop.permute.xlu0 %90
    %vm92 = vcmask 64512
    %s93 = scalar_lea.vmem [#allocation0], 14
    %94 = vst.msk [vmem:[%s93] ss:$16 sm:$0x3] %vm92, %v91
    %v95 = vld [vmem:[#allocation2] sm:$0x3]
    %96 = vrot.lane.b32.xlu0 %v95, 8
    %v97 = vpop.permute.xlu0 %96
    %vm98 = vcmask 64512
    %s99 = scalar_lea.vmem [#allocation0], 15
    %100 = vst.msk [vmem:[%s99] ss:$16 sm:$0x3] %vm98, %v97
    %s102 = ssub.s32 512, 512
    %103 = vsyncadd [#allocation1], %s102
    %s105 = sshll.u32 [#allocation0], 4
    %s106 = int_to_ptr.vmem [resolvable:$true] %s105
    %108 = dma.vmem_to_hbm [thread:$0]  %s106, 512, %s1, [#allocation1]
    %109 = dma.done [#allocation1], 512
    %110 = vsyncpa [#allocation1], 1

// kernel: decoder_forward.1
$region0: #{decoder_forward.1}
  #allocation0 [shape = 'u32[]', space=smem, size = 0x4, offset = 0x4, fixed_abs, tag = 'smem constant byte address 0x4 - core index']
  #allocation1 [shape = 'u32[144,128]{1,0:T(1,128)}', space=vmem, size = 0x12000, scoped, tag = 'internal scratch']
  %s0 = inlined_call_operand.vmem [shape: f32[16,32], index: 0, kind: input, shape index: {}]
  %s1 = inlined_call_operand.hbm [shape: f32[16,32], index: 1, kind: input, shape index: {}]
  %s2 = inlined_call_operand.vmem [shape: f32[2,8,8], index: 2, kind: input, shape index: {}]
  %s3 = inlined_call_operand.vmem [shape: f32[2,8,8], index: 3, kind: input, shape index: {}]
  %s4 = inlined_call_operand.vmem [shape: f32[2,32,96], index: 4, kind: input, shape index: {}]
  %s5 = inlined_call_operand.vmem [shape: f32[2,32,32], index: 5, kind: input, shape index: {}]
  %s6 = inlined_call_operand.vmem [shape: f32[2,1,32], index: 6, kind: input, shape index: {}]
  %s7 = inlined_call_operand.vmem [shape: f32[2,1,32], index: 7, kind: input, shape index: {}]
  %s8 = inlined_call_operand.vmem [shape: f32[2,32,32], index: 8, kind: input, shape index: {}]
  %s9 = inlined_call_operand.hbm [shape: f32[2,32,64], index: 9, kind: input, shape index: {}]
  %s10 = inlined_call_operand.hbm [shape: f32[2,32,32], index: 10, kind: input, shape index: {}]
  %s11 = inlined_call_operand.hbm [shape: f32[2,1,32], index: 11, kind: input, shape index: {}]
  %s12 = inlined_call_operand.hbm [shape: f32[2,1,32], index: 12, kind: input, shape index: {}]
  %s13 = inlined_call_operand.hbm [shape: f32[2,32,64], index: 13, kind: input, shape index: {}]
  %s14 = inlined_call_operand.vmem [shape: f32[2,64,32], index: 14, kind: input, shape index: {}]
  %s15 = inlined_call_operand.hbm [shape: f32[2,1,32], index: 15, kind: input, shape index: {}]
  %s16 = inlined_call_operand.hbm [shape: f32[2,1,32], index: 16, kind: input, shape index: {}]
  %s17 = inlined_call_operand.hbm [shape: f32[16,32], index: 17, kind: output, shape index: {0}]
  %s18 = inlined_call_operand.vmem [shape: f32[2,2,128], index: 18, kind: output, shape index: {1}]
  %s19 = inlined_call_operand.vmem [shape: f32[2,2,128], index: 19, kind: output, shape index: {2}]
  %20 = xla_tuple %s17, %s18, %s19
  %s21 = sld [smem:[#allocation0]]
  $region126: #{decoder_forward.1} parent=0
    _
  %s23 = ssub.s32 1, %s21
  %s24 = scalar_select 0, %s23, %s21
  $region1: #{decoder_forward.1} parent=0
    #allocation2 [shape = 'u8[8192]{0}', space=vmem, size = 0x2000, scoped, tag = 'input window, operand 1, single buffered']
    #allocation3 [shape = 's32[1]{0}', space=sflag, size = 0x4, scoped, tag = 'scoped memory for decoder_forward.1']
    #allocation4 [shape = 's32[1]{0}', space=sflag, size = 0x4, scoped, tag = 'scoped memory for decoder_forward.1']
    #allocation5 [shape = 'u8[32768]{0}', space=vmem, size = 0x8000, scoped, tag = 'input window, operand 9, single buffered']
    #allocation6 [shape = 's32[1]{0}', space=sflag, size = 0x4, scoped, tag = 'scoped memory for decoder_forward.1']
    #allocation7 [shape = 'u8[32768]{0}', space=vmem, size = 0x8000, scoped, tag = 'input window, operand 10, single buffered']
    #allocation8 [shape = 'u8[1024]{0}', space=vmem, size = 0x400, scoped, tag = 'input window, operand 11, single buffered']
    #allocation9 [shape = 's32[1]{0}', space=sflag, size = 0x4, scoped, tag = 'scoped memory for decoder_forward.1']
    #allocation10 [shape = 'u8[1024]{0}', space=vmem, size = 0x400, scoped, tag = 'input window, operand 12, single buffered']
    #allocation11 [shape = 'u8[32768]{0}', space=vmem, size = 0x8000, scoped, tag = 'input window, operand 13, single buffered']
    #allocation12 [shape = 's32[1]{0}', space=sflag, size = 0x4, scoped, tag = 'scoped memory for decoder_forward.1']
    #allocation13 [shape = 'u8[1024]{0}', space=vmem, size = 0x400, scoped, tag = 'input window, operand 15, single buffered']
    #allocation14 [shape = 'u8[1024]{0}', space=vmem, size = 0x400, scoped, tag = 'input window, operand 16, single buffered']
    #allocation15 [shape = 's32[1]{0}', space=sflag, size = 0x4, scoped, tag = 'scoped memory for decoder_forward.1']
    #allocation16 [shape = 'u8[8192]{0}', space=vmem, size = 0x2000, scoped, tag = 'output window, operand 0, single buffered']
    %25 = vsyncpa [#allocation3], 0
    %26 = vsyncpa [#allocation6], 0
    %27 = vsyncpa [#allocation9], 0
    %28 = vsyncpa [#allocation12], 0
    %29 = vsyncpa [#allocation15], 0
    %30 = vsyncpa [#allocation4], 0
    // Predicated region
    $region2: #{decoder_forward.1} parent=1 // pred_check
      _
    $region3: #{decoder_forward.1} parent=1 // pred_check_branch
      %32 = sbr.rel (0) target = $region5
    $region4: #{decoder_forward.1} parent=1 // pred_region
      _
    $region5: #{decoder_forward.1} parent=1 // pred_fallthru
      _
    // Predicated region
    $region6: #{decoder_forward.1} parent=1 // pred_check
      _
    $region7: #{decoder_forward.1} parent=1 // pred_check_branch
      %34 = sbr.rel (0) target = $region9
    $region8: #{decoder_forward.1} parent=1 // pred_region
      %s36 = ssub.s32 256, 256
      %37 = vsyncadd [#allocation3], %s36
      %s38 = sshll.u32 [#allocation2], 4
      %s39 = int_to_ptr.vmem [resolvable:$true] %s38
      %44 = dma.hbm_to_vmem [thread:$0]  %s1, 256, %s39, [#allocation3], 128, 128, 8
    $region9: #{decoder_forward.1} parent=1 // pred_fallthru
      _
    // Predicated region
    $region10: #{decoder_forward.1} parent=1 // pred_check
      _
    $region11: #{decoder_forward.1} parent=1 // pred_check_branch
      %46 = sbr.rel (0) target = $region13
    $region12: #{decoder_forward.1} parent=1 // pred_region
      _
    $region13: #{decoder_forward.1} parent=1 // pred_fallthru
      _
    // Predicated region
    $region14: #{decoder_forward.1} parent=1 // pred_check
      _
    $region15: #{decoder_forward.1} parent=1 // pred_check_branch
      %48 = sbr.rel (0) target = $region17
    $region16: #{decoder_forward.1} parent=1 // pred_region
      _
    $region17: #{decoder_forward.1} parent=1 // pred_fallthru
      _
    // Predicated region
    $region18: #{decoder_forward.1} parent=1 // pred_check
      _
    $region19: #{decoder_forward.1} parent=1 // pred_check_branch
      %50 = sbr.rel (0) target = $region21
    $region20: #{decoder_forward.1} parent=1 // pred_region
      _
    $region21: #{decoder_forward.1} parent=1 // pred_fallthru
      _
    // Predicated region
    $region22: #{decoder_forward.1} parent=1 // pred_check
      _
    $region23: #{decoder_forward.1} parent=1 // pred_check_branch
      %52 = sbr.rel (0) target = $region25
    $region24: #{decoder_forward.1} parent=1 // pred_region
      _
    $region25: #{decoder_forward.1} parent=1 // pred_fallthru
      _
    // Predicated region
    $region26: #{decoder_forward.1} parent=1 // pred_check
      _
    $region27: #{decoder_forward.1} parent=1 // pred_check_branch
      %54 = sbr.rel (0) target = $region29
    $region28: #{decoder_forward.1} parent=1 // pred_region
      _
    $region29: #{decoder_forward.1} parent=1 // pred_fallthru
      _
    // Predicated region
    $region30: #{decoder_forward.1} parent=1 // pred_check
      _
    $region31: #{decoder_forward.1} parent=1 // pred_check_branch
      %56 = sbr.rel (0) target = $region33
    $region32: #{decoder_forward.1} parent=1 // pred_region
      _
    $region33: #{decoder_forward.1} parent=1 // pred_fallthru
      _
    // Predicated region
    $region34: #{decoder_forward.1} parent=1 // pred_check
      _
    $region35: #{decoder_forward.1} parent=1 // pred_check_branch
      %58 = sbr.rel (0) target = $region37
    $region36: #{decoder_forward.1} parent=1 // pred_region
      _
    $region37: #{decoder_forward.1} parent=1 // pred_fallthru
      _
    // Predicated region
    $region38: #{decoder_forward.1} parent=1 // pred_check
      _
    $region39: #{decoder_forward.1} parent=1 // pred_check_branch
      %60 = sbr.rel (0) target = $region41
    $region40: #{decoder_forward.1} parent=1 // pred_region
      %s62 = ssub.s32 1024, 1024
      %63 = vsyncadd [#allocation6], %s62
      %s64 = sshll.u32 [#allocation5], 4
      %s65 = int_to_ptr.vmem [resolvable:$true] %s64
      %70 = dma.hbm_to_vmem [thread:$0]  %s9, 1024, %s65, [#allocation6], 128, 128, 8
    $region41: #{decoder_forward.1} parent=1 // pred_fallthru
      _
    // Predicated region
    $region42: #{decoder_forward.1} parent=1 // pred_check
      _
    $region43: #{decoder_forward.1} parent=1 // pred_check_branch
      %72 = sbr.rel (0) target = $region45
    $region44: #{decoder_forward.1} parent=1 // pred_region
      %s74 = ssub.s32 1024, 1024
      %75 = vsyncadd [#allocation6], %s74
      %s76 = sshll.u32 [#allocation7], 4
      %s77 = int_to_ptr.vmem [resolvable:$true] %s76
      %82 = dma.hbm_to_vmem [thread:$0]  %s10, 1024, %s77, [#allocation6], 128, 128, 8
    $region45: #{decoder_forward.1} parent=1 // pred_fallthru
      _
    // Predicated region
    $region46: #{decoder_forward.1} parent=1 // pred_check
      _
    $region47: #{decoder_forward.1} parent=1 // pred_check_branch
      %84 = sbr.rel (0) target = $region49
    $region48: #{decoder_forward.1} parent=1 // pred_region
      %s86 = ssub.s32 32, 32
      %87 = vsyncadd [#allocation9], %s86
      %s88 = sshll.u32 [#allocation8], 4
      %s89 = int_to_ptr.vmem [resolvable:$true] %s88
      %94 = dma.hbm_to_vmem [thread:$0]  %s11, 32, %s89, [#allocation9], 16, 16, 1
    $region49: #{decoder_forward.1} parent=1 // pred_fallthru
      _
    // Predicated region
    $region50: #{decoder_forward.1} parent=1 // pred_check
      _
    $region51: #{decoder_forward.1} parent=1 // pred_check_branch
      %96 = sbr.rel (0) target = $region53
    $region52: #{decoder_forward.1} parent=1 // pred_region
      %s98 = ssub.s32 32, 32
      %99 = vsyncadd [#allocation9], %s98
      %s100 = sshll.u32 [#allocation10], 4
      %s101 = int_to_ptr.vmem [resolvable:$true] %s100
      %106 = dma.hbm_to_vmem [thread:$0]  %s12, 32, %s101, [#allocation9], 16, 16, 1
    $region53: #{decoder_forward.1} parent=1 // pred_fallthru
      _
    // Predicated region
    $region54: #{decoder_forward.1} parent=1 // pred_check
      _
    $region55: #{decoder_forward.1} parent=1 // pred_check_branch
      %108 = sbr.rel (0) target = $region57
    $region56: #{decoder_forward.1} parent=1 // pred_region
      %s110 = ssub.s32 1024, 1024
      %111 = vsyncadd [#allocation12], %s110
      %s112 = sshll.u32 [#allocation11], 4
      %s113 = int_to_ptr.vmem [resolvable:$true] %s112
      %118 = dma.hbm_to_vmem [thread:$0]  %s13, 1024, %s113, [#allocation12], 128, 128, 8
    $region57: #{decoder_forward.1} parent=1 // pred_fallthru
      _
    // Predicated region
    $region58: #{decoder_forward.1} parent=1 // pred_check
      _
    $region59: #{decoder_forward.1} parent=1 // pred_check_branch
      %120 = sbr.rel (0) target = $region61
    $region60: #{decoder_forward.1} parent=1 // pred_region
      _
    $region61: #{decoder_forward.1} parent=1 // pred_fallthru
      _
    // Predicated region
    $region62: #{decoder_forward.1} parent=1 // pred_check
      _
    $region63: #{decoder_forward.1} parent=1 // pred_check_branch
      %122 = sbr.rel (0) target = $region65
    $region64: #{decoder_forward.1} parent=1 // pred_region
      %s124 = ssub.s32 32, 32
      %125 = vsyncadd [#allocation12], %s124
      %s126 = sshll.u32 [#allocation13], 4
      %s127 = int_to_ptr.vmem [resolvable:$true] %s126
      %132 = dma.hbm_to_vmem [thread:$0]  %s15, 32, %s127, [#allocation12], 16, 16, 1
    $region65: #{decoder_forward.1} parent=1 // pred_fallthru
      _
    // Predicated region
    $region66: #{decoder_forward.1} parent=1 // pred_check
      _
    $region67: #{decoder_forward.1} parent=1 // pred_check_branch
      %134 = sbr.rel (0) target = $region69
    $region68: #{decoder_forward.1} parent=1 // pred_region
      %s136 = ssub.s32 32, 32
      %137 = vsyncadd [#allocation15], %s136
      %s138 = sshll.u32 [#allocation14], 4
      %s139 = int_to_ptr.vmem [resolvable:$true] %s138
      %144 = dma.hbm_to_vmem [thread:$0]  %s16, 32, %s139, [#allocation15], 16, 16, 1
    $region69: #{decoder_forward.1} parent=1 // pred_fallthru
      _
    // Predicated region
    $region70: #{decoder_forward.1} parent=1 // pred_check
      _
    $region71: #{decoder_forward.1} parent=1 // pred_check_branch
      %146 = sbr.rel (0) target = $region73
    $region72: #{decoder_forward.1} parent=1 // pred_region
      %147 = dma.done [#allocation3], 256
    $region73: #{decoder_forward.1} parent=1 // pred_fallthru
      _
    // Predicated region
    $region74: #{decoder_forward.1} parent=1 // pred_check
      _
    $region75: #{decoder_forward.1} parent=1 // pred_check_branch
      %149 = sbr.rel (0) target = $region77
    $region76: #{decoder_forward.1} parent=1 // pred_region
      %150 = dma.done [#allocation6], 1024
    $region77: #{decoder_forward.1} parent=1 // pred_fallthru
      _
    // Predicated region
    $region78: #{decoder_forward.1} parent=1 // pred_check
      _
    $region79: #{decoder_forward.1} parent=1 // pred_check_branch
      %152 = sbr.rel (0) target = $region81
    $region80: #{decoder_forward.1} parent=1 // pred_region
      %153 = dma.done [#allocation6], 1024
    $region81: #{decoder_forward.1} parent=1 // pred_fallthru
      _
    // Predicated region
    $region82: #{decoder_forward.1} parent=1 // pred_check
      _
    $region83: #{decoder_forward.1} parent=1 // pred_check_branch
      %155 = sbr.rel (0) target = $region85
    $region84: #{decoder_forward.1} parent=1 // pred_region
      %156 = dma.done [#allocation9], 32
    $region85: #{decoder_forward.1} parent=1 // pred_fallthru
      _
    // Predicated region
    $region86: #{decoder_forward.1} parent=1 // pred_check
      _
    $region87: #{decoder_forward.1} parent=1 // pred_check_branch
      %158 = sbr.rel (0) target = $region89
    $region88: #{decoder_forward.1} parent=1 // pred_region
      %159 = dma.done [#allocation9], 32
    $region89: #{decoder_forward.1} parent=1 // pred_fallthru
      _
    // Predicated region
    $region90: #{decoder_forward.1} parent=1 // pred_check
      _
    $region91: #{decoder_forward.1} parent=1 // pred_check_branch
      %161 = sbr.rel (0) target = $region93
    $region92: #{decoder_forward.1} parent=1 // pred_region
      %162 = dma.done [#allocation12], 1024
    $region93: #{decoder_forward.1} parent=1 // pred_fallthru
      _
    // Predicated region
    $region94: #{decoder_forward.1} parent=1 // pred_check
      _
    $region95: #{decoder_forward.1} parent=1 // pred_check_branch
      %164 = sbr.rel (0) target = $region97
    $region96: #{decoder_forward.1} parent=1 // pred_region
      %165 = dma.done [#allocation12], 32
    $region97: #{decoder_forward.1} parent=1 // pred_fallthru
      _
    // Predicated region
    $region98: #{decoder_forward.1} parent=1 // pred_check
      _
    $region99: #{decoder_forward.1} parent=1 // pred_check_branch
      %167 = sbr.rel (0) target = $region101
    $region100: #{decoder_forward.1} parent=1 // pred_region
      %168 = dma.done [#allocation15], 32
    $region101: #{decoder_forward.1} parent=1 // pred_fallthru
      _
    %v169 = vld [vmem:[%s0] sm:$0xff]
    %v170 = vld [vmem:[%s0 + $0x8] sm:$0xff]
    %v171 = vld [vmem:[#allocation2] sm:$0xff]
    %v172 = vld [vmem:[#allocation2 + $0x8] sm:$0xff]
    %v173 = vld [vmem:[%s2] sm:$0xff]
    %v174 = vld [vmem:[%s2 + $0x8] sm:$0xff]
    %v175 = vld [vmem:[%s3] sm:$0xff]
    %v176 = vld [vmem:[%s3 + $0x8] sm:$0xff]
    %v177 = vld [vmem:[%s4] sm:$0xff]
    %v178 = vld [vmem:[%s4 + $0x8] sm:$0xff]
    %v179 = vld [vmem:[%s4 + $0x10] sm:$0xff]
    %v180 = vld [vmem:[%s4 + $0x18] sm:$0xff]
    %vm181 = vcmask 261120
    %v183 = vsel %vm181, %v169, 0
    %v186 = vsel %vm181, %v170, 0
    %188 = vmatprep.subr.mxu0 0.0
    %189 = vmatpush1.msra.mxu0 0.0
    %190 = vmatprep.subr.mxu0 0.0
    %191 = vmatpush1.msra.mxu0 0.0
    %192 = vmatprep.subr.mxu0 0.0
    %193 = vmatpush1.msra.mxu0 0.0
    %194 = vmatprep.subr.mxu0 0.0
    %195 = vmatpush1.msra.mxu0 0.0
    %196 = vmatprep.subr.mxu0 0.0
    %197 = vmatpush1.msra.mxu0 0.0
    %198 = vmatprep.subr.mxu0 0.0
    %199 = vmatpush1.msra.mxu0 0.0
    %200 = vmatprep.subr.mxu0 0.0
    %201 = vmatpush1.msra.mxu0 0.0
    %202 = vmatprep.subr.mxu0 0.0
    %203 = vmatpush1.msra.mxu0 0.0
    %204 = vmatprep.subr.mxu0 0.0
    %205 = vmatpush1.msra.mxu0 0.0
    %206 = vmatprep.subr.mxu0 0.0
    %207 = vmatpush1.msra.mxu0 0.0
    %208 = vmatprep.subr.mxu0 0.0
    %209 = vmatpush1.msra.mxu0 0.0
    %210 = vmatprep.subr.mxu0 0.0
    %211 = vmatpush1.msra.mxu0 0.0
    %212 = vmatprep.subr.mxu0 0.0
    %213 = vmatpush1.msra.mxu0 %v180
    %214 = vmatprep.subr.mxu0 0.0
    %215 = vmatpush1.msra.mxu0 %v179
    %216 = vmatprep.subr.mxu0 0.0
    %217 = vmatpush1.msra.mxu0 %v178
    %218 = vmatprep.subr.mxu0 0.0
    %219 = vmatpush1.msra.mxu0 %v177
    %220 = vmatprep.subr.mxu0 0.0
    %221 = vmatpush2.msra.mxu0 0.0
    %222 = vmatprep.subr.mxu0 0.0
    %223 = vmatpush2.msra.mxu0 0.0
    %224 = vmatprep.subr.mxu0 0.0
    %225 = vmatpush2.msra.mxu0 0.0
    %226 = vmatprep.subr.mxu0 0.0
    %227 = vmatpush2.msra.mxu0 0.0
    %228 = vmatprep.subr.mxu0 0.0
    %229 = vmatpush2.msra.mxu0 0.0
    %230 = vmatprep.subr.mxu0 0.0
    %231 = vmatpush2.msra.mxu0 0.0
    %232 = vmatprep.subr.mxu0 0.0
    %233 = vmatpush2.msra.mxu0 0.0
    %234 = vmatprep.subr.mxu0 0.0
    %235 = vmatpush2.msra.mxu0 0.0
    %236 = vmatprep.subr.mxu0 0.0
    %237 = vmatpush2.msra.mxu0 0.0
    %238 = vmatprep.subr.mxu0 0.0
    %239 = vmatpush2.msra.mxu0 0.0
    %240 = vmatprep.subr.mxu0 0.0
    %241 = vmatpush2.msra.mxu0 0.0
    %242 = vmatprep.subr.mxu0 0.0
    %243 = vmatpush2.msra.mxu0 0.0
    %244 = vmatprep.subr.mxu0 0.0
    %245 = vmatpush2.msra.mxu0 0.0
    %246 = vmatprep.subr.mxu0 0.0
    %247 = vmatpush2.msra.mxu0 0.0
    %248 = vmatprep.subr.mxu0 0.0
    %249 = vmatpush2.msra.mxu0 0.0
    %250 = vmatprep.subr.mxu0 0.0
    %251 = vmatpush2.msra.mxu0 0.0
    %252 = vmatprep.mubr.f32.mxu0 0.0
    %253 = vmatmul.mubr.f32.gmra.mxu0 %v183
    %v254 = vpop.f32.mrf.mxu0
    %v255 = vadd.f32 0.0, %v254
    %v256 = vpop.f32.mrf.mxu0
    %257 = vmatprep.mubr.f32.mxu0 0.0
    %258 = vmatmul.mubr.f32.gmra.mxu0 %v186
    %v259 = vpop.f32.mrf.mxu0
    %v260 = vadd.f32 0.0, %v259
    %v261 = vpop.f32.mrf.mxu0
    %262 = vdwg.mxu0
    %v263 = vld [vmem:[%s5] sm:$0xff]
    %v264 = vld [vmem:[%s5 + $0x8] sm:$0xff]
    %v265 = vld [vmem:[%s5 + $0x10] sm:$0xff]
    %v266 = vld [vmem:[%s5 + $0x18] sm:$0xff]
    %268 = vrot.lane.b32.xlu0 %v255, 96
    %v269 = vpop.permute.xlu0 %268
    %vm270 = vcmask 130048
    %v271 = vsel %vm270, %v255, 0
    %v273 = vsel %vm270, %v269, 0
    %275 = vmatprep.subr.mxu0 0.0
    %276 = vmatpush1.xpose.msra.mxu0 0.0
    %277 = vmatprep.subr.mxu0 0.0
    %278 = vmatpush1.xpose.msra.mxu0 0.0
    %279 = vmatprep.subr.mxu0 0.0
    %280 = vmatpush1.xpose.msra.mxu0 0.0
    %281 = vmatprep.subr.mxu0 0.0
    %282 = vmatpush1.xpose.msra.mxu0 0.0
    %283 = vmatprep.subr.mxu0 0.0
    %284 = vmatpush1.xpose.msra.mxu0 0.0
    %285 = vmatprep.subr.mxu0 0.0
    %286 = vmatpush1.xpose.msra.mxu0 0.0
    %287 = vmatprep.subr.mxu0 0.0
    %288 = vmatpush1.xpose.msra.mxu0 0.0
    %289 = vmatprep.subr.mxu0 0.0
    %290 = vmatpush1.xpose.msra.mxu0 0.0
    %291 = vmatprep.subr.mxu0 0.0
    %292 = vmatpush1.xpose.msra.mxu0 0.0
    %293 = vmatprep.subr.mxu0 0.0
    %294 = vmatpush1.xpose.msra.mxu0 0.0
    %295 = vmatprep.subr.mxu0 0.0
    %296 = vmatpush1.xpose.msra.mxu0 0.0
    %297 = vmatprep.subr.mxu0 0.0
    %298 = vmatpush1.xpose.msra.mxu0 0.0
    %299 = vmatprep.subr.mxu0 0.0
    %300 = vmatpush1.xpose.msra.mxu0 0.0
    %301 = vmatprep.subr.mxu0 0.0
    %302 = vmatpush1.xpose.msra.mxu0 0.0
    %303 = vmatprep.subr.mxu0 0.0
    %304 = vmatpush1.xpose.msra.mxu0 0.0
    %305 = vmatprep.subr.mxu0 0.0
    %306 = vmatpush1.xpose.msra.mxu0 %v273
    %307 = vmatprep.subr.mxu0 0.0
    %308 = vmatpush2.xpose.msra.mxu0 0.0
    %309 = vmatprep.subr.mxu0 0.0
    %310 = vmatpush2.xpose.msra.mxu0 0.0
    %311 = vmatprep.subr.mxu0 0.0
    %312 = vmatpush2.xpose.msra.mxu0 0.0
    %313 = vmatprep.subr.mxu0 0.0
    %314 = vmatpush2.xpose.msra.mxu0 0.0
    %315 = vmatprep.subr.mxu0 0.0
    %316 = vmatpush2.xpose.msra.mxu0 0.0
    %317 = vmatprep.subr.mxu0 0.0
    %318 = vmatpush2.xpose.msra.mxu0 0.0
    %319 = vmatprep.subr.mxu0 0.0
    %320 = vmatpush2.xpose.msra.mxu0 0.0
    %321 = vmatprep.subr.mxu0 0.0
    %322 = vmatpush2.xpose.msra.mxu0 0.0
    %323 = vmatprep.subr.mxu0 0.0
    %324 = vmatpush2.xpose.msra.mxu0 0.0
    %325 = vmatprep.subr.mxu0 0.0
    %326 = vmatpush2.xpose.msra.mxu0 0.0
    %327 = vmatprep.subr.mxu0 0.0
    %328 = vmatpush2.xpose.msra.mxu0 0.0
    %329 = vmatprep.subr.mxu0 0.0
    %330 = vmatpush2.xpose.msra.mxu0 0.0
    %331 = vmatprep.subr.mxu0 0.0
    %332 = vmatpush2.xpose.msra.mxu0 0.0
    %333 = vmatprep.subr.mxu0 0.0
    %334 = vmatpush2.xpose.msra.mxu0 0.0
    %335 = vmatprep.subr.mxu0 0.0
    %336 = vmatpush2.xpose.msra.mxu0 0.0
    %337 = vmatprep.subr.mxu0 0.0
    %338 = vmatpush2.xpose.msra.mxu0 0.0
    %339 = vmatprep.mubr.f32.mxu0 0.0
    %340 = vmatmul.mubr.f32.gmra.mxu0 %v271
    %v341 = vpop.f32.mrf.mxu0
    %v342 = vadd.f32 %v173, %v341
    %v343 = vpop.f32.mrf.mxu0
    %344 = vdwg.mxu0
    %346 = vrot.lane.b32.xlu0 %v260, 96
    %v347 = vpop.permute.xlu0 %346
    %v348 = vsel %vm270, %v260, 0
    %v350 = vsel %vm270, %v347, 0
    %352 = vmatprep.subr.mxu0 0.0
    %353 = vmatpush1.xpose.msra.mxu0 0.0
    %354 = vmatprep.subr.mxu0 0.0
    %355 = vmatpush1.xpose.msra.mxu0 0.0
    %356 = vmatprep.subr.mxu0 0.0
    %357 = vmatpush1.xpose.msra.mxu0 0.0
    %358 = vmatprep.subr.mxu0 0.0
    %359 = vmatpush1.xpose.msra.mxu0 0.0
    %360 = vmatprep.subr.mxu0 0.0
    %361 = vmatpush1.xpose.msra.mxu0 0.0
    %362 = vmatprep.subr.mxu0 0.0
    %363 = vmatpush1.xpose.msra.mxu0 0.0
    %364 = vmatprep.subr.mxu0 0.0
    %365 = vmatpush1.xpose.msra.mxu0 0.0
    %366 = vmatprep.subr.mxu0 0.0
    %367 = vmatpush1.xpose.msra.mxu0 0.0
    %368 = vmatprep.subr.mxu0 0.0
    %369 = vmatpush1.xpose.msra.mxu0 0.0
    %370 = vmatprep.subr.mxu0 0.0
    %371 = vmatpush1.xpose.msra.mxu0 0.0
    %372 = vmatprep.subr.mxu0 0.0
    %373 = vmatpush1.xpose.msra.mxu0 0.0
    %374 = vmatprep.subr.mxu0 0.0
    %375 = vmatpush1.xpose.msra.mxu0 0.0
    %376 = vmatprep.subr.mxu0 0.0
    %377 = vmatpush1.xpose.msra.mxu0 0.0
    %378 = vmatprep.subr.mxu0 0.0
    %379 = vmatpush1.xpose.msra.mxu0 0.0
    %380 = vmatprep.subr.mxu0 0.0
    %381 = vmatpush1.xpose.msra.mxu0 0.0
    %382 = vmatprep.subr.mxu0 0.0
    %383 = vmatpush1.xpose.msra.mxu0 %v350
    %384 = vmatprep.subr.mxu0 0.0
    %385 = vmatpush2.xpose.msra.mxu0 0.0
    %386 = vmatprep.subr.mxu0 0.0
    %387 = vmatpush2.xpose.msra.mxu0 0.0
    %388 = vmatprep.subr.mxu0 0.0
    %389 = vmatpush2.xpose.msra.mxu0 0.0
    %390 = vmatprep.subr.mxu0 0.0
    %391 = vmatpush2.xpose.msra.mxu0 0.0
    %392 = vmatprep.subr.mxu0 0.0
    %393 = vmatpush2.xpose.msra.mxu0 0.0
    %394 = vmatprep.subr.mxu0 0.0
    %395 = vmatpush2.xpose.msra.mxu0 0.0
    %396 = vmatprep.subr.mxu0 0.0
    %397 = vmatpush2.xpose.msra.mxu0 0.0
    %398 = vmatprep.subr.mxu0 0.0
    %399 = vmatpush2.xpose.msra.mxu0 0.0
    %400 = vmatprep.subr.mxu0 0.0
    %401 = vmatpush2.xpose.msra.mxu0 0.0
    %402 = vmatprep.subr.mxu0 0.0
    %403 = vmatpush2.xpose.msra.mxu0 0.0
    %404 = vmatprep.subr.mxu0 0.0
    %405 = vmatpush2.xpose.msra.mxu0 0.0
    %406 = vmatprep.subr.mxu0 0.0
    %407 = vmatpush2.xpose.msra.mxu0 0.0
    %408 = vmatprep.subr.mxu0 0.0
    %409 = vmatpush2.xpose.msra.mxu0 0.0
    %410 = vmatprep.subr.mxu0 0.0
    %411 = vmatpush2.xpose.msra.mxu0 0.0
    %412 = vmatprep.subr.mxu0 0.0
    %413 = vmatpush2.xpose.msra.mxu0 0.0
    %414 = vmatprep.subr.mxu0 0.0
    %415 = vmatpush2.xpose.msra.mxu0 0.0
    %416 = vmatprep.mubr.f32.mxu0 0.0
    %417 = vmatmul.mubr.f32.gmra.mxu0 %v348
    %v418 = vpop.f32.mrf.mxu0
    %v419 = vadd.f32 %v174, %v418
    %v420 = vpop.f32.mrf.mxu0
    %421 = vdwg.mxu0
    %vm422 = vcmask 64512
    %v423 = vsel %vm422, %v342, -inf
    %424 = vmax.xlane.f32.xlu0 %v423
    %v425 = vpop.xlane.xlu0 %424
    %v426 = vsel %vm422, %v419, -inf
    %427 = vmax.xlane.f32.xlu0 %v426
    %v428 = vpop.xlane.xlu0 %427
    %v429 = vsub.f32 %v342, %v425
    %v430 = vsub.f32 %v419, %v428
    %v431 = vmul.f32 %v429, 1.442695
    %v432 = vpow.pop %v431
    %v433 = vmul.f32 %v430, 1.442695
    %v434 = vpow.pop %v433
    %v435 = vsel %vm422, %v432, 0.0
    %436 = vadd.xlane.f32.xlu0 %v435
    %v437 = vpop.xlane.xlu0 %436
    %v438 = vsel %vm422, %v434, 0.0
    %439 = vadd.xlane.f32.xlu0 %v438
    %v440 = vpop.xlane.xlu0 %439
    %v441 = vrcp.pop %v437
    %v442 = vmul.f32 %v432, %v441
    %v443 = vrcp.pop %v440
    %v444 = vmul.f32 %v434, %v443
    %v445 = vcombine.high %v442, 0.0
    %v447 = vunpack.c.l.s4 1983009808
    %v448 = vunpack.c.0.s8 %v447
    %v449 = vlaneseq
    %v450 = vshrl.u32 %v449, 7
    %v451 = vsub.s32 %v448, %v450
    %v452 = vrot.slane %v442, %v451
    %v454 = vunpack.c.l.s4 1983009808
    %v455 = vunpack.c.0.s8 %v454
    %v456 = vlaneseq
    %v457 = vshrl.u32 %v456, 7
    %v458 = vsub.s32 %v455, %v457
    %v459 = vrot.slane %v445, %v458
    %v460 = vcombine.high %v444, 0.0
    %v462 = vunpack.c.l.s4 1983009808
    %v463 = vunpack.c.0.s8 %v462
    %v464 = vlaneseq
    %v465 = vshrl.u32 %v464, 7
    %v466 = vsub.s32 %v463, %v465
    %v467 = vrot.slane %v444, %v466
    %v469 = vunpack.c.l.s4 1983009808
    %v470 = vunpack.c.0.s8 %v469
    %v471 = vlaneseq
    %v472 = vshrl.u32 %v471, 7
    %v473 = vsub.s32 %v470, %v472
    %v474 = vrot.slane %v460, %v473
    %v475 = vcombine.low %v452, %v467
    %v476 = vcombine.high %v452, %v467
    %v478 = vunpack.c.l.s4 1934713408
    %v479 = vunpack.c.0.s8 %v478
    %v480 = vlaneseq
    %v481 = vshrl.u32 %v480, 7
    %v482 = vsub.s32 %v479, %v481
    %v483 = vrot.slane %v475, %v482
    %v485 = vunpack.c.l.s4 1934713408
    %v486 = vunpack.c.0.s8 %v485
    %v487 = vlaneseq
    %v488 = vshrl.u32 %v487, 7
    %v489 = vsub.s32 %v486, %v488
    %v490 = vrot.slane %v476, %v489
    %v491 = vcombine.low %v459, %v474
    %v492 = vcombine.high %v459, %v474
    %v494 = vunpack.c.l.s4 1934713408
    %v495 = vunpack.c.0.s8 %v494
    %v496 = vlaneseq
    %v497 = vshrl.u32 %v496, 7
    %v498 = vsub.s32 %v495, %v497
    %v499 = vrot.slane %v491, %v498
    %v501 = vunpack.c.l.s4 1934713408
    %v502 = vunpack.c.0.s8 %v501
    %v503 = vlaneseq
    %v504 = vshrl.u32 %v503, 7
    %v505 = vsub.s32 %v502, %v504
    %v506 = vrot.slane %v492, %v505
    %v507 = vcombine.high %v483, 0.0
    %v508 = vcombine.high %v490, 0.0
    %v509 = vcombine.high %v499, 0.0
    %v510 = vcombine.high %v506, 0.0
    %512 = vrot.lane.b32.xlu0 %v507, 8
    %v513 = vpop.permute.xlu0 %512
    %516 = vrot.lane.b32.xlu0 %v490, 16
    %v517 = vpop.permute.xlu0 %516
    %520 = vrot.lane.b32.xlu0 %v508, 24
    %v521 = vpop.permute.xlu0 %520
    %524 = vrot.lane.b32.xlu0 %v499, 32
    %v525 = vpop.permute.xlu0 %524
    %528 = vrot.lane.b32.xlu0 %v509, 40
    %v529 = vpop.permute.xlu0 %528
    %532 = vrot.lane.b32.xlu0 %v506, 48
    %v533 = vpop.permute.xlu0 %532
    %536 = vrot.lane.b32.xlu0 %v510, 56
    %v537 = vpop.permute.xlu0 %536
    %v539 = vsel %vm422, %v483, %v513
    %v540 = vsel %vm270, %v539, %v517
    %vm541 = vcmask 195584
    %v542 = vsel %vm541, %v540, %v521
    %v543 = vsel %vm181, %v542, %v525
    %vm544 = vcmask 326656
    %v545 = vsel %vm544, %v543, %v529
    %vm546 = vcmask 392192
    %v547 = vsel %vm546, %v545, %v533
    %vm548 = vcmask 457728
    %v549 = vsel %vm548, %v547, %v537
    %vm550 = vcmask 517120
    %551 = vst.msk [vmem:[%s18] sm:$0x3] %vm550, %v549
    %552 = vrot.lane.b32.xlu0 %v255, 64
    %v553 = vpop.permute.xlu0 %552
    %v556 = vsel %vm422, %v442, 0
    %558 = vmatprep.subr.mxu0 0.0
    %559 = vmatpush1.msra.mxu0 0.0
    %560 = vmatprep.subr.mxu0 0.0
    %561 = vmatpush1.msra.mxu0 0.0
    %562 = vmatprep.subr.mxu0 0.0
    %563 = vmatpush1.msra.mxu0 0.0
    %564 = vmatprep.subr.mxu0 0.0
    %565 = vmatpush1.msra.mxu0 0.0
    %566 = vmatprep.subr.mxu0 0.0
    %567 = vmatpush1.msra.mxu0 0.0
    %568 = vmatprep.subr.mxu0 0.0
    %569 = vmatpush1.msra.mxu0 0.0
    %570 = vmatprep.subr.mxu0 0.0
    %571 = vmatpush1.msra.mxu0 0.0
    %572 = vmatprep.subr.mxu0 0.0
    %573 = vmatpush1.msra.mxu0 0.0
    %574 = vmatprep.subr.mxu0 0.0
    %575 = vmatpush1.msra.mxu0 0.0
    %576 = vmatprep.subr.mxu0 0.0
    %577 = vmatpush1.msra.mxu0 0.0
    %578 = vmatprep.subr.mxu0 0.0
    %579 = vmatpush1.msra.mxu0 0.0
    %580 = vmatprep.subr.mxu0 0.0
    %581 = vmatpush1.msra.mxu0 0.0
    %582 = vmatprep.subr.mxu0 0.0
    %583 = vmatpush1.msra.mxu0 0.0
    %584 = vmatprep.subr.mxu0 0.0
    %585 = vmatpush1.msra.mxu0 0.0
    %586 = vmatprep.subr.mxu0 0.0
    %587 = vmatpush1.msra.mxu0 0.0
    %588 = vmatprep.subr.mxu0 0.0
    %589 = vmatpush1.msra.mxu0 %v553
    %590 = vmatprep.subr.mxu0 0.0
    %591 = vmatpush2.msra.mxu0 0.0
    %592 = vmatprep.subr.mxu0 0.0
    %593 = vmatpush2.msra.mxu0 0.0
    %594 = vmatprep.subr.mxu0 0.0
    %595 = vmatpush2.msra.mxu0 0.0
    %596 = vmatprep.subr.mxu0 0.0
    %597 = vmatpush2.msra.mxu0 0.0
    %598 = vmatprep.subr.mxu0 0.0
    %599 = vmatpush2.msra.mxu0 0.0
    %600 = vmatprep.subr.mxu0 0.0
    %601 = vmatpush2.msra.mxu0 0.0
    %602 = vmatprep.subr.mxu0 0.0
    %603 = vmatpush2.msra.mxu0 0.0
    %604 = vmatprep.subr.mxu0 0.0
    %605 = vmatpush2.msra.mxu0 0.0
    %606 = vmatprep.subr.mxu0 0.0
    %607 = vmatpush2.msra.mxu0 0.0
    %608 = vmatprep.subr.mxu0 0.0
    %609 = vmatpush2.msra.mxu0 0.0
    %610 = vmatprep.subr.mxu0 0.0
    %611 = vmatpush2.msra.mxu0 0.0
    %612 = vmatprep.subr.mxu0 0.0
    %613 = vmatpush2.msra.mxu0 0.0
    %614 = vmatprep.subr.mxu0 0.0
    %615 = vmatpush2.msra.mxu0 0.0
    %616 = vmatprep.subr.mxu0 0.0
    %617 = vmatpush2.msra.mxu0 0.0
    %618 = vmatprep.subr.mxu0 0.0
    %619 = vmatpush2.msra.mxu0 0.0
    %620 = vmatprep.subr.mxu0 0.0
    %621 = vmatpush2.msra.mxu0 0.0
    %622 = vmatprep.mubr.f32.mxu0 0.0
    %623 = vmatmul.mubr.f32.gmra.mxu0 %v556
    %v624 = vpop.f32.mrf.mxu0
    %v625 = vadd.f32 0.0, %v624
    %v626 = vpop.f32.mrf.mxu0
    %627 = vdwg.mxu0
    %628 = vrot.lane.b32.xlu0 %v260, 64
    %v629 = vpop.permute.xlu0 %628
    %v632 = vsel %vm422, %v444, 0
    %634 = vmatprep.subr.mxu0 0.0
    %635 = vmatpush1.msra.mxu0 0.0
    %636 = vmatprep.subr.mxu0 0.0
    %637 = vmatpush1.msra.mxu0 0.0
    %638 = vmatprep.subr.mxu0 0.0
    %639 = vmatpush1.msra.mxu0 0.0
    %640 = vmatprep.subr.mxu0 0.0
    %641 = vmatpush1.msra.mxu0 0.0
    %642 = vmatprep.subr.mxu0 0.0
    %643 = vmatpush1.msra.mxu0 0.0
    %644 = vmatprep.subr.mxu0 0.0
    %645 = vmatpush1.msra.mxu0 0.0
    %646 = vmatprep.subr.mxu0 0.0
    %647 = vmatpush1.msra.mxu0 0.0
    %648 = vmatprep.subr.mxu0 0.0
    %649 = vmatpush1.msra.mxu0 0.0
    %650 = vmatprep.subr.mxu0 0.0
    %651 = vmatpush1.msra.mxu0 0.0
    %652 = vmatprep.subr.mxu0 0.0
    %653 = vmatpush1.msra.mxu0 0.0
    %654 = vmatprep.subr.mxu0 0.0
    %655 = vmatpush1.msra.mxu0 0.0
    %656 = vmatprep.subr.mxu0 0.0
    %657 = vmatpush1.msra.mxu0 0.0
    %658 = vmatprep.subr.mxu0 0.0
    %659 = vmatpush1.msra.mxu0 0.0
    %660 = vmatprep.subr.mxu0 0.0
    %661 = vmatpush1.msra.mxu0 0.0
    %662 = vmatprep.subr.mxu0 0.0
    %663 = vmatpush1.msra.mxu0 0.0
    %664 = vmatprep.subr.mxu0 0.0
    %665 = vmatpush1.msra.mxu0 %v629
    %666 = vmatprep.subr.mxu0 0.0
    %667 = vmatpush2.msra.mxu0 0.0
    %668 = vmatprep.subr.mxu0 0.0
    %669 = vmatpush2.msra.mxu0 0.0
    %670 = vmatprep.subr.mxu0 0.0
    %671 = vmatpush2.msra.mxu0 0.0
    %672 = vmatprep.subr.mxu0 0.0
    %673 = vmatpush2.msra.mxu0 0.0
    %674 = vmatprep.subr.mxu0 0.0
    %675 = vmatpush2.msra.mxu0 0.0
    %676 = vmatprep.subr.mxu0 0.0
    %677 = vmatpush2.msra.mxu0 0.0
    %678 = vmatprep.subr.mxu0 0.0
    %679 = vmatpush2.msra.mxu0 0.0
    %680 = vmatprep.subr.mxu0 0.0
    %681 = vmatpush2.msra.mxu0 0.0
    %682 = vmatprep.subr.mxu0 0.0
    %683 = vmatpush2.msra.mxu0 0.0
    %684 = vmatprep.subr.mxu0 0.0
    %685 = vmatpush2.msra.mxu0 0.0
    %686 = vmatprep.subr.mxu0 0.0
    %687 = vmatpush2.msra.mxu0 0.0
    %688 = vmatprep.subr.mxu0 0.0
    %689 = vmatpush2.msra.mxu0 0.0
    %690 = vmatprep.subr.mxu0 0.0
    %691 = vmatpush2.msra.mxu0 0.0
    %692 = vmatprep.subr.mxu0 0.0
    %693 = vmatpush2.msra.mxu0 0.0
    %694 = vmatprep.subr.mxu0 0.0
    %695 = vmatpush2.msra.mxu0 0.0
    %696 = vmatprep.subr.mxu0 0.0
    %697 = vmatpush2.msra.mxu0 0.0
    %698 = vmatprep.mubr.f32.mxu0 0.0
    %699 = vmatmul.mubr.f32.gmra.mxu0 %v632
    %v700 = vpop.f32.mrf.mxu0
    %v701 = vadd.f32 0.0, %v700
    %v702 = vpop.f32.mrf.mxu0
    %703 = vdwg.mxu0
    %704 = vrot.lane.b32.xlu0 %v255, 112
    %v705 = vpop.permute.xlu0 %704
    %706 = vrot.lane.b32.xlu0 %v255, 80
    %v707 = vpop.permute.xlu0 %706
    %v708 = vsel %vm270, %v705, 0
    %v710 = vsel %vm270, %v707, 0
    %712 = vmatprep.subr.mxu0 0.0
    %713 = vmatpush1.xpose.msra.mxu0 0.0
    %714 = vmatprep.subr.mxu0 0.0
    %715 = vmatpush1.xpose.msra.mxu0 0.0
    %716 = vmatprep.subr.mxu0 0.0
    %717 = vmatpush1.xpose.msra.mxu0 0.0
    %718 = vmatprep.subr.mxu0 0.0
    %719 = vmatpush1.xpose.msra.mxu0 0.0
    %720 = vmatprep.subr.mxu0 0.0
    %721 = vmatpush1.xpose.msra.mxu0 0.0
    %722 = vmatprep.subr.mxu0 0.0
    %723 = vmatpush1.xpose.msra.mxu0 0.0
    %724 = vmatprep.subr.mxu0 0.0
    %725 = vmatpush1.xpose.msra.mxu0 0.0
    %726 = vmatprep.subr.mxu0 0.0
    %727 = vmatpush1.xpose.msra.mxu0 0.0
    %728 = vmatprep.subr.mxu0 0.0
    %729 = vmatpush1.xpose.msra.mxu0 0.0
    %730 = vmatprep.subr.mxu0 0.0
    %731 = vmatpush1.xpose.msra.mxu0 0.0
    %732 = vmatprep.subr.mxu0 0.0
    %733 = vmatpush1.xpose.msra.mxu0 0.0
    %734 = vmatprep.subr.mxu0 0.0
    %735 = vmatpush1.xpose.msra.mxu0 0.0
    %736 = vmatprep.subr.mxu0 0.0
    %737 = vmatpush1.xpose.msra.mxu0 0.0
    %738 = vmatprep.subr.mxu0 0.0
    %739 = vmatpush1.xpose.msra.mxu0 0.0
    %740 = vmatprep.subr.mxu0 0.0
    %741 = vmatpush1.xpose.msra.mxu0 0.0
    %742 = vmatprep.subr.mxu0 0.0
    %743 = vmatpush1.xpose.msra.mxu0 %v710
    %744 = vmatprep.subr.mxu0 0.0
    %745 = vmatpush2.xpose.msra.mxu0 0.0
    %746 = vmatprep.subr.mxu0 0.0
    %747 = vmatpush2.xpose.msra.mxu0 0.0
    %748 = vmatprep.subr.mxu0 0.0
    %749 = vmatpush2.xpose.msra.mxu0 0.0
    %750 = vmatprep.subr.mxu0 0.0
    %751 = vmatpush2.xpose.msra.mxu0 0.0
    %752 = vmatprep.subr.mxu0 0.0
    %753 = vmatpush2.xpose.msra.mxu0 0.0
    %754 = vmatprep.subr.mxu0 0.0
    %755 = vmatpush2.xpose.msra.mxu0 0.0
    %756 = vmatprep.subr.mxu0 0.0
    %757 = vmatpush2.xpose.msra.mxu0 0.0
    %758 = vmatprep.subr.mxu0 0.0
    %759 = vmatpush2.xpose.msra.mxu0 0.0
    %760 = vmatprep.subr.mxu0 0.0
    %761 = vmatpush2.xpose.msra.mxu0 0.0
    %762 = vmatprep.subr.mxu0 0.0
    %763 = vmatpush2.xpose.msra.mxu0 0.0
    %764 = vmatprep.subr.mxu0 0.0
    %765 = vmatpush2.xpose.msra.mxu0 0.0
    %766 = vmatprep.subr.mxu0 0.0
    %767 = vmatpush2.xpose.msra.mxu0 0.0
    %768 = vmatprep.subr.mxu0 0.0
    %769 = vmatpush2.xpose.msra.mxu0 0.0
    %770 = vmatprep.subr.mxu0 0.0
    %771 = vmatpush2.xpose.msra.mxu0 0.0
    %772 = vmatprep.subr.mxu0 0.0
    %773 = vmatpush2.xpose.msra.mxu0 0.0
    %774 = vmatprep.subr.mxu0 0.0
    %775 = vmatpush2.xpose.msra.mxu0 0.0
    %776 = vmatprep.mubr.f32.mxu0 0.0
    %777 = vmatmul.mubr.f32.gmra.mxu0 %v708
    %v778 = vpop.f32.mrf.mxu0
    %v779 = vadd.f32 %v173, %v778
    %v780 = vpop.f32.mrf.mxu0
    %781 = vdwg.mxu0
    %782 = vrot.lane.b32.xlu0 %v260, 112
    %v783 = vpop.permute.xlu0 %782
    %784 = vrot.lane.b32.xlu0 %v260, 80
    %v785 = vpop.permute.xlu0 %784
    %v786 = vsel %vm270, %v783, 0
    %v788 = vsel %vm270, %v785, 0
    %790 = vmatprep.subr.mxu0 0.0
    %791 = vmatpush1.xpose.msra.mxu0 0.0
    %792 = vmatprep.subr.mxu0 0.0
    %793 = vmatpush1.xpose.msra.mxu0 0.0
    %794 = vmatprep.subr.mxu0 0.0
    %795 = vmatpush1.xpose.msra.mxu0 0.0
    %796 = vmatprep.subr.mxu0 0.0
    %797 = vmatpush1.xpose.msra.mxu0 0.0
    %798 = vmatprep.subr.mxu0 0.0
    %799 = vmatpush1.xpose.msra.mxu0 0.0
    %800 = vmatprep.subr.mxu0 0.0
    %801 = vmatpush1.xpose.msra.mxu0 0.0
    %802 = vmatprep.subr.mxu0 0.0
    %803 = vmatpush1.xpose.msra.mxu0 0.0
    %804 = vmatprep.subr.mxu0 0.0
    %805 = vmatpush1.xpose.msra.mxu0 0.0
    %806 = vmatprep.subr.mxu0 0.0
    %807 = vmatpush1.xpose.msra.mxu0 0.0
    %808 = vmatprep.subr.mxu0 0.0
    %809 = vmatpush1.xpose.msra.mxu0 0.0
    %810 = vmatprep.subr.mxu0 0.0
    %811 = vmatpush1.xpose.msra.mxu0 0.0
    %812 = vmatprep.subr.mxu0 0.0
    %813 = vmatpush1.xpose.msra.mxu0 0.0
    %814 = vmatprep.subr.mxu0 0.0
    %815 = vmatpush1.xpose.msra.mxu0 0.0
    %816 = vmatprep.subr.mxu0 0.0
    %817 = vmatpush1.xpose.msra.mxu0 0.0
    %818 = vmatprep.subr.mxu0 0.0
    %819 = vmatpush1.xpose.msra.mxu0 0.0
    %820 = vmatprep.subr.mxu0 0.0
    %821 = vmatpush1.xpose.msra.mxu0 %v788
    %822 = vmatprep.subr.mxu0 0.0
    %823 = vmatpush2.xpose.msra.mxu0 0.0
    %824 = vmatprep.subr.mxu0 0.0
    %825 = vmatpush2.xpose.msra.mxu0 0.0
    %826 = vmatprep.subr.mxu0 0.0
    %827 = vmatpush2.xpose.msra.mxu0 0.0
    %828 = vmatprep.subr.mxu0 0.0
    %829 = vmatpush2.xpose.msra.mxu0 0.0
    %830 = vmatprep.subr.mxu0 0.0
    %831 = vmatpush2.xpose.msra.mxu0 0.0
    %832 = vmatprep.subr.mxu0 0.0
    %833 = vmatpush2.xpose.msra.mxu0 0.0
    %834 = vmatprep.subr.mxu0 0.0
    %835 = vmatpush2.xpose.msra.mxu0 0.0
    %836 = vmatprep.subr.mxu0 0.0
    %837 = vmatpush2.xpose.msra.mxu0 0.0
    %838 = vmatprep.subr.mxu0 0.0
    %839 = vmatpush2.xpose.msra.mxu0 0.0
    %840 = vmatprep.subr.mxu0 0.0
    %841 = vmatpush2.xpose.msra.mxu0 0.0
    %842 = vmatprep.subr.mxu0 0.0
    %843 = vmatpush2.xpose.msra.mxu0 0.0
    %844 = vmatprep.subr.mxu0 0.0
    %845 = vmatpush2.xpose.msra.mxu0 0.0
    %846 = vmatprep.subr.mxu0 0.0
    %847 = vmatpush2.xpose.msra.mxu0 0.0
    %848 = vmatprep.subr.mxu0 0.0
    %849 = vmatpush2.xpose.msra.mxu0 0.0
    %850 = vmatprep.subr.mxu0 0.0
    %851 = vmatpush2.xpose.msra.mxu0 0.0
    %852 = vmatprep.subr.mxu0 0.0
    %853 = vmatpush2.xpose.msra.mxu0 0.0
    %854 = vmatprep.mubr.f32.mxu0 0.0
    %855 = vmatmul.mubr.f32.gmra.mxu0 %v786
    %v856 = vpop.f32.mrf.mxu0
    %v857 = vadd.f32 %v174, %v856
    %v858 = vpop.f32.mrf.mxu0
    %859 = vdwg.mxu0
    %v860 = vsel %vm422, %v779, -inf
    %861 = vmax.xlane.f32.xlu0 %v860
    %v862 = vpop.xlane.xlu0 %861
    %v863 = vsel %vm422, %v857, -inf
    %864 = vmax.xlane.f32.xlu0 %v863
    %v865 = vpop.xlane.xlu0 %864
    %v866 = vsub.f32 %v779, %v862
    %v867 = vsub.f32 %v857, %v865
    %v868 = vmul.f32 %v866, 1.442695
    %v869 = vpow.pop %v868
    %v870 = vmul.f32 %v867, 1.442695
    %v871 = vpow.pop %v870
    %v872 = vsel %vm422, %v869, 0.0
    %873 = vadd.xlane.f32.xlu0 %v872
    %v874 = vpop.xlane.xlu0 %873
    %v875 = vsel %vm422, %v871, 0.0
    %876 = vadd.xlane.f32.xlu0 %v875
    %v877 = vpop.xlane.xlu0 %876
    %v878 = vrcp.pop %v874
    %v879 = vmul.f32 %v869, %v878
    %v880 = vrcp.pop %v877
    %v881 = vmul.f32 %v871, %v880
    %v882 = vcombine.high %v879, 0.0
    %v884 = vunpack.c.l.s4 1983009808
    %v885 = vunpack.c.0.s8 %v884
    %v886 = vlaneseq
    %v887 = vshrl.u32 %v886, 7
    %v888 = vsub.s32 %v885, %v887
    %v889 = vrot.slane %v879, %v888
    %v891 = vunpack.c.l.s4 1983009808
    %v892 = vunpack.c.0.s8 %v891
    %v893 = vlaneseq
    %v894 = vshrl.u32 %v893, 7
    %v895 = vsub.s32 %v892, %v894
    %v896 = vrot.slane %v882, %v895
    %v897 = vcombine.high %v881, 0.0
    %v899 = vunpack.c.l.s4 1983009808
    %v900 = vunpack.c.0.s8 %v899
    %v901 = vlaneseq
    %v902 = vshrl.u32 %v901, 7
    %v903 = vsub.s32 %v900, %v902
    %v904 = vrot.slane %v881, %v903
    %v906 = vunpack.c.l.s4 1983009808
    %v907 = vunpack.c.0.s8 %v906
    %v908 = vlaneseq
    %v909 = vshrl.u32 %v908, 7
    %v910 = vsub.s32 %v907, %v909
    %v911 = vrot.slane %v897, %v910
    %v912 = vcombine.low %v889, %v904
    %v913 = vcombine.high %v889, %v904
    %v915 = vunpack.c.l.s4 1934713408
    %v916 = vunpack.c.0.s8 %v915
    %v917 = vlaneseq
    %v918 = vshrl.u32 %v917, 7
    %v919 = vsub.s32 %v916, %v918
    %v920 = vrot.slane %v912, %v919
    %v922 = vunpack.c.l.s4 1934713408
    %v923 = vunpack.c.0.s8 %v922
    %v924 = vlaneseq
    %v925 = vshrl.u32 %v924, 7
    %v926 = vsub.s32 %v923, %v925
    %v927 = vrot.slane %v913, %v926
    %v928 = vcombine.low %v896, %v911
    %v929 = vcombine.high %v896, %v911
    %v931 = vunpack.c.l.s4 1934713408
    %v932 = vunpack.c.0.s8 %v931
    %v933 = vlaneseq
    %v934 = vshrl.u32 %v933, 7
    %v935 = vsub.s32 %v932, %v934
    %v936 = vrot.slane %v928, %v935
    %v938 = vunpack.c.l.s4 1934713408
    %v939 = vunpack.c.0.s8 %v938
    %v940 = vlaneseq
    %v941 = vshrl.u32 %v940, 7
    %v942 = vsub.s32 %v939, %v941
    %v943 = vrot.slane %v929, %v942
    %v944 = vcombine.high %v920, 0.0
    %v945 = vcombine.high %v927, 0.0
    %v946 = vcombine.high %v936, 0.0
    %v947 = vcombine.high %v943, 0.0
    %949 = vrot.lane.b32.xlu0 %v944, 8
    %v950 = vpop.permute.xlu0 %949
    %953 = vrot.lane.b32.xlu0 %v927, 16
    %v954 = vpop.permute.xlu0 %953
    %957 = vrot.lane.b32.xlu0 %v945, 24
    %v958 = vpop.permute.xlu0 %957
    %961 = vrot.lane.b32.xlu0 %v936, 32
    %v962 = vpop.permute.xlu0 %961
    %965 = vrot.lane.b32.xlu0 %v946, 40
    %v966 = vpop.permute.xlu0 %965
    %969 = vrot.lane.b32.xlu0 %v943, 48
    %v970 = vpop.permute.xlu0 %969
    %973 = vrot.lane.b32.xlu0 %v947, 56
    %v974 = vpop.permute.xlu0 %973
    %v976 = vsel %vm422, %v920, %v950
    %v977 = vsel %vm270, %v976, %v954
    %v978 = vsel %vm541, %v977, %v958
    %v979 = vsel %vm181, %v978, %v962
    %v980 = vsel %vm544, %v979, %v966
    %v981 = vsel %vm546, %v980, %v970
    %v982 = vsel %vm548, %v981, %v974
    %984 = vrot.lane.b32.xlu0 %v982, 64
    %v985 = vpop.permute.xlu0 %984
    %vm987 = vcmask 1041920
    %988 = vst.msk [vmem:[%s18] sm:$0x3] %vm987, %v985
    %989 = vrot.lane.b32.xlu0 %v255, 48
    %v990 = vpop.permute.xlu0 %989
    %v993 = vsel %vm422, %v879, 0
    %995 = vmatprep.subr.mxu0 0.0
    %996 = vmatpush1.msra.mxu0 0.0
    %997 = vmatprep.subr.mxu0 0.0
    %998 = vmatpush1.msra.mxu0 0.0
    %999 = vmatprep.subr.mxu0 0.0
    %1000 = vmatpush1.msra.mxu0 0.0
    %1001 = vmatprep.subr.mxu0 0.0
    %1002 = vmatpush1.msra.mxu0 0.0
    %1003 = vmatprep.subr.mxu0 0.0
    %1004 = vmatpush1.msra.mxu0 0.0
    %1005 = vmatprep.subr.mxu0 0.0
    %1006 = vmatpush1.msra.mxu0 0.0
    %1007 = vmatprep.subr.mxu0 0.0
    %1008 = vmatpush1.msra.mxu0 0.0
    %1009 = vmatprep.subr.mxu0 0.0
    %1010 = vmatpush1.msra.mxu0 0.0
    %1011 = vmatprep.subr.mxu0 0.0
    %1012 = vmatpush1.msra.mxu0 0.0
    %1013 = vmatprep.subr.mxu0 0.0
    %1014 = vmatpush1.msra.mxu0 0.0
    %1015 = vmatprep.subr.mxu0 0.0
    %1016 = vmatpush1.msra.mxu0 0.0
    %1017 = vmatprep.subr.mxu0 0.0
    %1018 = vmatpush1.msra.mxu0 0.0
    %1019 = vmatprep.subr.mxu0 0.0
    %1020 = vmatpush1.msra.mxu0 0.0
    %1021 = vmatprep.subr.mxu0 0.0
    %1022 = vmatpush1.msra.mxu0 0.0
    %1023 = vmatprep.subr.mxu0 0.0
    %1024 = vmatpush1.msra.mxu0 0.0
    %1025 = vmatprep.subr.mxu0 0.0
    %1026 = vmatpush1.msra.mxu0 %v990
    %1027 = vmatprep.subr.mxu0 0.0
    %1028 = vmatpush2.msra.mxu0 0.0
    %1029 = vmatprep.subr.mxu0 0.0
    %1030 = vmatpush2.msra.mxu0 0.0
    %1031 = vmatprep.subr.mxu0 0.0
    %1032 = vmatpush2.msra.mxu0 0.0
    %1033 = vmatprep.subr.mxu0 0.0
    %1034 = vmatpush2.msra.mxu0 0.0
    %1035 = vmatprep.subr.mxu0 0.0
    %1036 = vmatpush2.msra.mxu0 0.0
    %1037 = vmatprep.subr.mxu0 0.0
    %1038 = vmatpush2.msra.mxu0 0.0
    %1039 = vmatprep.subr.mxu0 0.0
    %1040 = vmatpush2.msra.mxu0 0.0
    %1041 = vmatprep.subr.mxu0 0.0
    %1042 = vmatpush2.msra.mxu0 0.0
    %1043 = vmatprep.subr.mxu0 0.0
    %1044 = vmatpush2.msra.mxu0 0.0
    %1045 = vmatprep.subr.mxu0 0.0
    %1046 = vmatpush2.msra.mxu0 0.0
    %1047 = vmatprep.subr.mxu0 0.0
    %1048 = vmatpush2.msra.mxu0 0.0
    %1049 = vmatprep.subr.mxu0 0.0
    %1050 = vmatpush2.msra.mxu0 0.0
    %1051 = vmatprep.subr.mxu0 0.0
    %1052 = vmatpush2.msra.mxu0 0.0
    %1053 = vmatprep.subr.mxu0 0.0
    %1054 = vmatpush2.msra.mxu0 0.0
    %1055 = vmatprep.subr.mxu0 0.0
    %1056 = vmatpush2.msra.mxu0 0.0
    %1057 = vmatprep.subr.mxu0 0.0
    %1058 = vmatpush2.msra.mxu0 0.0
    %1059 = vmatprep.mubr.f32.mxu0 0.0
    %1060 = vmatmul.mubr.f32.gmra.mxu0 %v993
    %v1061 = vpop.f32.mrf.mxu0
    %v1062 = vadd.f32 0.0, %v1061
    %v1063 = vpop.f32.mrf.mxu0
    %1064 = vdwg.mxu0
    %1065 = vrot.lane.b32.xlu0 %v260, 48
    %v1066 = vpop.permute.xlu0 %1065
    %v1069 = vsel %vm422, %v881, 0
    %1071 = vmatprep.subr.mxu0 0.0
    %1072 = vmatpush1.msra.mxu0 0.0
    %1073 = vmatprep.subr.mxu0 0.0
    %1074 = vmatpush1.msra.mxu0 0.0
    %1075 = vmatprep.subr.mxu0 0.0
    %1076 = vmatpush1.msra.mxu0 0.0
    %1077 = vmatprep.subr.mxu0 0.0
    %1078 = vmatpush1.msra.mxu0 0.0
    %1079 = vmatprep.subr.mxu0 0.0
    %1080 = vmatpush1.msra.mxu0 0.0
    %1081 = vmatprep.subr.mxu0 0.0
    %1082 = vmatpush1.msra.mxu0 0.0
    %1083 = vmatprep.subr.mxu0 0.0
    %1084 = vmatpush1.msra.mxu0 0.0
    %1085 = vmatprep.subr.mxu0 0.0
    %1086 = vmatpush1.msra.mxu0 0.0
    %1087 = vmatprep.subr.mxu0 0.0
    %1088 = vmatpush1.msra.mxu0 0.0
    %1089 = vmatprep.subr.mxu0 0.0
    %1090 = vmatpush1.msra.mxu0 0.0
    %1091 = vmatprep.subr.mxu0 0.0
    %1092 = vmatpush1.msra.mxu0 0.0
    %1093 = vmatprep.subr.mxu0 0.0
    %1094 = vmatpush1.msra.mxu0 0.0
    %1095 = vmatprep.subr.mxu0 0.0
    %1096 = vmatpush1.msra.mxu0 0.0
    %1097 = vmatprep.subr.mxu0 0.0
    %1098 = vmatpush1.msra.mxu0 0.0
    %1099 = vmatprep.subr.mxu0 0.0
    %1100 = vmatpush1.msra.mxu0 0.0
    %1101 = vmatprep.subr.mxu0 0.0
    %1102 = vmatpush1.msra.mxu0 %v1066
    %1103 = vmatprep.subr.mxu0 0.0
    %1104 = vmatpush2.msra.mxu0 0.0
    %1105 = vmatprep.subr.mxu0 0.0
    %1106 = vmatpush2.msra.mxu0 0.0
    %1107 = vmatprep.subr.mxu0 0.0
    %1108 = vmatpush2.msra.mxu0 0.0
    %1109 = vmatprep.subr.mxu0 0.0
    %1110 = vmatpush2.msra.mxu0 0.0
    %1111 = vmatprep.subr.mxu0 0.0
    %1112 = vmatpush2.msra.mxu0 0.0
    %1113 = vmatprep.subr.mxu0 0.0
    %1114 = vmatpush2.msra.mxu0 0.0
    %1115 = vmatprep.subr.mxu0 0.0
    %1116 = vmatpush2.msra.mxu0 0.0
    %1117 = vmatprep.subr.mxu0 0.0
    %1118 = vmatpush2.msra.mxu0 0.0
    %1119 = vmatprep.subr.mxu0 0.0
    %1120 = vmatpush2.msra.mxu0 0.0
    %1121 = vmatprep.subr.mxu0 0.0
    %1122 = vmatpush2.msra.mxu0 0.0
    %1123 = vmatprep.subr.mxu0 0.0
    %1124 = vmatpush2.msra.mxu0 0.0
    %1125 = vmatprep.subr.mxu0 0.0
    %1126 = vmatpush2.msra.mxu0 0.0
    %1127 = vmatprep.subr.mxu0 0.0
    %1128 = vmatpush2.msra.mxu0 0.0
    %1129 = vmatprep.subr.mxu0 0.0
    %1130 = vmatpush2.msra.mxu0 0.0
    %1131 = vmatprep.subr.mxu0 0.0
    %1132 = vmatpush2.msra.mxu0 0.0
    %1133 = vmatprep.subr.mxu0 0.0
    %1134 = vmatpush2.msra.mxu0 0.0
    %1135 = vmatprep.mubr.f32.mxu0 0.0
    %1136 = vmatmul.mubr.f32.gmra.mxu0 %v1069
    %v1137 = vpop.f32.mrf.mxu0
    %v1138 = vadd.f32 0.0, %v1137
    %v1139 = vpop.f32.mrf.mxu0
    %1140 = vdwg.mxu0
    %v1142 = vsel %vm270, %v1062, 0
    %v1145 = vsel %vm270, %v1138, 0
    %1147 = vmatprep.subr.mxu0 0.0
    %1148 = vmatpush1.msra.mxu0 0.0
    %1149 = vmatprep.subr.mxu0 0.0
    %1150 = vmatpush1.msra.mxu0 0.0
    %1151 = vmatprep.subr.mxu0 0.0
    %1152 = vmatpush1.msra.mxu0 0.0
    %1153 = vmatprep.subr.mxu0 0.0
    %1154 = vmatpush1.msra.mxu0 0.0
    %1155 = vmatprep.subr.mxu0 0.0
    %1156 = vmatpush1.msra.mxu0 0.0
    %1157 = vmatprep.subr.mxu0 0.0
    %1158 = vmatpush1.msra.mxu0 0.0
    %1159 = vmatprep.subr.mxu0 0.0
    %1160 = vmatpush1.msra.mxu0 0.0
    %1161 = vmatprep.subr.mxu0 0.0
    %1162 = vmatpush1.msra.mxu0 0.0
    %1163 = vmatprep.subr.mxu0 0.0
    %1164 = vmatpush1.msra.mxu0 0.0
    %1165 = vmatprep.subr.mxu0 0.0
    %1166 = vmatpush1.msra.mxu0 0.0
    %1167 = vmatprep.subr.mxu0 0.0
    %1168 = vmatpush1.msra.mxu0 0.0
    %1169 = vmatprep.subr.mxu0 0.0
    %1170 = vmatpush1.msra.mxu0 0.0
    %1171 = vmatprep.subr.mxu0 0.0
    %1172 = vmatpush1.msra.mxu0 0.0
    %1173 = vmatprep.subr.mxu0 0.0
    %1174 = vmatpush1.msra.mxu0 0.0
    %1175 = vmatprep.subr.mxu0 0.0
    %1176 = vmatpush1.msra.mxu0 %v266
    %1177 = vmatprep.subr.mxu0 0.0
    %1178 = vmatpush1.msra.mxu0 %v265
    %1179 = vmatprep.subr.mxu0 0.0
    %1180 = vmatpush2.msra.mxu0 0.0
    %1181 = vmatprep.subr.mxu0 0.0
    %1182 = vmatpush2.msra.mxu0 0.0
    %1183 = vmatprep.subr.mxu0 0.0
    %1184 = vmatpush2.msra.mxu0 0.0
    %1185 = vmatprep.subr.mxu0 0.0
    %1186 = vmatpush2.msra.mxu0 0.0
    %1187 = vmatprep.subr.mxu0 0.0
    %1188 = vmatpush2.msra.mxu0 0.0
    %1189 = vmatprep.subr.mxu0 0.0
    %1190 = vmatpush2.msra.mxu0 0.0
    %1191 = vmatprep.subr.mxu0 0.0
    %1192 = vmatpush2.msra.mxu0 0.0
    %1193 = vmatprep.subr.mxu0 0.0
    %1194 = vmatpush2.msra.mxu0 0.0
    %1195 = vmatprep.subr.mxu0 0.0
    %1196 = vmatpush2.msra.mxu0 0.0
    %1197 = vmatprep.subr.mxu0 0.0
    %1198 = vmatpush2.msra.mxu0 0.0
    %1199 = vmatprep.subr.mxu0 0.0
    %1200 = vmatpush2.msra.mxu0 0.0
    %1201 = vmatprep.subr.mxu0 0.0
    %1202 = vmatpush2.msra.mxu0 0.0
    %1203 = vmatprep.subr.mxu0 0.0
    %1204 = vmatpush2.msra.mxu0 0.0
    %1205 = vmatprep.subr.mxu0 0.0
    %1206 = vmatpush2.msra.mxu0 0.0
    %1207 = vmatprep.subr.mxu0 0.0
    %1208 = vmatpush2.msra.mxu0 0.0
    %1209 = vmatprep.subr.mxu0 0.0
    %1210 = vmatpush2.msra.mxu0 0.0
    %1211 = vmatprep.mubr.f32.mxu0 0.0
    %1212 = vmatmul.mubr.f32.gmra.mxu0 %v1142
    %v1213 = vpop.f32.mrf.mxu0
    %v1214 = vadd.f32 0.0, %v1213
    %v1215 = vpop.f32.mrf.mxu0
    %1216 = vmatprep.mubr.f32.mxu0 0.0
    %1217 = vmatmul.mubr.f32.gmra.mxu0 %v1145
    %v1218 = vpop.f32.mrf.mxu0
    %v1219 = vadd.f32 0.0, %v1218
    %v1220 = vpop.f32.mrf.mxu0
    %1221 = vdwg.mxu0
    %v1223 = vsel %vm270, %v625, 0
    %v1226 = vsel %vm270, %v701, 0
    %1228 = vmatprep.subr.mxu0 0.0
    %1229 = vmatpush1.msra.mxu0 0.0
    %1230 = vmatprep.subr.mxu0 0.0
    %1231 = vmatpush1.msra.mxu0 0.0
    %1232 = vmatprep.subr.mxu0 0.0
    %1233 = vmatpush1.msra.mxu0 0.0
    %1234 = vmatprep.subr.mxu0 0.0
    %1235 = vmatpush1.msra.mxu0 0.0
    %1236 = vmatprep.subr.mxu0 0.0
    %1237 = vmatpush1.msra.mxu0 0.0
    %1238 = vmatprep.subr.mxu0 0.0
    %1239 = vmatpush1.msra.mxu0 0.0
    %1240 = vmatprep.subr.mxu0 0.0
    %1241 = vmatpush1.msra.mxu0 0.0
    %1242 = vmatprep.subr.mxu0 0.0
    %1243 = vmatpush1.msra.mxu0 0.0
    %1244 = vmatprep.subr.mxu0 0.0
    %1245 = vmatpush1.msra.mxu0 0.0
    %1246 = vmatprep.subr.mxu0 0.0
    %1247 = vmatpush1.msra.mxu0 0.0
    %1248 = vmatprep.subr.mxu0 0.0
    %1249 = vmatpush1.msra.mxu0 0.0
    %1250 = vmatprep.subr.mxu0 0.0
    %1251 = vmatpush1.msra.mxu0 0.0
    %1252 = vmatprep.subr.mxu0 0.0
    %1253 = vmatpush1.msra.mxu0 0.0
    %1254 = vmatprep.subr.mxu0 0.0
    %1255 = vmatpush1.msra.mxu0 0.0
    %1256 = vmatprep.subr.mxu0 0.0
    %1257 = vmatpush1.msra.mxu0 %v264
    %1258 = vmatprep.subr.mxu0 0.0
    %1259 = vmatpush1.msra.mxu0 %v263
    %1260 = vmatprep.subr.mxu0 0.0
    %1261 = vmatpush2.msra.mxu0 0.0
    %1262 = vmatprep.subr.mxu0 0.0
    %1263 = vmatpush2.msra.mxu0 0.0
    %1264 = vmatprep.subr.mxu0 0.0
    %1265 = vmatpush2.msra.mxu0 0.0
    %1266 = vmatprep.subr.mxu0 0.0
    %1267 = vmatpush2.msra.mxu0 0.0
    %1268 = vmatprep.subr.mxu0 0.0
    %1269 = vmatpush2.msra.mxu0 0.0
    %1270 = vmatprep.subr.mxu0 0.0
    %1271 = vmatpush2.msra.mxu0 0.0
    %1272 = vmatprep.subr.mxu0 0.0
    %1273 = vmatpush2.msra.mxu0 0.0
    %1274 = vmatprep.subr.mxu0 0.0
    %1275 = vmatpush2.msra.mxu0 0.0
    %1276 = vmatprep.subr.mxu0 0.0
    %1277 = vmatpush2.msra.mxu0 0.0
    %1278 = vmatprep.subr.mxu0 0.0
    %1279 = vmatpush2.msra.mxu0 0.0
    %1280 = vmatprep.subr.mxu0 0.0
    %1281 = vmatpush2.msra.mxu0 0.0
    %1282 = vmatprep.subr.mxu0 0.0
    %1283 = vmatpush2.msra.mxu0 0.0
    %1284 = vmatprep.subr.mxu0 0.0
    %1285 = vmatpush2.msra.mxu0 0.0
    %1286 = vmatprep.subr.mxu0 0.0
    %1287 = vmatpush2.msra.mxu0 0.0
    %1288 = vmatprep.subr.mxu0 0.0
    %1289 = vmatpush2.msra.mxu0 0.0
    %1290 = vmatprep.subr.mxu0 0.0
    %1291 = vmatpush2.msra.mxu0 0.0
    %1292 = vmatprep.mubr.f32.mxu0 0.0
    %1293 = vmatmul.mubr.f32.gmra.mxu0 %v1223
    %v1294 = vpop.f32.mrf.mxu0
    %v1295 = vadd.f32 %v1214, %v1294
    %v1296 = vpop.f32.mrf.mxu0
    %1297 = vmatprep.mubr.f32.mxu0 0.0
    %1298 = vmatmul.mubr.f32.gmra.mxu0 %v1226
    %v1299 = vpop.f32.mrf.mxu0
    %v1300 = vadd.f32 %v1219, %v1299
    %v1301 = vpop.f32.mrf.mxu0
    %1302 = vdwg.mxu0
    %v1303 = vadd.f32 %v1295, %v169
    %v1304 = vadd.f32 %v1300, %v170
    %v1305 = vld [vmem:[%s6] sm:$0x1]
    %v1306 = vld [vmem:[%s7] sm:$0x1]
    %v1307 = vsel %vm181, %v1303, 0.0
    %1308 = vadd.xlane.f32.xlu0 %v1307
    %v1309 = vpop.xlane.xlu0 %1308
    %v1310 = vsel %vm181, %v1304, 0.0
    %1311 = vadd.xlane.f32.xlu0 %v1310
    %v1312 = vpop.xlane.xlu0 %1311
    %v1313 = vrcp.pop 32.0
    %v1314 = vmul.f32 %v1309, %v1313
    %v1315 = vmul.f32 %v1312, %v1313
    %v1316 = vsub.f32 %v1303, %v1314
    %v1317 = vsub.f32 %v1304, %v1315
    %v1318 = vmul.f32 %v1316, %v1316
    %v1319 = vmul.f32 %v1317, %v1317
    %v1320 = vsel %vm181, %v1318, 0.0
    %1321 = vadd.xlane.f32.xlu0 %v1320
    %v1322 = vpop.xlane.xlu0 %1321
    %v1323 = vsel %vm181, %v1319, 0.0
    %1324 = vadd.xlane.f32.xlu0 %v1323
    %v1325 = vpop.xlane.xlu0 %1324
    %v1326 = vmul.f32 %v1322, %v1313
    %v1327 = vmul.f32 %v1325, %v1313
    %v1328 = vadd.f32 %v1326, 1e-05
    %v1329 = vadd.f32 %v1327, 1e-05
    %v1330 = vrsqrt.pop %v1328
    %v1331 = vrsqrt.pop %v1329
    %v1332 = vmul.f32 %v1316, %v1330
    %v1333 = vmul.f32 %v1317, %v1331
    %v1335 = vlaneseq
    %v1336 = vshrl.u32 %v1335, 7
    %v1337 = vsub.s32 0, %v1336
    %v1338 = vrot.slane %v1305, %v1337
    %v1340 = vmul.f32 %v1332, %v1338
    %v1341 = vmul.f32 %v1333, %v1338
    %v1343 = vlaneseq
    %v1344 = vshrl.u32 %v1343, 7
    %v1345 = vsub.s32 0, %v1344
    %v1346 = vrot.slane %v1306, %v1345
    %v1348 = vadd.f32 %v1340, %v1346
    %v1349 = vadd.f32 %v1341, %v1346
    %v1350 = vld [vmem:[%s8] sm:$0xff]
    %v1351 = vld [vmem:[%s8 + $0x8] sm:$0xff]
    %v1352 = vld [vmem:[%s8 + $0x10] sm:$0xff]
    %v1353 = vld [vmem:[%s8 + $0x18] sm:$0xff]
    %v1355 = vsel %vm181, %v1348, 0
    %v1358 = vsel %vm181, %v1349, 0
    %1360 = vmatprep.subr.mxu0 0.0
    %1361 = vmatpush1.msra.mxu0 0.0
    %1362 = vmatprep.subr.mxu0 0.0
    %1363 = vmatpush1.msra.mxu0 0.0
    %1364 = vmatprep.subr.mxu0 0.0
    %1365 = vmatpush1.msra.mxu0 0.0
    %1366 = vmatprep.subr.mxu0 0.0
    %1367 = vmatpush1.msra.mxu0 0.0
    %1368 = vmatprep.subr.mxu0 0.0
    %1369 = vmatpush1.msra.mxu0 0.0
    %1370 = vmatprep.subr.mxu0 0.0
    %1371 = vmatpush1.msra.mxu0 0.0
    %1372 = vmatprep.subr.mxu0 0.0
    %1373 = vmatpush1.msra.mxu0 0.0
    %1374 = vmatprep.subr.mxu0 0.0
    %1375 = vmatpush1.msra.mxu0 0.0
    %1376 = vmatprep.subr.mxu0 0.0
    %1377 = vmatpush1.msra.mxu0 0.0
    %1378 = vmatprep.subr.mxu0 0.0
    %1379 = vmatpush1.msra.mxu0 0.0
    %1380 = vmatprep.subr.mxu0 0.0
    %1381 = vmatpush1.msra.mxu0 0.0
    %1382 = vmatprep.subr.mxu0 0.0
    %1383 = vmatpush1.msra.mxu0 0.0
    %1384 = vmatprep.subr.mxu0 0.0
    %1385 = vmatpush1.msra.mxu0 %v1353
    %1386 = vmatprep.subr.mxu0 0.0
    %1387 = vmatpush1.msra.mxu0 %v1352
    %1388 = vmatprep.subr.mxu0 0.0
    %1389 = vmatpush1.msra.mxu0 %v1351
    %1390 = vmatprep.subr.mxu0 0.0
    %1391 = vmatpush1.msra.mxu0 %v1350
    %1392 = vmatprep.subr.mxu0 0.0
    %1393 = vmatpush2.msra.mxu0 0.0
    %1394 = vmatprep.subr.mxu0 0.0
    %1395 = vmatpush2.msra.mxu0 0.0
    %1396 = vmatprep.subr.mxu0 0.0
    %1397 = vmatpush2.msra.mxu0 0.0
    %1398 = vmatprep.subr.mxu0 0.0
    %1399 = vmatpush2.msra.mxu0 0.0
    %1400 = vmatprep.subr.mxu0 0.0
    %1401 = vmatpush2.msra.mxu0 0.0
    %1402 = vmatprep.subr.mxu0 0.0
    %1403 = vmatpush2.msra.mxu0 0.0
    %1404 = vmatprep.subr.mxu0 0.0
    %1405 = vmatpush2.msra.mxu0 0.0
    %1406 = vmatprep.subr.mxu0 0.0
    %1407 = vmatpush2.msra.mxu0 0.0
    %1408 = vmatprep.subr.mxu0 0.0
    %1409 = vmatpush2.msra.mxu0 0.0
    %1410 = vmatprep.subr.mxu0 0.0
    %1411 = vmatpush2.msra.mxu0 0.0
    %1412 = vmatprep.subr.mxu0 0.0
    %1413 = vmatpush2.msra.mxu0 0.0
    %1414 = vmatprep.subr.mxu0 0.0
    %1415 = vmatpush2.msra.mxu0 0.0
    %1416 = vmatprep.subr.mxu0 0.0
    %1417 = vmatpush2.msra.mxu0 0.0
    %1418 = vmatprep.subr.mxu0 0.0
    %1419 = vmatpush2.msra.mxu0 0.0
    %1420 = vmatprep.subr.mxu0 0.0
    %1421 = vmatpush2.msra.mxu0 0.0
    %1422 = vmatprep.subr.mxu0 0.0
    %1423 = vmatpush2.msra.mxu0 0.0
    %1424 = vmatprep.mubr.f32.mxu0 0.0
    %1425 = vmatmul.mubr.f32.gmra.mxu0 %v1355
    %v1426 = vpop.f32.mrf.mxu0
    %v1427 = vadd.f32 0.0, %v1426
    %v1428 = vpop.f32.mrf.mxu0
    %1429 = vmatprep.mubr.f32.mxu0 0.0
    %1430 = vmatmul.mubr.f32.gmra.mxu0 %v1358
    %v1431 = vpop.f32.mrf.mxu0
    %v1432 = vadd.f32 0.0, %v1431
    %v1433 = vpop.f32.mrf.mxu0
    %1434 = vdwg.mxu0
    %v1435 = vld [vmem:[#allocation5] sm:$0xff]
    %v1436 = vld [vmem:[#allocation5 + $0x8] sm:$0xff]
    %v1437 = vld [vmem:[#allocation5 + $0x10] sm:$0xff]
    %v1438 = vld [vmem:[#allocation5 + $0x18] sm:$0xff]
    %v1440 = vsel %vm181, %v171, 0
    %v1443 = vsel %vm181, %v172, 0
    %1445 = vmatprep.subr.mxu0 0.0
    %1446 = vmatpush1.msra.mxu0 0.0
    %1447 = vmatprep.subr.mxu0 0.0
    %1448 = vmatpush1.msra.mxu0 0.0
    %1449 = vmatprep.subr.mxu0 0.0
    %1450 = vmatpush1.msra.mxu0 0.0
    %1451 = vmatprep.subr.mxu0 0.0
    %1452 = vmatpush1.msra.mxu0 0.0
    %1453 = vmatprep.subr.mxu0 0.0
    %1454 = vmatpush1.msra.mxu0 0.0
    %1455 = vmatprep.subr.mxu0 0.0
    %1456 = vmatpush1.msra.mxu0 0.0
    %1457 = vmatprep.subr.mxu0 0.0
    %1458 = vmatpush1.msra.mxu0 0.0
    %1459 = vmatprep.subr.mxu0 0.0
    %1460 = vmatpush1.msra.mxu0 0.0
    %1461 = vmatprep.subr.mxu0 0.0
    %1462 = vmatpush1.msra.mxu0 0.0
    %1463 = vmatprep.subr.mxu0 0.0
    %1464 = vmatpush1.msra.mxu0 0.0
    %1465 = vmatprep.subr.mxu0 0.0
    %1466 = vmatpush1.msra.mxu0 0.0
    %1467 = vmatprep.subr.mxu0 0.0
    %1468 = vmatpush1.msra.mxu0 0.0
    %1469 = vmatprep.subr.mxu0 0.0
    %1470 = vmatpush1.msra.mxu0 %v1438
    %1471 = vmatprep.subr.mxu0 0.0
    %1472 = vmatpush1.msra.mxu0 %v1437
    %1473 = vmatprep.subr.mxu0 0.0
    %1474 = vmatpush1.msra.mxu0 %v1436
    %1475 = vmatprep.subr.mxu0 0.0
    %1476 = vmatpush1.msra.mxu0 %v1435
    %1477 = vmatprep.subr.mxu0 0.0
    %1478 = vmatpush2.msra.mxu0 0.0
    %1479 = vmatprep.subr.mxu0 0.0
    %1480 = vmatpush2.msra.mxu0 0.0
    %1481 = vmatprep.subr.mxu0 0.0
    %1482 = vmatpush2.msra.mxu0 0.0
    %1483 = vmatprep.subr.mxu0 0.0
    %1484 = vmatpush2.msra.mxu0 0.0
    %1485 = vmatprep.subr.mxu0 0.0
    %1486 = vmatpush2.msra.mxu0 0.0
    %1487 = vmatprep.subr.mxu0 0.0
    %1488 = vmatpush2.msra.mxu0 0.0
    %1489 = vmatprep.subr.mxu0 0.0
    %1490 = vmatpush2.msra.mxu0 0.0
    %1491 = vmatprep.subr.mxu0 0.0
    %1492 = vmatpush2.msra.mxu0 0.0
    %1493 = vmatprep.subr.mxu0 0.0
    %1494 = vmatpush2.msra.mxu0 0.0
    %1495 = vmatprep.subr.mxu0 0.0
    %1496 = vmatpush2.msra.mxu0 0.0
    %1497 = vmatprep.subr.mxu0 0.0
    %1498 = vmatpush2.msra.mxu0 0.0
    %1499 = vmatprep.subr.mxu0 0.0
    %1500 = vmatpush2.msra.mxu0 0.0
    %1501 = vmatprep.subr.mxu0 0.0
    %1502 = vmatpush2.msra.mxu0 0.0
    %1503 = vmatprep.subr.mxu0 0.0
    %1504 = vmatpush2.msra.mxu0 0.0
    %1505 = vmatprep.subr.mxu0 0.0
    %1506 = vmatpush2.msra.mxu0 0.0
    %1507 = vmatprep.subr.mxu0 0.0
    %1508 = vmatpush2.msra.mxu0 0.0
    %1509 = vmatprep.mubr.f32.mxu0 0.0
    %1510 = vmatmul.mubr.f32.gmra.mxu0 %v1440
    %v1511 = vpop.f32.mrf.mxu0
    %v1512 = vadd.f32 0.0, %v1511
    %v1513 = vpop.f32.mrf.mxu0
    %1514 = vmatprep.mubr.f32.mxu0 0.0
    %1515 = vmatmul.mubr.f32.gmra.mxu0 %v1443
    %v1516 = vpop.f32.mrf.mxu0
    %v1517 = vadd.f32 0.0, %v1516
    %v1518 = vpop.f32.mrf.mxu0
    %1519 = vdwg.mxu0
    %v1520 = vld [vmem:[#allocation7] sm:$0xff]
    %v1521 = vld [vmem:[#allocation7 + $0x8] sm:$0xff]
    %v1522 = vld [vmem:[#allocation7 + $0x10] sm:$0xff]
    %v1523 = vld [vmem:[#allocation7 + $0x18] sm:$0xff]
    %v1525 = vsel %vm270, %v1427, 0
    %v1528 = vsel %vm270, %v1512, 0
    %1530 = vmatprep.subr.mxu0 0.0
    %1531 = vmatpush1.xpose.msra.mxu0 0.0
    %1532 = vmatprep.subr.mxu0 0.0
    %1533 = vmatpush1.xpose.msra.mxu0 0.0
    %1534 = vmatprep.subr.mxu0 0.0
    %1535 = vmatpush1.xpose.msra.mxu0 0.0
    %1536 = vmatprep.subr.mxu0 0.0
    %1537 = vmatpush1.xpose.msra.mxu0 0.0
    %1538 = vmatprep.subr.mxu0 0.0
    %1539 = vmatpush1.xpose.msra.mxu0 0.0
    %1540 = vmatprep.subr.mxu0 0.0
    %1541 = vmatpush1.xpose.msra.mxu0 0.0
    %1542 = vmatprep.subr.mxu0 0.0
    %1543 = vmatpush1.xpose.msra.mxu0 0.0
    %1544 = vmatprep.subr.mxu0 0.0
    %1545 = vmatpush1.xpose.msra.mxu0 0.0
    %1546 = vmatprep.subr.mxu0 0.0
    %1547 = vmatpush1.xpose.msra.mxu0 0.0
    %1548 = vmatprep.subr.mxu0 0.0
    %1549 = vmatpush1.xpose.msra.mxu0 0.0
    %1550 = vmatprep.subr.mxu0 0.0
    %1551 = vmatpush1.xpose.msra.mxu0 0.0
    %1552 = vmatprep.subr.mxu0 0.0
    %1553 = vmatpush1.xpose.msra.mxu0 0.0
    %1554 = vmatprep.subr.mxu0 0.0
    %1555 = vmatpush1.xpose.msra.mxu0 0.0
    %1556 = vmatprep.subr.mxu0 0.0
    %1557 = vmatpush1.xpose.msra.mxu0 0.0
    %1558 = vmatprep.subr.mxu0 0.0
    %1559 = vmatpush1.xpose.msra.mxu0 0.0
    %1560 = vmatprep.subr.mxu0 0.0
    %1561 = vmatpush1.xpose.msra.mxu0 %v1528
    %1562 = vmatprep.subr.mxu0 0.0
    %1563 = vmatpush2.xpose.msra.mxu0 0.0
    %1564 = vmatprep.subr.mxu0 0.0
    %1565 = vmatpush2.xpose.msra.mxu0 0.0
    %1566 = vmatprep.subr.mxu0 0.0
    %1567 = vmatpush2.xpose.msra.mxu0 0.0
    %1568 = vmatprep.subr.mxu0 0.0
    %1569 = vmatpush2.xpose.msra.mxu0 0.0
    %1570 = vmatprep.subr.mxu0 0.0
    %1571 = vmatpush2.xpose.msra.mxu0 0.0
    %1572 = vmatprep.subr.mxu0 0.0
    %1573 = vmatpush2.xpose.msra.mxu0 0.0
    %1574 = vmatprep.subr.mxu0 0.0
    %1575 = vmatpush2.xpose.msra.mxu0 0.0
    %1576 = vmatprep.subr.mxu0 0.0
    %1577 = vmatpush2.xpose.msra.mxu0 0.0
    %1578 = vmatprep.subr.mxu0 0.0
    %1579 = vmatpush2.xpose.msra.mxu0 0.0
    %1580 = vmatprep.subr.mxu0 0.0
    %1581 = vmatpush2.xpose.msra.mxu0 0.0
    %1582 = vmatprep.subr.mxu0 0.0
    %1583 = vmatpush2.xpose.msra.mxu0 0.0
    %1584 = vmatprep.subr.mxu0 0.0
    %1585 = vmatpush2.xpose.msra.mxu0 0.0
    %1586 = vmatprep.subr.mxu0 0.0
    %1587 = vmatpush2.xpose.msra.mxu0 0.0
    %1588 = vmatprep.subr.mxu0 0.0
    %1589 = vmatpush2.xpose.msra.mxu0 0.0
    %1590 = vmatprep.subr.mxu0 0.0
    %1591 = vmatpush2.xpose.msra.mxu0 0.0
    %1592 = vmatprep.subr.mxu0 0.0
    %1593 = vmatpush2.xpose.msra.mxu0 0.0
    %1594 = vmatprep.mubr.f32.mxu0 0.0
    %1595 = vmatmul.mubr.f32.gmra.mxu0 %v1525
    %v1596 = vpop.f32.mrf.mxu0
    %v1597 = vadd.f32 %v175, %v1596
    %v1598 = vpop.f32.mrf.mxu0
    %1599 = vdwg.mxu0
    %v1601 = vsel %vm270, %v1432, 0
    %v1604 = vsel %vm270, %v1517, 0
    %1606 = vmatprep.subr.mxu0 0.0
    %1607 = vmatpush1.xpose.msra.mxu0 0.0
    %1608 = vmatprep.subr.mxu0 0.0
    %1609 = vmatpush1.xpose.msra.mxu0 0.0
    %1610 = vmatprep.subr.mxu0 0.0
    %1611 = vmatpush1.xpose.msra.mxu0 0.0
    %1612 = vmatprep.subr.mxu0 0.0
    %1613 = vmatpush1.xpose.msra.mxu0 0.0
    %1614 = vmatprep.subr.mxu0 0.0
    %1615 = vmatpush1.xpose.msra.mxu0 0.0
    %1616 = vmatprep.subr.mxu0 0.0
    %1617 = vmatpush1.xpose.msra.mxu0 0.0
    %1618 = vmatprep.subr.mxu0 0.0
    %1619 = vmatpush1.xpose.msra.mxu0 0.0
    %1620 = vmatprep.subr.mxu0 0.0
    %1621 = vmatpush1.xpose.msra.mxu0 0.0
    %1622 = vmatprep.subr.mxu0 0.0
    %1623 = vmatpush1.xpose.msra.mxu0 0.0
    %1624 = vmatprep.subr.mxu0 0.0
    %1625 = vmatpush1.xpose.msra.mxu0 0.0
    %1626 = vmatprep.subr.mxu0 0.0
    %1627 = vmatpush1.xpose.msra.mxu0 0.0
    %1628 = vmatprep.subr.mxu0 0.0
    %1629 = vmatpush1.xpose.msra.mxu0 0.0
    %1630 = vmatprep.subr.mxu0 0.0
    %1631 = vmatpush1.xpose.msra.mxu0 0.0
    %1632 = vmatprep.subr.mxu0 0.0
    %1633 = vmatpush1.xpose.msra.mxu0 0.0
    %1634 = vmatprep.subr.mxu0 0.0
    %1635 = vmatpush1.xpose.msra.mxu0 0.0
    %1636 = vmatprep.subr.mxu0 0.0
    %1637 = vmatpush1.xpose.msra.mxu0 %v1604
    %1638 = vmatprep.subr.mxu0 0.0
    %1639 = vmatpush2.xpose.msra.mxu0 0.0
    %1640 = vmatprep.subr.mxu0 0.0
    %1641 = vmatpush2.xpose.msra.mxu0 0.0
    %1642 = vmatprep.subr.mxu0 0.0
    %1643 = vmatpush2.xpose.msra.mxu0 0.0
    %1644 = vmatprep.subr.mxu0 0.0
    %1645 = vmatpush2.xpose.msra.mxu0 0.0
    %1646 = vmatprep.subr.mxu0 0.0
    %1647 = vmatpush2.xpose.msra.mxu0 0.0
    %1648 = vmatprep.subr.mxu0 0.0
    %1649 = vmatpush2.xpose.msra.mxu0 0.0
    %1650 = vmatprep.subr.mxu0 0.0
    %1651 = vmatpush2.xpose.msra.mxu0 0.0
    %1652 = vmatprep.subr.mxu0 0.0
    %1653 = vmatpush2.xpose.msra.mxu0 0.0
    %1654 = vmatprep.subr.mxu0 0.0
    %1655 = vmatpush2.xpose.msra.mxu0 0.0
    %1656 = vmatprep.subr.mxu0 0.0
    %1657 = vmatpush2.xpose.msra.mxu0 0.0
    %1658 = vmatprep.subr.mxu0 0.0
    %1659 = vmatpush2.xpose.msra.mxu0 0.0
    %1660 = vmatprep.subr.mxu0 0.0
    %1661 = vmatpush2.xpose.msra.mxu0 0.0
    %1662 = vmatprep.subr.mxu0 0.0
    %1663 = vmatpush2.xpose.msra.mxu0 0.0
    %1664 = vmatprep.subr.mxu0 0.0
    %1665 = vmatpush2.xpose.msra.mxu0 0.0
    %1666 = vmatprep.subr.mxu0 0.0
    %1667 = vmatpush2.xpose.msra.mxu0 0.0
    %1668 = vmatprep.subr.mxu0 0.0
    %1669 = vmatpush2.xpose.msra.mxu0 0.0
    %1670 = vmatprep.mubr.f32.mxu0 0.0
    %1671 = vmatmul.mubr.f32.gmra.mxu0 %v1601
    %v1672 = vpop.f32.mrf.mxu0
    %v1673 = vadd.f32 %v176, %v1672
    %v1674 = vpop.f32.mrf.mxu0
    %1675 = vdwg.mxu0
    %v1676 = vsel %vm422, %v1597, -inf
    %1677 = vmax.xlane.f32.xlu0 %v1676
    %v1678 = vpop.xlane.xlu0 %1677
    %v1679 = vsel %vm422, %v1673, -inf
    %1680 = vmax.xlane.f32.xlu0 %v1679
    %v1681 = vpop.xlane.xlu0 %1680
    %v1682 = vsub.f32 %v1597, %v1678
    %v1683 = vsub.f32 %v1673, %v1681
    %v1684 = vmul.f32 %v1682, 1.442695
    %v1685 = vpow.pop %v1684
    %v1686 = vmul.f32 %v1683, 1.442695
    %v1687 = vpow.pop %v1686
    %v1688 = vsel %vm422, %v1685, 0.0
    %1689 = vadd.xlane.f32.xlu0 %v1688
    %v1690 = vpop.xlane.xlu0 %1689
    %v1691 = vsel %vm422, %v1687, 0.0
    %1692 = vadd.xlane.f32.xlu0 %v1691
    %v1693 = vpop.xlane.xlu0 %1692
    %v1694 = vrcp.pop %v1690
    %v1695 = vmul.f32 %v1685, %v1694
    %v1696 = vrcp.pop %v1693
    %v1697 = vmul.f32 %v1687, %v1696
    %v1698 = vcombine.high %v1695, 0.0
    %v1700 = vunpack.c.l.s4 1983009808
    %v1701 = vunpack.c.0.s8 %v1700
    %v1702 = vlaneseq
    %v1703 = vshrl.u32 %v1702, 7
    %v1704 = vsub.s32 %v1701, %v1703
    %v1705 = vrot.slane %v1695, %v1704
    %v1707 = vunpack.c.l.s4 1983009808
    %v1708 = vunpack.c.0.s8 %v1707
    %v1709 = vlaneseq
    %v1710 = vshrl.u32 %v1709, 7
    %v1711 = vsub.s32 %v1708, %v1710
    %v1712 = vrot.slane %v1698, %v1711
    %v1713 = vcombine.high %v1697, 0.0
    %v1715 = vunpack.c.l.s4 1983009808
    %v1716 = vunpack.c.0.s8 %v1715
    %v1717 = vlaneseq
    %v1718 = vshrl.u32 %v1717, 7
    %v1719 = vsub.s32 %v1716, %v1718
    %v1720 = vrot.slane %v1697, %v1719
    %v1722 = vunpack.c.l.s4 1983009808
    %v1723 = vunpack.c.0.s8 %v1722
    %v1724 = vlaneseq
    %v1725 = vshrl.u32 %v1724, 7
    %v1726 = vsub.s32 %v1723, %v1725
    %v1727 = vrot.slane %v1713, %v1726
    %v1728 = vcombine.low %v1705, %v1720
    %v1729 = vcombine.high %v1705, %v1720
    %v1731 = vunpack.c.l.s4 1934713408
    %v1732 = vunpack.c.0.s8 %v1731
    %v1733 = vlaneseq
    %v1734 = vshrl.u32 %v1733, 7
    %v1735 = vsub.s32 %v1732, %v1734
    %v1736 = vrot.slane %v1728, %v1735
    %v1738 = vunpack.c.l.s4 1934713408
    %v1739 = vunpack.c.0.s8 %v1738
    %v1740 = vlaneseq
    %v1741 = vshrl.u32 %v1740, 7
    %v1742 = vsub.s32 %v1739, %v1741
    %v1743 = vrot.slane %v1729, %v1742
    %v1744 = vcombine.low %v1712, %v1727
    %v1745 = vcombine.high %v1712, %v1727
    %v1747 = vunpack.c.l.s4 1934713408
    %v1748 = vunpack.c.0.s8 %v1747
    %v1749 = vlaneseq
    %v1750 = vshrl.u32 %v1749, 7
    %v1751 = vsub.s32 %v1748, %v1750
    %v1752 = vrot.slane %v1744, %v1751
    %v1754 = vunpack.c.l.s4 1934713408
    %v1755 = vunpack.c.0.s8 %v1754
    %v1756 = vlaneseq
    %v1757 = vshrl.u32 %v1756, 7
    %v1758 = vsub.s32 %v1755, %v1757
    %v1759 = vrot.slane %v1745, %v1758
    %v1760 = vcombine.high %v1736, 0.0
    %v1761 = vcombine.high %v1743, 0.0
    %v1762 = vcombine.high %v1752, 0.0
    %v1763 = vcombine.high %v1759, 0.0
    %1765 = vrot.lane.b32.xlu0 %v1760, 8
    %v1766 = vpop.permute.xlu0 %1765
    %1769 = vrot.lane.b32.xlu0 %v1743, 16
    %v1770 = vpop.permute.xlu0 %1769
    %1773 = vrot.lane.b32.xlu0 %v1761, 24
    %v1774 = vpop.permute.xlu0 %1773
    %1777 = vrot.lane.b32.xlu0 %v1752, 32
    %v1778 = vpop.permute.xlu0 %1777
    %1781 = vrot.lane.b32.xlu0 %v1762, 40
    %v1782 = vpop.permute.xlu0 %1781
    %1785 = vrot.lane.b32.xlu0 %v1759, 48
    %v1786 = vpop.permute.xlu0 %1785
    %1789 = vrot.lane.b32.xlu0 %v1763, 56
    %v1790 = vpop.permute.xlu0 %1789
    %v1792 = vsel %vm422, %v1736, %v1766
    %v1793 = vsel %vm270, %v1792, %v1770
    %v1794 = vsel %vm541, %v1793, %v1774
    %v1795 = vsel %vm181, %v1794, %v1778
    %v1796 = vsel %vm544, %v1795, %v1782
    %v1797 = vsel %vm546, %v1796, %v1786
    %v1798 = vsel %vm548, %v1797, %v1790
    %1799 = vst.msk [vmem:[%s19] sm:$0x3] %vm550, %v1798
    %1800 = vrot.lane.b32.xlu0 %v1512, 96
    %v1801 = vpop.permute.xlu0 %1800
    %v1804 = vsel %vm422, %v1695, 0
    %1806 = vmatprep.subr.mxu0 0.0
    %1807 = vmatpush1.msra.mxu0 0.0
    %1808 = vmatprep.subr.mxu0 0.0
    %1809 = vmatpush1.msra.mxu0 0.0
    %1810 = vmatprep.subr.mxu0 0.0
    %1811 = vmatpush1.msra.mxu0 0.0
    %1812 = vmatprep.subr.mxu0 0.0
    %1813 = vmatpush1.msra.mxu0 0.0
    %1814 = vmatprep.subr.mxu0 0.0
    %1815 = vmatpush1.msra.mxu0 0.0
    %1816 = vmatprep.subr.mxu0 0.0
    %1817 = vmatpush1.msra.mxu0 0.0
    %1818 = vmatprep.subr.mxu0 0.0
    %1819 = vmatpush1.msra.mxu0 0.0
    %1820 = vmatprep.subr.mxu0 0.0
    %1821 = vmatpush1.msra.mxu0 0.0
    %1822 = vmatprep.subr.mxu0 0.0
    %1823 = vmatpush1.msra.mxu0 0.0
    %1824 = vmatprep.subr.mxu0 0.0
    %1825 = vmatpush1.msra.mxu0 0.0
    %1826 = vmatprep.subr.mxu0 0.0
    %1827 = vmatpush1.msra.mxu0 0.0
    %1828 = vmatprep.subr.mxu0 0.0
    %1829 = vmatpush1.msra.mxu0 0.0
    %1830 = vmatprep.subr.mxu0 0.0
    %1831 = vmatpush1.msra.mxu0 0.0
    %1832 = vmatprep.subr.mxu0 0.0
    %1833 = vmatpush1.msra.mxu0 0.0
    %1834 = vmatprep.subr.mxu0 0.0
    %1835 = vmatpush1.msra.mxu0 0.0
    %1836 = vmatprep.subr.mxu0 0.0
    %1837 = vmatpush1.msra.mxu0 %v1801
    %1838 = vmatprep.subr.mxu0 0.0
    %1839 = vmatpush2.msra.mxu0 0.0
    %1840 = vmatprep.subr.mxu0 0.0
    %1841 = vmatpush2.msra.mxu0 0.0
    %1842 = vmatprep.subr.mxu0 0.0
    %1843 = vmatpush2.msra.mxu0 0.0
    %1844 = vmatprep.subr.mxu0 0.0
    %1845 = vmatpush2.msra.mxu0 0.0
    %1846 = vmatprep.subr.mxu0 0.0
    %1847 = vmatpush2.msra.mxu0 0.0
    %1848 = vmatprep.subr.mxu0 0.0
    %1849 = vmatpush2.msra.mxu0 0.0
    %1850 = vmatprep.subr.mxu0 0.0
    %1851 = vmatpush2.msra.mxu0 0.0
    %1852 = vmatprep.subr.mxu0 0.0
    %1853 = vmatpush2.msra.mxu0 0.0
    %1854 = vmatprep.subr.mxu0 0.0
    %1855 = vmatpush2.msra.mxu0 0.0
    %1856 = vmatprep.subr.mxu0 0.0
    %1857 = vmatpush2.msra.mxu0 0.0
    %1858 = vmatprep.subr.mxu0 0.0
    %1859 = vmatpush2.msra.mxu0 0.0
    %1860 = vmatprep.subr.mxu0 0.0
    %1861 = vmatpush2.msra.mxu0 0.0
    %1862 = vmatprep.subr.mxu0 0.0
    %1863 = vmatpush2.msra.mxu0 0.0
    %1864 = vmatprep.subr.mxu0 0.0
    %1865 = vmatpush2.msra.mxu0 0.0
    %1866 = vmatprep.subr.mxu0 0.0
    %1867 = vmatpush2.msra.mxu0 0.0
    %1868 = vmatprep.subr.mxu0 0.0
    %1869 = vmatpush2.msra.mxu0 0.0
    %1870 = vmatprep.mubr.f32.mxu0 0.0
    %1871 = vmatmul.mubr.f32.gmra.mxu0 %v1804
    %v1872 = vpop.f32.mrf.mxu0
    %v1873 = vadd.f32 0.0, %v1872
    %v1874 = vpop.f32.mrf.mxu0
    %1875 = vdwg.mxu0
    %1876 = vrot.lane.b32.xlu0 %v1517, 96
    %v1877 = vpop.permute.xlu0 %1876
    %v1880 = vsel %vm422, %v1697, 0
    %1882 = vmatprep.subr.mxu0 0.0
    %1883 = vmatpush1.msra.mxu0 0.0
    %1884 = vmatprep.subr.mxu0 0.0
    %1885 = vmatpush1.msra.mxu0 0.0
    %1886 = vmatprep.subr.mxu0 0.0
    %1887 = vmatpush1.msra.mxu0 0.0
    %1888 = vmatprep.subr.mxu0 0.0
    %1889 = vmatpush1.msra.mxu0 0.0
    %1890 = vmatprep.subr.mxu0 0.0
    %1891 = vmatpush1.msra.mxu0 0.0
    %1892 = vmatprep.subr.mxu0 0.0
    %1893 = vmatpush1.msra.mxu0 0.0
    %1894 = vmatprep.subr.mxu0 0.0
    %1895 = vmatpush1.msra.mxu0 0.0
    %1896 = vmatprep.subr.mxu0 0.0
    %1897 = vmatpush1.msra.mxu0 0.0
    %1898 = vmatprep.subr.mxu0 0.0
    %1899 = vmatpush1.msra.mxu0 0.0
    %1900 = vmatprep.subr.mxu0 0.0
    %1901 = vmatpush1.msra.mxu0 0.0
    %1902 = vmatprep.subr.mxu0 0.0
    %1903 = vmatpush1.msra.mxu0 0.0
    %1904 = vmatprep.subr.mxu0 0.0
    %1905 = vmatpush1.msra.mxu0 0.0
    %1906 = vmatprep.subr.mxu0 0.0
    %1907 = vmatpush1.msra.mxu0 0.0
    %1908 = vmatprep.subr.mxu0 0.0
    %1909 = vmatpush1.msra.mxu0 0.0
    %1910 = vmatprep.subr.mxu0 0.0
    %1911 = vmatpush1.msra.mxu0 0.0
    %1912 = vmatprep.subr.mxu0 0.0
    %1913 = vmatpush1.msra.mxu0 %v1877
    %1914 = vmatprep.subr.mxu0 0.0
    %1915 = vmatpush2.msra.mxu0 0.0
    %1916 = vmatprep.subr.mxu0 0.0
    %1917 = vmatpush2.msra.mxu0 0.0
    %1918 = vmatprep.subr.mxu0 0.0
    %1919 = vmatpush2.msra.mxu0 0.0
    %1920 = vmatprep.subr.mxu0 0.0
    %1921 = vmatpush2.msra.mxu0 0.0
    %1922 = vmatprep.subr.mxu0 0.0
    %1923 = vmatpush2.msra.mxu0 0.0
    %1924 = vmatprep.subr.mxu0 0.0
    %1925 = vmatpush2.msra.mxu0 0.0
    %1926 = vmatprep.subr.mxu0 0.0
    %1927 = vmatpush2.msra.mxu0 0.0
    %1928 = vmatprep.subr.mxu0 0.0
    %1929 = vmatpush2.msra.mxu0 0.0
    %1930 = vmatprep.subr.mxu0 0.0
    %1931 = vmatpush2.msra.mxu0 0.0
    %1932 = vmatprep.subr.mxu0 0.0
    %1933 = vmatpush2.msra.mxu0 0.0
    %1934 = vmatprep.subr.mxu0 0.0
    %1935 = vmatpush2.msra.mxu0 0.0
    %1936 = vmatprep.subr.mxu0 0.0
    %1937 = vmatpush2.msra.mxu0 0.0
    %1938 = vmatprep.subr.mxu0 0.0
    %1939 = vmatpush2.msra.mxu0 0.0
    %1940 = vmatprep.subr.mxu0 0.0
    %1941 = vmatpush2.msra.mxu0 0.0
    %1942 = vmatprep.subr.mxu0 0.0
    %1943 = vmatpush2.msra.mxu0 0.0
    %1944 = vmatprep.subr.mxu0 0.0
    %1945 = vmatpush2.msra.mxu0 0.0
    %1946 = vmatprep.mubr.f32.mxu0 0.0
    %1947 = vmatmul.mubr.f32.gmra.mxu0 %v1880
    %v1948 = vpop.f32.mrf.mxu0
    %v1949 = vadd.f32 0.0, %v1948
    %v1950 = vpop.f32.mrf.mxu0
    %1951 = vdwg.mxu0
    %1952 = vrot.lane.b32.xlu0 %v1427, 112
    %v1953 = vpop.permute.xlu0 %1952
    %1954 = vrot.lane.b32.xlu0 %v1512, 112
    %v1955 = vpop.permute.xlu0 %1954
    %v1956 = vsel %vm270, %v1953, 0
    %v1958 = vsel %vm270, %v1955, 0
    %1960 = vmatprep.subr.mxu0 0.0
    %1961 = vmatpush1.xpose.msra.mxu0 0.0
    %1962 = vmatprep.subr.mxu0 0.0
    %1963 = vmatpush1.xpose.msra.mxu0 0.0
    %1964 = vmatprep.subr.mxu0 0.0
    %1965 = vmatpush1.xpose.msra.mxu0 0.0
    %1966 = vmatprep.subr.mxu0 0.0
    %1967 = vmatpush1.xpose.msra.mxu0 0.0
    %1968 = vmatprep.subr.mxu0 0.0
    %1969 = vmatpush1.xpose.msra.mxu0 0.0
    %1970 = vmatprep.subr.mxu0 0.0
    %1971 = vmatpush1.xpose.msra.mxu0 0.0
    %1972 = vmatprep.subr.mxu0 0.0
    %1973 = vmatpush1.xpose.msra.mxu0 0.0
    %1974 = vmatprep.subr.mxu0 0.0
    %1975 = vmatpush1.xpose.msra.mxu0 0.0
    %1976 = vmatprep.subr.mxu0 0.0
    %1977 = vmatpush1.xpose.msra.mxu0 0.0
    %1978 = vmatprep.subr.mxu0 0.0
    %1979 = vmatpush1.xpose.msra.mxu0 0.0
    %1980 = vmatprep.subr.mxu0 0.0
    %1981 = vmatpush1.xpose.msra.mxu0 0.0
    %1982 = vmatprep.subr.mxu0 0.0
    %1983 = vmatpush1.xpose.msra.mxu0 0.0
    %1984 = vmatprep.subr.mxu0 0.0
    %1985 = vmatpush1.xpose.msra.mxu0 0.0
    %1986 = vmatprep.subr.mxu0 0.0
    %1987 = vmatpush1.xpose.msra.mxu0 0.0
    %1988 = vmatprep.subr.mxu0 0.0
    %1989 = vmatpush1.xpose.msra.mxu0 0.0
    %1990 = vmatprep.subr.mxu0 0.0
    %1991 = vmatpush1.xpose.msra.mxu0 %v1958
    %1992 = vmatprep.subr.mxu0 0.0
    %1993 = vmatpush2.xpose.msra.mxu0 0.0
    %1994 = vmatprep.subr.mxu0 0.0
    %1995 = vmatpush2.xpose.msra.mxu0 0.0
    %1996 = vmatprep.subr.mxu0 0.0
    %1997 = vmatpush2.xpose.msra.mxu0 0.0
    %1998 = vmatprep.subr.mxu0 0.0
    %1999 = vmatpush2.xpose.msra.mxu0 0.0
    %2000 = vmatprep.subr.mxu0 0.0
    %2001 = vmatpush2.xpose.msra.mxu0 0.0
    %2002 = vmatprep.subr.mxu0 0.0
    %2003 = vmatpush2.xpose.msra.mxu0 0.0
    %2004 = vmatprep.subr.mxu0 0.0
    %2005 = vmatpush2.xpose.msra.mxu0 0.0
    %2006 = vmatprep.subr.mxu0 0.0
    %2007 = vmatpush2.xpose.msra.mxu0 0.0
    %2008 = vmatprep.subr.mxu0 0.0
    %2009 = vmatpush2.xpose.msra.mxu0 0.0
    %2010 = vmatprep.subr.mxu0 0.0
    %2011 = vmatpush2.xpose.msra.mxu0 0.0
    %2012 = vmatprep.subr.mxu0 0.0
    %2013 = vmatpush2.xpose.msra.mxu0 0.0
    %2014 = vmatprep.subr.mxu0 0.0
    %2015 = vmatpush2.xpose.msra.mxu0 0.0
    %2016 = vmatprep.subr.mxu0 0.0
    %2017 = vmatpush2.xpose.msra.mxu0 0.0
    %2018 = vmatprep.subr.mxu0 0.0
    %2019 = vmatpush2.xpose.msra.mxu0 0.0
    %2020 = vmatprep.subr.mxu0 0.0
    %2021 = vmatpush2.xpose.msra.mxu0 0.0
    %2022 = vmatprep.subr.mxu0 0.0
    %2023 = vmatpush2.xpose.msra.mxu0 0.0
    %2024 = vmatprep.mubr.f32.mxu0 0.0
    %2025 = vmatmul.mubr.f32.gmra.mxu0 %v1956
    %v2026 = vpop.f32.mrf.mxu0
    %v2027 = vadd.f32 %v175, %v2026
    %v2028 = vpop.f32.mrf.mxu0
    %2029 = vdwg.mxu0
    %2030 = vrot.lane.b32.xlu0 %v1432, 112
    %v2031 = vpop.permute.xlu0 %2030
    %2032 = vrot.lane.b32.xlu0 %v1517, 112
    %v2033 = vpop.permute.xlu0 %2032
    %v2034 = vsel %vm270, %v2031, 0
    %v2036 = vsel %vm270, %v2033, 0
    %2038 = vmatprep.subr.mxu0 0.0
    %2039 = vmatpush1.xpose.msra.mxu0 0.0
    %2040 = vmatprep.subr.mxu0 0.0
    %2041 = vmatpush1.xpose.msra.mxu0 0.0
    %2042 = vmatprep.subr.mxu0 0.0
    %2043 = vmatpush1.xpose.msra.mxu0 0.0
    %2044 = vmatprep.subr.mxu0 0.0
    %2045 = vmatpush1.xpose.msra.mxu0 0.0
    %2046 = vmatprep.subr.mxu0 0.0
    %2047 = vmatpush1.xpose.msra.mxu0 0.0
    %2048 = vmatprep.subr.mxu0 0.0
    %2049 = vmatpush1.xpose.msra.mxu0 0.0
    %2050 = vmatprep.subr.mxu0 0.0
    %2051 = vmatpush1.xpose.msra.mxu0 0.0
    %2052 = vmatprep.subr.mxu0 0.0
    %2053 = vmatpush1.xpose.msra.mxu0 0.0
    %2054 = vmatprep.subr.mxu0 0.0
    %2055 = vmatpush1.xpose.msra.mxu0 0.0
    %2056 = vmatprep.subr.mxu0 0.0
    %2057 = vmatpush1.xpose.msra.mxu0 0.0
    %2058 = vmatprep.subr.mxu0 0.0
    %2059 = vmatpush1.xpose.msra.mxu0 0.0
    %2060 = vmatprep.subr.mxu0 0.0
    %2061 = vmatpush1.xpose.msra.mxu0 0.0
    %2062 = vmatprep.subr.mxu0 0.0
    %2063 = vmatpush1.xpose.msra.mxu0 0.0
    %2064 = vmatprep.subr.mxu0 0.0
    %2065 = vmatpush1.xpose.msra.mxu0 0.0
    %2066 = vmatprep.subr.mxu0 0.0
    %2067 = vmatpush1.xpose.msra.mxu0 0.0
    %2068 = vmatprep.subr.mxu0 0.0
    %2069 = vmatpush1.xpose.msra.mxu0 %v2036
    %2070 = vmatprep.subr.mxu0 0.0
    %2071 = vmatpush2.xpose.msra.mxu0 0.0
    %2072 = vmatprep.subr.mxu0 0.0
    %2073 = vmatpush2.xpose.msra.mxu0 0.0
    %2074 = vmatprep.subr.mxu0 0.0
    %2075 = vmatpush2.xpose.msra.mxu0 0.0
    %2076 = vmatprep.subr.mxu0 0.0
    %2077 = vmatpush2.xpose.msra.mxu0 0.0
    %2078 = vmatprep.subr.mxu0 0.0
    %2079 = vmatpush2.xpose.msra.mxu0 0.0
    %2080 = vmatprep.subr.mxu0 0.0
    %2081 = vmatpush2.xpose.msra.mxu0 0.0
    %2082 = vmatprep.subr.mxu0 0.0
    %2083 = vmatpush2.xpose.msra.mxu0 0.0
    %2084 = vmatprep.subr.mxu0 0.0
    %2085 = vmatpush2.xpose.msra.mxu0 0.0
    %2086 = vmatprep.subr.mxu0 0.0
    %2087 = vmatpush2.xpose.msra.mxu0 0.0
    %2088 = vmatprep.subr.mxu0 0.0
    %2089 = vmatpush2.xpose.msra.mxu0 0.0
    %2090 = vmatprep.subr.mxu0 0.0
    %2091 = vmatpush2.xpose.msra.mxu0 0.0
    %2092 = vmatprep.subr.mxu0 0.0
    %2093 = vmatpush2.xpose.msra.mxu0 0.0
    %2094 = vmatprep.subr.mxu0 0.0
    %2095 = vmatpush2.xpose.msra.mxu0 0.0
    %2096 = vmatprep.subr.mxu0 0.0
    %2097 = vmatpush2.xpose.msra.mxu0 0.0
    %2098 = vmatprep.subr.mxu0 0.0
    %2099 = vmatpush2.xpose.msra.mxu0 0.0
    %2100 = vmatprep.subr.mxu0 0.0
    %2101 = vmatpush2.xpose.msra.mxu0 0.0
    %2102 = vmatprep.mubr.f32.mxu0 0.0
    %2103 = vmatmul.mubr.f32.gmra.mxu0 %v2034
    %v2104 = vpop.f32.mrf.mxu0
    %v2105 = vadd.f32 %v176, %v2104
    %v2106 = vpop.f32.mrf.mxu0
    %2107 = vdwg.mxu0
    %v2108 = vsel %vm422, %v2027, -inf
    %2109 = vmax.xlane.f32.xlu0 %v2108
    %v2110 = vpop.xlane.xlu0 %2109
    %v2111 = vsel %vm422, %v2105, -inf
    %2112 = vmax.xlane.f32.xlu0 %v2111
    %v2113 = vpop.xlane.xlu0 %2112
    %v2114 = vsub.f32 %v2027, %v2110
    %v2115 = vsub.f32 %v2105, %v2113
    %v2116 = vmul.f32 %v2114, 1.442695
    %v2117 = vpow.pop %v2116
    %v2118 = vmul.f32 %v2115, 1.442695
    %v2119 = vpow.pop %v2118
    %v2120 = vsel %vm422, %v2117, 0.0
    %2121 = vadd.xlane.f32.xlu0 %v2120
    %v2122 = vpop.xlane.xlu0 %2121
    %v2123 = vsel %vm422, %v2119, 0.0
    %2124 = vadd.xlane.f32.xlu0 %v2123
    %v2125 = vpop.xlane.xlu0 %2124
    %v2126 = vrcp.pop %v2122
    %v2127 = vmul.f32 %v2117, %v2126
    %v2128 = vrcp.pop %v2125
    %v2129 = vmul.f32 %v2119, %v2128
    %v2130 = vcombine.high %v2127, 0.0
    %v2132 = vunpack.c.l.s4 1983009808
    %v2133 = vunpack.c.0.s8 %v2132
    %v2134 = vlaneseq
    %v2135 = vshrl.u32 %v2134, 7
    %v2136 = vsub.s32 %v2133, %v2135
    %v2137 = vrot.slane %v2127, %v2136
    %v2139 = vunpack.c.l.s4 1983009808
    %v2140 = vunpack.c.0.s8 %v2139
    %v2141 = vlaneseq
    %v2142 = vshrl.u32 %v2141, 7
    %v2143 = vsub.s32 %v2140, %v2142
    %v2144 = vrot.slane %v2130, %v2143
    %v2145 = vcombine.high %v2129, 0.0
    %v2147 = vunpack.c.l.s4 1983009808
    %v2148 = vunpack.c.0.s8 %v2147
    %v2149 = vlaneseq
    %v2150 = vshrl.u32 %v2149, 7
    %v2151 = vsub.s32 %v2148, %v2150
    %v2152 = vrot.slane %v2129, %v2151
    %v2154 = vunpack.c.l.s4 1983009808
    %v2155 = vunpack.c.0.s8 %v2154
    %v2156 = vlaneseq
    %v2157 = vshrl.u32 %v2156, 7
    %v2158 = vsub.s32 %v2155, %v2157
    %v2159 = vrot.slane %v2145, %v2158
    %v2160 = vcombine.low %v2137, %v2152
    %v2161 = vcombine.high %v2137, %v2152
    %v2163 = vunpack.c.l.s4 1934713408
    %v2164 = vunpack.c.0.s8 %v2163
    %v2165 = vlaneseq
    %v2166 = vshrl.u32 %v2165, 7
    %v2167 = vsub.s32 %v2164, %v2166
    %v2168 = vrot.slane %v2160, %v2167
    %v2170 = vunpack.c.l.s4 1934713408
    %v2171 = vunpack.c.0.s8 %v2170
    %v2172 = vlaneseq
    %v2173 = vshrl.u32 %v2172, 7
    %v2174 = vsub.s32 %v2171, %v2173
    %v2175 = vrot.slane %v2161, %v2174
    %v2176 = vcombine.low %v2144, %v2159
    %v2177 = vcombine.high %v2144, %v2159
    %v2179 = vunpack.c.l.s4 1934713408
    %v2180 = vunpack.c.0.s8 %v2179
    %v2181 = vlaneseq
    %v2182 = vshrl.u32 %v2181, 7
    %v2183 = vsub.s32 %v2180, %v2182
    %v2184 = vrot.slane %v2176, %v2183
    %v2186 = vunpack.c.l.s4 1934713408
    %v2187 = vunpack.c.0.s8 %v2186
    %v2188 = vlaneseq
    %v2189 = vshrl.u32 %v2188, 7
    %v2190 = vsub.s32 %v2187, %v2189
    %v2191 = vrot.slane %v2177, %v2190
    %v2192 = vcombine.high %v2168, 0.0
    %v2193 = vcombine.high %v2175, 0.0
    %v2194 = vcombine.high %v2184, 0.0
    %v2195 = vcombine.high %v2191, 0.0
    %2197 = vrot.lane.b32.xlu0 %v2192, 8
    %v2198 = vpop.permute.xlu0 %2197
    %2201 = vrot.lane.b32.xlu0 %v2175, 16
    %v2202 = vpop.permute.xlu0 %2201
    %2205 = vrot.lane.b32.xlu0 %v2193, 24
    %v2206 = vpop.permute.xlu0 %2205
    %2209 = vrot.lane.b32.xlu0 %v2184, 32
    %v2210 = vpop.permute.xlu0 %2209
    %2213 = vrot.lane.b32.xlu0 %v2194, 40
    %v2214 = vpop.permute.xlu0 %2213
    %2217 = vrot.lane.b32.xlu0 %v2191, 48
    %v2218 = vpop.permute.xlu0 %2217
    %2221 = vrot.lane.b32.xlu0 %v2195, 56
    %v2222 = vpop.permute.xlu0 %2221
    %v2224 = vsel %vm422, %v2168, %v2198
    %v2225 = vsel %vm270, %v2224, %v2202
    %v2226 = vsel %vm541, %v2225, %v2206
    %v2227 = vsel %vm181, %v2226, %v2210
    %v2228 = vsel %vm544, %v2227, %v2214
    %v2229 = vsel %vm546, %v2228, %v2218
    %v2230 = vsel %vm548, %v2229, %v2222
    %2232 = vrot.lane.b32.xlu0 %v2230, 64
    %v2233 = vpop.permute.xlu0 %2232
    %2235 = vst.msk [vmem:[%s19] sm:$0x3] %vm987, %v2233
    %2236 = vrot.lane.b32.xlu0 %v1512, 80
    %v2237 = vpop.permute.xlu0 %2236
    %v2240 = vsel %vm422, %v2127, 0
    %2242 = vmatprep.subr.mxu0 0.0
    %2243 = vmatpush1.msra.mxu0 0.0
    %2244 = vmatprep.subr.mxu0 0.0
    %2245 = vmatpush1.msra.mxu0 0.0
    %2246 = vmatprep.subr.mxu0 0.0
    %2247 = vmatpush1.msra.mxu0 0.0
    %2248 = vmatprep.subr.mxu0 0.0
    %2249 = vmatpush1.msra.mxu0 0.0
    %2250 = vmatprep.subr.mxu0 0.0
    %2251 = vmatpush1.msra.mxu0 0.0
    %2252 = vmatprep.subr.mxu0 0.0
    %2253 = vmatpush1.msra.mxu0 0.0
    %2254 = vmatprep.subr.mxu0 0.0
    %2255 = vmatpush1.msra.mxu0 0.0
    %2256 = vmatprep.subr.mxu0 0.0
    %2257 = vmatpush1.msra.mxu0 0.0
    %2258 = vmatprep.subr.mxu0 0.0
    %2259 = vmatpush1.msra.mxu0 0.0
    %2260 = vmatprep.subr.mxu0 0.0
    %2261 = vmatpush1.msra.mxu0 0.0
    %2262 = vmatprep.subr.mxu0 0.0
    %2263 = vmatpush1.msra.mxu0 0.0
    %2264 = vmatprep.subr.mxu0 0.0
    %2265 = vmatpush1.msra.mxu0 0.0
    %2266 = vmatprep.subr.mxu0 0.0
    %2267 = vmatpush1.msra.mxu0 0.0
    %2268 = vmatprep.subr.mxu0 0.0
    %2269 = vmatpush1.msra.mxu0 0.0
    %2270 = vmatprep.subr.mxu0 0.0
    %2271 = vmatpush1.msra.mxu0 0.0
    %2272 = vmatprep.subr.mxu0 0.0
    %2273 = vmatpush1.msra.mxu0 %v2237
    %2274 = vmatprep.subr.mxu0 0.0
    %2275 = vmatpush2.msra.mxu0 0.0
    %2276 = vmatprep.subr.mxu0 0.0
    %2277 = vmatpush2.msra.mxu0 0.0
    %2278 = vmatprep.subr.mxu0 0.0
    %2279 = vmatpush2.msra.mxu0 0.0
    %2280 = vmatprep.subr.mxu0 0.0
    %2281 = vmatpush2.msra.mxu0 0.0
    %2282 = vmatprep.subr.mxu0 0.0
    %2283 = vmatpush2.msra.mxu0 0.0
    %2284 = vmatprep.subr.mxu0 0.0
    %2285 = vmatpush2.msra.mxu0 0.0
    %2286 = vmatprep.subr.mxu0 0.0
    %2287 = vmatpush2.msra.mxu0 0.0
    %2288 = vmatprep.subr.mxu0 0.0
    %2289 = vmatpush2.msra.mxu0 0.0
    %2290 = vmatprep.subr.mxu0 0.0
    %2291 = vmatpush2.msra.mxu0 0.0
    %2292 = vmatprep.subr.mxu0 0.0
    %2293 = vmatpush2.msra.mxu0 0.0
    %2294 = vmatprep.subr.mxu0 0.0
    %2295 = vmatpush2.msra.mxu0 0.0
    %2296 = vmatprep.subr.mxu0 0.0
    %2297 = vmatpush2.msra.mxu0 0.0
    %2298 = vmatprep.subr.mxu0 0.0
    %2299 = vmatpush2.msra.mxu0 0.0
    %2300 = vmatprep.subr.mxu0 0.0
    %2301 = vmatpush2.msra.mxu0 0.0
    %2302 = vmatprep.subr.mxu0 0.0
    %2303 = vmatpush2.msra.mxu0 0.0
    %2304 = vmatprep.subr.mxu0 0.0
    %2305 = vmatpush2.msra.mxu0 0.0
    %2306 = vmatprep.mubr.f32.mxu0 0.0
    %2307 = vmatmul.mubr.f32.gmra.mxu0 %v2240
    %v2308 = vpop.f32.mrf.mxu0
    %v2309 = vadd.f32 0.0, %v2308
    %v2310 = vpop.f32.mrf.mxu0
    %2311 = vdwg.mxu0
    %2312 = vrot.lane.b32.xlu0 %v1517, 80
    %v2313 = vpop.permute.xlu0 %2312
    %v2316 = vsel %vm422, %v2129, 0
    %2318 = vmatprep.subr.mxu0 0.0
    %2319 = vmatpush1.msra.mxu0 0.0
    %2320 = vmatprep.subr.mxu0 0.0
    %2321 = vmatpush1.msra.mxu0 0.0
    %2322 = vmatprep.subr.mxu0 0.0
    %2323 = vmatpush1.msra.mxu0 0.0
    %2324 = vmatprep.subr.mxu0 0.0
    %2325 = vmatpush1.msra.mxu0 0.0
    %2326 = vmatprep.subr.mxu0 0.0
    %2327 = vmatpush1.msra.mxu0 0.0
    %2328 = vmatprep.subr.mxu0 0.0
    %2329 = vmatpush1.msra.mxu0 0.0
    %2330 = vmatprep.subr.mxu0 0.0
    %2331 = vmatpush1.msra.mxu0 0.0
    %2332 = vmatprep.subr.mxu0 0.0
    %2333 = vmatpush1.msra.mxu0 0.0
    %2334 = vmatprep.subr.mxu0 0.0
    %2335 = vmatpush1.msra.mxu0 0.0
    %2336 = vmatprep.subr.mxu0 0.0
    %2337 = vmatpush1.msra.mxu0 0.0
    %2338 = vmatprep.subr.mxu0 0.0
    %2339 = vmatpush1.msra.mxu0 0.0
    %2340 = vmatprep.subr.mxu0 0.0
    %2341 = vmatpush1.msra.mxu0 0.0
    %2342 = vmatprep.subr.mxu0 0.0
    %2343 = vmatpush1.msra.mxu0 0.0
    %2344 = vmatprep.subr.mxu0 0.0
    %2345 = vmatpush1.msra.mxu0 0.0
    %2346 = vmatprep.subr.mxu0 0.0
    %2347 = vmatpush1.msra.mxu0 0.0
    %2348 = vmatprep.subr.mxu0 0.0
    %2349 = vmatpush1.msra.mxu0 %v2313
    %2350 = vmatprep.subr.mxu0 0.0
    %2351 = vmatpush2.msra.mxu0 0.0
    %2352 = vmatprep.subr.mxu0 0.0
    %2353 = vmatpush2.msra.mxu0 0.0
    %2354 = vmatprep.subr.mxu0 0.0
    %2355 = vmatpush2.msra.mxu0 0.0
    %2356 = vmatprep.subr.mxu0 0.0
    %2357 = vmatpush2.msra.mxu0 0.0
    %2358 = vmatprep.subr.mxu0 0.0
    %2359 = vmatpush2.msra.mxu0 0.0
    %2360 = vmatprep.subr.mxu0 0.0
    %2361 = vmatpush2.msra.mxu0 0.0
    %2362 = vmatprep.subr.mxu0 0.0
    %2363 = vmatpush2.msra.mxu0 0.0
    %2364 = vmatprep.subr.mxu0 0.0
    %2365 = vmatpush2.msra.mxu0 0.0
    %2366 = vmatprep.subr.mxu0 0.0
    %2367 = vmatpush2.msra.mxu0 0.0
    %2368 = vmatprep.subr.mxu0 0.0
    %2369 = vmatpush2.msra.mxu0 0.0
    %2370 = vmatprep.subr.mxu0 0.0
    %2371 = vmatpush2.msra.mxu0 0.0
    %2372 = vmatprep.subr.mxu0 0.0
    %2373 = vmatpush2.msra.mxu0 0.0
    %2374 = vmatprep.subr.mxu0 0.0
    %2375 = vmatpush2.msra.mxu0 0.0
    %2376 = vmatprep.subr.mxu0 0.0
    %2377 = vmatpush2.msra.mxu0 0.0
    %2378 = vmatprep.subr.mxu0 0.0
    %2379 = vmatpush2.msra.mxu0 0.0
    %2380 = vmatprep.subr.mxu0 0.0
    %2381 = vmatpush2.msra.mxu0 0.0
    %2382 = vmatprep.mubr.f32.mxu0 0.0
    %2383 = vmatmul.mubr.f32.gmra.mxu0 %v2316
    %v2384 = vpop.f32.mrf.mxu0
    %v2385 = vadd.f32 0.0, %v2384
    %v2386 = vpop.f32.mrf.mxu0
    %2387 = vdwg.mxu0
    %v2389 = vsel %vm270, %v2309, 0
    %v2392 = vsel %vm270, %v2385, 0
    %2394 = vmatprep.subr.mxu0 0.0
    %2395 = vmatpush1.msra.mxu0 0.0
    %2396 = vmatprep.subr.mxu0 0.0
    %2397 = vmatpush1.msra.mxu0 0.0
    %2398 = vmatprep.subr.mxu0 0.0
    %2399 = vmatpush1.msra.mxu0 0.0
    %2400 = vmatprep.subr.mxu0 0.0
    %2401 = vmatpush1.msra.mxu0 0.0
    %2402 = vmatprep.subr.mxu0 0.0
    %2403 = vmatpush1.msra.mxu0 0.0
    %2404 = vmatprep.subr.mxu0 0.0
    %2405 = vmatpush1.msra.mxu0 0.0
    %2406 = vmatprep.subr.mxu0 0.0
    %2407 = vmatpush1.msra.mxu0 0.0
    %2408 = vmatprep.subr.mxu0 0.0
    %2409 = vmatpush1.msra.mxu0 0.0
    %2410 = vmatprep.subr.mxu0 0.0
    %2411 = vmatpush1.msra.mxu0 0.0
    %2412 = vmatprep.subr.mxu0 0.0
    %2413 = vmatpush1.msra.mxu0 0.0
    %2414 = vmatprep.subr.mxu0 0.0
    %2415 = vmatpush1.msra.mxu0 0.0
    %2416 = vmatprep.subr.mxu0 0.0
    %2417 = vmatpush1.msra.mxu0 0.0
    %2418 = vmatprep.subr.mxu0 0.0
    %2419 = vmatpush1.msra.mxu0 0.0
    %2420 = vmatprep.subr.mxu0 0.0
    %2421 = vmatpush1.msra.mxu0 0.0
    %2422 = vmatprep.subr.mxu0 0.0
    %2423 = vmatpush1.msra.mxu0 %v1523
    %2424 = vmatprep.subr.mxu0 0.0
    %2425 = vmatpush1.msra.mxu0 %v1522
    %2426 = vmatprep.subr.mxu0 0.0
    %2427 = vmatpush2.msra.mxu0 0.0
    %2428 = vmatprep.subr.mxu0 0.0
    %2429 = vmatpush2.msra.mxu0 0.0
    %2430 = vmatprep.subr.mxu0 0.0
    %2431 = vmatpush2.msra.mxu0 0.0
    %2432 = vmatprep.subr.mxu0 0.0
    %2433 = vmatpush2.msra.mxu0 0.0
    %2434 = vmatprep.subr.mxu0 0.0
    %2435 = vmatpush2.msra.mxu0 0.0
    %2436 = vmatprep.subr.mxu0 0.0
    %2437 = vmatpush2.msra.mxu0 0.0
    %2438 = vmatprep.subr.mxu0 0.0
    %2439 = vmatpush2.msra.mxu0 0.0
    %2440 = vmatprep.subr.mxu0 0.0
    %2441 = vmatpush2.msra.mxu0 0.0
    %2442 = vmatprep.subr.mxu0 0.0
    %2443 = vmatpush2.msra.mxu0 0.0
    %2444 = vmatprep.subr.mxu0 0.0
    %2445 = vmatpush2.msra.mxu0 0.0
    %2446 = vmatprep.subr.mxu0 0.0
    %2447 = vmatpush2.msra.mxu0 0.0
    %2448 = vmatprep.subr.mxu0 0.0
    %2449 = vmatpush2.msra.mxu0 0.0
    %2450 = vmatprep.subr.mxu0 0.0
    %2451 = vmatpush2.msra.mxu0 0.0
    %2452 = vmatprep.subr.mxu0 0.0
    %2453 = vmatpush2.msra.mxu0 0.0
    %2454 = vmatprep.subr.mxu0 0.0
    %2455 = vmatpush2.msra.mxu0 0.0
    %2456 = vmatprep.subr.mxu0 0.0
    %2457 = vmatpush2.msra.mxu0 0.0
    %2458 = vmatprep.mubr.f32.mxu0 0.0
    %2459 = vmatmul.mubr.f32.gmra.mxu0 %v2389
    %v2460 = vpop.f32.mrf.mxu0
    %v2461 = vadd.f32 0.0, %v2460
    %v2462 = vpop.f32.mrf.mxu0
    %2463 = vmatprep.mubr.f32.mxu0 0.0
    %2464 = vmatmul.mubr.f32.gmra.mxu0 %v2392
    %v2465 = vpop.f32.mrf.mxu0
    %v2466 = vadd.f32 0.0, %v2465
    %v2467 = vpop.f32.mrf.mxu0
    %2468 = vdwg.mxu0
    %v2470 = vsel %vm270, %v1873, 0
    %v2473 = vsel %vm270, %v1949, 0
    %2475 = vmatprep.subr.mxu0 0.0
    %2476 = vmatpush1.msra.mxu0 0.0
    %2477 = vmatprep.subr.mxu0 0.0
    %2478 = vmatpush1.msra.mxu0 0.0
    %2479 = vmatprep.subr.mxu0 0.0
    %2480 = vmatpush1.msra.mxu0 0.0
    %2481 = vmatprep.subr.mxu0 0.0
    %2482 = vmatpush1.msra.mxu0 0.0
    %2483 = vmatprep.subr.mxu0 0.0
    %2484 = vmatpush1.msra.mxu0 0.0
    %2485 = vmatprep.subr.mxu0 0.0
    %2486 = vmatpush1.msra.mxu0 0.0
    %2487 = vmatprep.subr.mxu0 0.0
    %2488 = vmatpush1.msra.mxu0 0.0
    %2489 = vmatprep.subr.mxu0 0.0
    %2490 = vmatpush1.msra.mxu0 0.0
    %2491 = vmatprep.subr.mxu0 0.0
    %2492 = vmatpush1.msra.mxu0 0.0
    %2493 = vmatprep.subr.mxu0 0.0
    %2494 = vmatpush1.msra.mxu0 0.0
    %2495 = vmatprep.subr.mxu0 0.0
    %2496 = vmatpush1.msra.mxu0 0.0
    %2497 = vmatprep.subr.mxu0 0.0
    %2498 = vmatpush1.msra.mxu0 0.0
    %2499 = vmatprep.subr.mxu0 0.0
    %2500 = vmatpush1.msra.mxu0 0.0
    %2501 = vmatprep.subr.mxu0 0.0
    %2502 = vmatpush1.msra.mxu0 0.0
    %2503 = vmatprep.subr.mxu0 0.0
    %2504 = vmatpush1.msra.mxu0 %v1521
    %2505 = vmatprep.subr.mxu0 0.0
    %2506 = vmatpush1.msra.mxu0 %v1520
    %2507 = vmatprep.subr.mxu0 0.0
    %2508 = vmatpush2.msra.mxu0 0.0
    %2509 = vmatprep.subr.mxu0 0.0
    %2510 = vmatpush2.msra.mxu0 0.0
    %2511 = vmatprep.subr.mxu0 0.0
    %2512 = vmatpush2.msra.mxu0 0.0
    %2513 = vmatprep.subr.mxu0 0.0
    %2514 = vmatpush2.msra.mxu0 0.0
    %2515 = vmatprep.subr.mxu0 0.0
    %2516 = vmatpush2.msra.mxu0 0.0
    %2517 = vmatprep.subr.mxu0 0.0
    %2518 = vmatpush2.msra.mxu0 0.0
    %2519 = vmatprep.subr.mxu0 0.0
    %2520 = vmatpush2.msra.mxu0 0.0
    %2521 = vmatprep.subr.mxu0 0.0
    %2522 = vmatpush2.msra.mxu0 0.0
    %2523 = vmatprep.subr.mxu0 0.0
    %2524 = vmatpush2.msra.mxu0 0.0
    %2525 = vmatprep.subr.mxu0 0.0
    %2526 = vmatpush2.msra.mxu0 0.0
    %2527 = vmatprep.subr.mxu0 0.0
    %2528 = vmatpush2.msra.mxu0 0.0
    %2529 = vmatprep.subr.mxu0 0.0
    %2530 = vmatpush2.msra.mxu0 0.0
    %2531 = vmatprep.subr.mxu0 0.0
    %2532 = vmatpush2.msra.mxu0 0.0
    %2533 = vmatprep.subr.mxu0 0.0
    %2534 = vmatpush2.msra.mxu0 0.0
    %2535 = vmatprep.subr.mxu0 0.0
    %2536 = vmatpush2.msra.mxu0 0.0
    %2537 = vmatprep.subr.mxu0 0.0
    %2538 = vmatpush2.msra.mxu0 0.0
    %2539 = vmatprep.mubr.f32.mxu0 0.0
    %2540 = vmatmul.mubr.f32.gmra.mxu0 %v2470
    %v2541 = vpop.f32.mrf.mxu0
    %v2542 = vadd.f32 %v2461, %v2541
    %v2543 = vpop.f32.mrf.mxu0
    %2544 = vmatprep.mubr.f32.mxu0 0.0
    %2545 = vmatmul.mubr.f32.gmra.mxu0 %v2473
    %v2546 = vpop.f32.mrf.mxu0
    %v2547 = vadd.f32 %v2466, %v2546
    %v2548 = vpop.f32.mrf.mxu0
    %2549 = vdwg.mxu0
    %v2550 = vadd.f32 %v2542, %v1348
    %v2551 = vadd.f32 %v2547, %v1349
    %v2552 = vld [vmem:[#allocation8] sm:$0x1]
    %v2553 = vld [vmem:[#allocation10] sm:$0x1]
    %v2554 = vsel %vm181, %v2550, 0.0
    %2555 = vadd.xlane.f32.xlu0 %v2554
    %v2556 = vpop.xlane.xlu0 %2555
    %v2557 = vsel %vm181, %v2551, 0.0
    %2558 = vadd.xlane.f32.xlu0 %v2557
    %v2559 = vpop.xlane.xlu0 %2558
    %v2560 = vmul.f32 %v2556, %v1313
    %v2561 = vmul.f32 %v2559, %v1313
    %v2562 = vsub.f32 %v2550, %v2560
    %v2563 = vsub.f32 %v2551, %v2561
    %v2564 = vmul.f32 %v2562, %v2562
    %v2565 = vmul.f32 %v2563, %v2563
    %v2566 = vsel %vm181, %v2564, 0.0
    %2567 = vadd.xlane.f32.xlu0 %v2566
    %v2568 = vpop.xlane.xlu0 %2567
    %v2569 = vsel %vm181, %v2565, 0.0
    %2570 = vadd.xlane.f32.xlu0 %v2569
    %v2571 = vpop.xlane.xlu0 %2570
    %v2572 = vmul.f32 %v2568, %v1313
    %v2573 = vmul.f32 %v2571, %v1313
    %v2574 = vadd.f32 %v2572, 1e-05
    %v2575 = vadd.f32 %v2573, 1e-05
    %v2576 = vrsqrt.pop %v2574
    %v2577 = vrsqrt.pop %v2575
    %v2578 = vmul.f32 %v2562, %v2576
    %v2579 = vmul.f32 %v2563, %v2577
    %v2581 = vlaneseq
    %v2582 = vshrl.u32 %v2581, 7
    %v2583 = vsub.s32 0, %v2582
    %v2584 = vrot.slane %v2552, %v2583
    %v2586 = vmul.f32 %v2578, %v2584
    %v2587 = vmul.f32 %v2579, %v2584
    %v2589 = vlaneseq
    %v2590 = vshrl.u32 %v2589, 7
    %v2591 = vsub.s32 0, %v2590
    %v2592 = vrot.slane %v2553, %v2591
    %v2594 = vadd.f32 %v2586, %v2592
    %v2595 = vadd.f32 %v2587, %v2592
    %v2596 = vld [vmem:[#allocation11] sm:$0xff]
    %v2597 = vld [vmem:[#allocation11 + $0x8] sm:$0xff]
    %v2598 = vld [vmem:[#allocation11 + $0x10] sm:$0xff]
    %v2599 = vld [vmem:[#allocation11 + $0x18] sm:$0xff]
    %v2601 = vsel %vm181, %v2594, 0
    %v2604 = vsel %vm181, %v2595, 0
    %2606 = vmatprep.subr.mxu0 0.0
    %2607 = vmatpush1.msra.mxu0 0.0
    %2608 = vmatprep.subr.mxu0 0.0
    %2609 = vmatpush1.msra.mxu0 0.0
    %2610 = vmatprep.subr.mxu0 0.0
    %2611 = vmatpush1.msra.mxu0 0.0
    %2612 = vmatprep.subr.mxu0 0.0
    %2613 = vmatpush1.msra.mxu0 0.0
    %2614 = vmatprep.subr.mxu0 0.0
    %2615 = vmatpush1.msra.mxu0 0.0
    %2616 = vmatprep.subr.mxu0 0.0
    %2617 = vmatpush1.msra.mxu0 0.0
    %2618 = vmatprep.subr.mxu0 0.0
    %2619 = vmatpush1.msra.mxu0 0.0
    %2620 = vmatprep.subr.mxu0 0.0
    %2621 = vmatpush1.msra.mxu0 0.0
    %2622 = vmatprep.subr.mxu0 0.0
    %2623 = vmatpush1.msra.mxu0 0.0
    %2624 = vmatprep.subr.mxu0 0.0
    %2625 = vmatpush1.msra.mxu0 0.0
    %2626 = vmatprep.subr.mxu0 0.0
    %2627 = vmatpush1.msra.mxu0 0.0
    %2628 = vmatprep.subr.mxu0 0.0
    %2629 = vmatpush1.msra.mxu0 0.0
    %2630 = vmatprep.subr.mxu0 0.0
    %2631 = vmatpush1.msra.mxu0 %v2599
    %2632 = vmatprep.subr.mxu0 0.0
    %2633 = vmatpush1.msra.mxu0 %v2598
    %2634 = vmatprep.subr.mxu0 0.0
    %2635 = vmatpush1.msra.mxu0 %v2597
    %2636 = vmatprep.subr.mxu0 0.0
    %2637 = vmatpush1.msra.mxu0 %v2596
    %2638 = vmatprep.subr.mxu0 0.0
    %2639 = vmatpush2.msra.mxu0 0.0
    %2640 = vmatprep.subr.mxu0 0.0
    %2641 = vmatpush2.msra.mxu0 0.0
    %2642 = vmatprep.subr.mxu0 0.0
    %2643 = vmatpush2.msra.mxu0 0.0
    %2644 = vmatprep.subr.mxu0 0.0
    %2645 = vmatpush2.msra.mxu0 0.0
    %2646 = vmatprep.subr.mxu0 0.0
    %2647 = vmatpush2.msra.mxu0 0.0
    %2648 = vmatprep.subr.mxu0 0.0
    %2649 = vmatpush2.msra.mxu0 0.0
    %2650 = vmatprep.subr.mxu0 0.0
    %2651 = vmatpush2.msra.mxu0 0.0
    %2652 = vmatprep.subr.mxu0 0.0
    %2653 = vmatpush2.msra.mxu0 0.0
    %2654 = vmatprep.subr.mxu0 0.0
    %2655 = vmatpush2.msra.mxu0 0.0
    %2656 = vmatprep.subr.mxu0 0.0
    %2657 = vmatpush2.msra.mxu0 0.0
    %2658 = vmatprep.subr.mxu0 0.0
    %2659 = vmatpush2.msra.mxu0 0.0
    %2660 = vmatprep.subr.mxu0 0.0
    %2661 = vmatpush2.msra.mxu0 0.0
    %2662 = vmatprep.subr.mxu0 0.0
    %2663 = vmatpush2.msra.mxu0 0.0
    %2664 = vmatprep.subr.mxu0 0.0
    %2665 = vmatpush2.msra.mxu0 0.0
    %2666 = vmatprep.subr.mxu0 0.0
    %2667 = vmatpush2.msra.mxu0 0.0
    %2668 = vmatprep.subr.mxu0 0.0
    %2669 = vmatpush2.msra.mxu0 0.0
    %2670 = vmatprep.mubr.f32.mxu0 0.0
    %2671 = vmatmul.mubr.f32.gmra.mxu0 %v2601
    %v2672 = vpop.f32.mrf.mxu0
    %v2673 = vadd.f32 0.0, %v2672
    %v2674 = vpop.f32.mrf.mxu0
    %2675 = vmatprep.mubr.f32.mxu0 0.0
    %2676 = vmatmul.mubr.f32.gmra.mxu0 %v2604
    %v2677 = vpop.f32.mrf.mxu0
    %v2678 = vadd.f32 0.0, %v2677
    %v2679 = vpop.f32.mrf.mxu0
    %2680 = vdwg.mxu0
    %v2681 = vmax.f32 %v2673, 0.0
    %v2682 = vmax.f32 %v2678, 0.0
    %v2683 = vld [vmem:[%s14] sm:$0xff]
    %v2684 = vld [vmem:[%s14 + $0x8] sm:$0xff]
    %v2685 = vld [vmem:[%s14 + $0x10] sm:$0xff]
    %v2686 = vld [vmem:[%s14 + $0x18] sm:$0xff]
    %v2687 = vld [vmem:[%s14 + $0x20] sm:$0xff]
    %v2688 = vld [vmem:[%s14 + $0x28] sm:$0xff]
    %v2689 = vld [vmem:[%s14 + $0x30] sm:$0xff]
    %v2690 = vld [vmem:[%s14 + $0x38] sm:$0xff]
    %vm2691 = vcmask 523264
    %v2693 = vsel %vm2691, %v2681, 0
    %v2696 = vsel %vm2691, %v2682, 0
    %2698 = vmatprep.subr.mxu0 0.0
    %2699 = vmatpush1.msra.mxu0 0.0
    %2700 = vmatprep.subr.mxu0 0.0
    %2701 = vmatpush1.msra.mxu0 0.0
    %2702 = vmatprep.subr.mxu0 0.0
    %2703 = vmatpush1.msra.mxu0 0.0
    %2704 = vmatprep.subr.mxu0 0.0
    %2705 = vmatpush1.msra.mxu0 0.0
    %2706 = vmatprep.subr.mxu0 0.0
    %2707 = vmatpush1.msra.mxu0 0.0
    %2708 = vmatprep.subr.mxu0 0.0
    %2709 = vmatpush1.msra.mxu0 0.0
    %2710 = vmatprep.subr.mxu0 0.0
    %2711 = vmatpush1.msra.mxu0 0.0
    %2712 = vmatprep.subr.mxu0 0.0
    %2713 = vmatpush1.msra.mxu0 0.0
    %2714 = vmatprep.subr.mxu0 0.0
    %2715 = vmatpush1.msra.mxu0 %v2690
    %2716 = vmatprep.subr.mxu0 0.0
    %2717 = vmatpush1.msra.mxu0 %v2689
    %2718 = vmatprep.subr.mxu0 0.0
    %2719 = vmatpush1.msra.mxu0 %v2688
    %2720 = vmatprep.subr.mxu0 0.0
    %2721 = vmatpush1.msra.mxu0 %v2687
    %2722 = vmatprep.subr.mxu0 0.0
    %2723 = vmatpush1.msra.mxu0 %v2686
    %2724 = vmatprep.subr.mxu0 0.0
    %2725 = vmatpush1.msra.mxu0 %v2685
    %2726 = vmatprep.subr.mxu0 0.0
    %2727 = vmatpush1.msra.mxu0 %v2684
    %2728 = vmatprep.subr.mxu0 0.0
    %2729 = vmatpush1.msra.mxu0 %v2683
    %2730 = vmatprep.subr.mxu0 0.0
    %2731 = vmatpush2.msra.mxu0 0.0
    %2732 = vmatprep.subr.mxu0 0.0
    %2733 = vmatpush2.msra.mxu0 0.0
    %2734 = vmatprep.subr.mxu0 0.0
    %2735 = vmatpush2.msra.mxu0 0.0
    %2736 = vmatprep.subr.mxu0 0.0
    %2737 = vmatpush2.msra.mxu0 0.0
    %2738 = vmatprep.subr.mxu0 0.0
    %2739 = vmatpush2.msra.mxu0 0.0
    %2740 = vmatprep.subr.mxu0 0.0
    %2741 = vmatpush2.msra.mxu0 0.0
    %2742 = vmatprep.subr.mxu0 0.0
    %2743 = vmatpush2.msra.mxu0 0.0
    %2744 = vmatprep.subr.mxu0 0.0
    %2745 = vmatpush2.msra.mxu0 0.0
    %2746 = vmatprep.subr.mxu0 0.0
    %2747 = vmatpush2.msra.mxu0 0.0
    %2748 = vmatprep.subr.mxu0 0.0
    %2749 = vmatpush2.msra.mxu0 0.0
    %2750 = vmatprep.subr.mxu0 0.0
    %2751 = vmatpush2.msra.mxu0 0.0
    %2752 = vmatprep.subr.mxu0 0.0
    %2753 = vmatpush2.msra.mxu0 0.0
    %2754 = vmatprep.subr.mxu0 0.0
    %2755 = vmatpush2.msra.mxu0 0.0
    %2756 = vmatprep.subr.mxu0 0.0
    %2757 = vmatpush2.msra.mxu0 0.0
    %2758 = vmatprep.subr.mxu0 0.0
    %2759 = vmatpush2.msra.mxu0 0.0
    %2760 = vmatprep.subr.mxu0 0.0
    %2761 = vmatpush2.msra.mxu0 0.0
    %2762 = vmatprep.mubr.f32.mxu0 0.0
    %2763 = vmatmul.mubr.f32.gmra.mxu0 %v2693
    %v2764 = vpop.f32.mrf.mxu0
    %v2765 = vadd.f32 %v2594, %v2764
    %v2766 = vpop.f32.mrf.mxu0
    %2767 = vmatprep.mubr.f32.mxu0 0.0
    %2768 = vmatmul.mubr.f32.gmra.mxu0 %v2696
    %v2769 = vpop.f32.mrf.mxu0
    %v2770 = vadd.f32 %v2595, %v2769
    %v2771 = vpop.f32.mrf.mxu0
    %2772 = vdwg.mxu0
    %v2773 = vld [vmem:[#allocation13] sm:$0x1]
    %v2774 = vld [vmem:[#allocation14] sm:$0x1]
    %v2775 = vsel %vm181, %v2765, 0.0
    %2776 = vadd.xlane.f32.xlu0 %v2775
    %v2777 = vpop.xlane.xlu0 %2776
    %v2778 = vsel %vm181, %v2770, 0.0
    %2779 = vadd.xlane.f32.xlu0 %v2778
    %v2780 = vpop.xlane.xlu0 %2779
    %v2781 = vmul.f32 %v2777, %v1313
    %v2782 = vmul.f32 %v2780, %v1313
    %v2783 = vsub.f32 %v2765, %v2781
    %v2784 = vsub.f32 %v2770, %v2782
    %v2785 = vmul.f32 %v2783, %v2783
    %v2786 = vmul.f32 %v2784, %v2784
    %v2787 = vsel %vm181, %v2785, 0.0
    %2788 = vadd.xlane.f32.xlu0 %v2787
    %v2789 = vpop.xlane.xlu0 %2788
    %v2790 = vsel %vm181, %v2786, 0.0
    %2791 = vadd.xlane.f32.xlu0 %v2790
    %v2792 = vpop.xlane.xlu0 %2791
    %v2793 = vmul.f32 %v2789, %v1313
    %v2794 = vmul.f32 %v2792, %v1313
    %v2795 = vadd.f32 %v2793, 1e-05
    %v2796 = vadd.f32 %v2794, 1e-05
    %v2797 = vrsqrt.pop %v2795
    %v2798 = vrsqrt.pop %v2796
    %v2799 = vmul.f32 %v2783, %v2797
    %v2800 = vmul.f32 %v2784, %v2798
    %v2802 = vlaneseq
    %v2803 = vshrl.u32 %v2802, 7
    %v2804 = vsub.s32 0, %v2803
    %v2805 = vrot.slane %v2773, %v2804
    %v2807 = vmul.f32 %v2799, %v2805
    %v2808 = vmul.f32 %v2800, %v2805
    %v2810 = vlaneseq
    %v2811 = vshrl.u32 %v2810, 7
    %v2812 = vsub.s32 0, %v2811
    %v2813 = vrot.slane %v2774, %v2812
    %v2815 = vadd.f32 %v2807, %v2813
    %v2816 = vadd.f32 %v2808, %v2813
    %s2817 = scalar_lea.vmem %s4, 32
    %v2818 = vld [vmem:[%s2817] sm:$0xff]
    %v2819 = vld [vmem:[%s2817 + $0x8] sm:$0xff]
    %v2820 = vld [vmem:[%s2817 + $0x10] sm:$0xff]
    %v2821 = vld [vmem:[%s2817 + $0x18] sm:$0xff]
    %v2823 = vsel %vm181, %v2815, 0
    %v2826 = vsel %vm181, %v2816, 0
    %2828 = vmatprep.subr.mxu0 0.0
    %2829 = vmatpush1.msra.mxu0 0.0
    %2830 = vmatprep.subr.mxu0 0.0
    %2831 = vmatpush1.msra.mxu0 0.0
    %2832 = vmatprep.subr.mxu0 0.0
    %2833 = vmatpush1.msra.mxu0 0.0
    %2834 = vmatprep.subr.mxu0 0.0
    %2835 = vmatpush1.msra.mxu0 0.0
    %2836 = vmatprep.subr.mxu0 0.0
    %2837 = vmatpush1.msra.mxu0 0.0
    %2838 = vmatprep.subr.mxu0 0.0
    %2839 = vmatpush1.msra.mxu0 0.0
    %2840 = vmatprep.subr.mxu0 0.0
    %2841 = vmatpush1.msra.mxu0 0.0
    %2842 = vmatprep.subr.mxu0 0.0
    %2843 = vmatpush1.msra.mxu0 0.0
    %2844 = vmatprep.subr.mxu0 0.0
    %2845 = vmatpush1.msra.mxu0 0.0
    %2846 = vmatprep.subr.mxu0 0.0
    %2847 = vmatpush1.msra.mxu0 0.0
    %2848 = vmatprep.subr.mxu0 0.0
    %2849 = vmatpush1.msra.mxu0 0.0
    %2850 = vmatprep.subr.mxu0 0.0
    %2851 = vmatpush1.msra.mxu0 0.0
    %2852 = vmatprep.subr.mxu0 0.0
    %2853 = vmatpush1.msra.mxu0 %v2821
    %2854 = vmatprep.subr.mxu0 0.0
    %2855 = vmatpush1.msra.mxu0 %v2820
    %2856 = vmatprep.subr.mxu0 0.0
    %2857 = vmatpush1.msra.mxu0 %v2819
    %2858 = vmatprep.subr.mxu0 0.0
    %2859 = vmatpush1.msra.mxu0 %v2818
    %2860 = vmatprep.subr.mxu0 0.0
    %2861 = vmatpush2.msra.mxu0 0.0
    %2862 = vmatprep.subr.mxu0 0.0
    %2863 = vmatpush2.msra.mxu0 0.0
    %2864 = vmatprep.subr.mxu0 0.0
    %2865 = vmatpush2.msra.mxu0 0.0
    %2866 = vmatprep.subr.mxu0 0.0
    %2867 = vmatpush2.msra.mxu0 0.0
    %2868 = vmatprep.subr.mxu0 0.0
    %2869 = vmatpush2.msra.mxu0 0.0
    %2870 = vmatprep.subr.mxu0 0.0
    %2871 = vmatpush2.msra.mxu0 0.0
    %2872 = vmatprep.subr.mxu0 0.0
    %2873 = vmatpush2.msra.mxu0 0.0
    %2874 = vmatprep.subr.mxu0 0.0
    %2875 = vmatpush2.msra.mxu0 0.0
    %2876 = vmatprep.subr.mxu0 0.0
    %2877 = vmatpush2.msra.mxu0 0.0
    %2878 = vmatprep.subr.mxu0 0.0
    %2879 = vmatpush2.msra.mxu0 0.0
    %2880 = vmatprep.subr.mxu0 0.0
    %2881 = vmatpush2.msra.mxu0 0.0
    %2882 = vmatprep.subr.mxu0 0.0
    %2883 = vmatpush2.msra.mxu0 0.0
    %2884 = vmatprep.subr.mxu0 0.0
    %2885 = vmatpush2.msra.mxu0 0.0
    %2886 = vmatprep.subr.mxu0 0.0
    %2887 = vmatpush2.msra.mxu0 0.0
    %2888 = vmatprep.subr.mxu0 0.0
    %2889 = vmatpush2.msra.mxu0 0.0
    %2890 = vmatprep.subr.mxu0 0.0
    %2891 = vmatpush2.msra.mxu0 0.0
    %2892 = vmatprep.mubr.f32.mxu0 0.0
    %2893 = vmatmul.mubr.f32.gmra.mxu0 %v2823
    %v2894 = vpop.f32.mrf.mxu0
    %v2895 = vadd.f32 0.0, %v2894
    %v2896 = vpop.f32.mrf.mxu0
    %2897 = vmatprep.mubr.f32.mxu0 0.0
    %2898 = vmatmul.mubr.f32.gmra.mxu0 %v2826
    %v2899 = vpop.f32.mrf.mxu0
    %v2900 = vadd.f32 0.0, %v2899
    %v2901 = vpop.f32.mrf.mxu0
    %2902 = vdwg.mxu0
    %s2903 = scalar_lea.vmem %s5, 32
    %v2904 = vld [vmem:[%s2903] sm:$0xff]
    %v2905 = vld [vmem:[%s2903 + $0x8] sm:$0xff]
    %v2906 = vld [vmem:[%s2903 + $0x10] sm:$0xff]
    %v2907 = vld [vmem:[%s2903 + $0x18] sm:$0xff]
    %2909 = vrot.lane.b32.xlu0 %v2895, 96
    %v2910 = vpop.permute.xlu0 %2909
    %v2911 = vsel %vm270, %v2895, 0
    %v2913 = vsel %vm270, %v2910, 0
    %2915 = vmatprep.subr.mxu0 0.0
    %2916 = vmatpush1.xpose.msra.mxu0 0.0
    %2917 = vmatprep.subr.mxu0 0.0
    %2918 = vmatpush1.xpose.msra.mxu0 0.0
    %2919 = vmatprep.subr.mxu0 0.0
    %2920 = vmatpush1.xpose.msra.mxu0 0.0
    %2921 = vmatprep.subr.mxu0 0.0
    %2922 = vmatpush1.xpose.msra.mxu0 0.0
    %2923 = vmatprep.subr.mxu0 0.0
    %2924 = vmatpush1.xpose.msra.mxu0 0.0
    %2925 = vmatprep.subr.mxu0 0.0
    %2926 = vmatpush1.xpose.msra.mxu0 0.0
    %2927 = vmatprep.subr.mxu0 0.0
    %2928 = vmatpush1.xpose.msra.mxu0 0.0
    %2929 = vmatprep.subr.mxu0 0.0
    %2930 = vmatpush1.xpose.msra.mxu0 0.0
    %2931 = vmatprep.subr.mxu0 0.0
    %2932 = vmatpush1.xpose.msra.mxu0 0.0
    %2933 = vmatprep.subr.mxu0 0.0
    %2934 = vmatpush1.xpose.msra.mxu0 0.0
    %2935 = vmatprep.subr.mxu0 0.0
    %2936 = vmatpush1.xpose.msra.mxu0 0.0
    %2937 = vmatprep.subr.mxu0 0.0
    %2938 = vmatpush1.xpose.msra.mxu0 0.0
    %2939 = vmatprep.subr.mxu0 0.0
    %2940 = vmatpush1.xpose.msra.mxu0 0.0
    %2941 = vmatprep.subr.mxu0 0.0
    %2942 = vmatpush1.xpose.msra.mxu0 0.0
    %2943 = vmatprep.subr.mxu0 0.0
    %2944 = vmatpush1.xpose.msra.mxu0 0.0
    %2945 = vmatprep.subr.mxu0 0.0
    %2946 = vmatpush1.xpose.msra.mxu0 %v2913
    %2947 = vmatprep.subr.mxu0 0.0
    %2948 = vmatpush2.xpose.msra.mxu0 0.0
    %2949 = vmatprep.subr.mxu0 0.0
    %2950 = vmatpush2.xpose.msra.mxu0 0.0
    %2951 = vmatprep.subr.mxu0 0.0
    %2952 = vmatpush2.xpose.msra.mxu0 0.0
    %2953 = vmatprep.subr.mxu0 0.0
    %2954 = vmatpush2.xpose.msra.mxu0 0.0
    %2955 = vmatprep.subr.mxu0 0.0
    %2956 = vmatpush2.xpose.msra.mxu0 0.0
    %2957 = vmatprep.subr.mxu0 0.0
    %2958 = vmatpush2.xpose.msra.mxu0 0.0
    %2959 = vmatprep.subr.mxu0 0.0
    %2960 = vmatpush2.xpose.msra.mxu0 0.0
    %2961 = vmatprep.subr.mxu0 0.0
    %2962 = vmatpush2.xpose.msra.mxu0 0.0
    %2963 = vmatprep.subr.mxu0 0.0
    %2964 = vmatpush2.xpose.msra.mxu0 0.0
    %2965 = vmatprep.subr.mxu0 0.0
    %2966 = vmatpush2.xpose.msra.mxu0 0.0
    %2967 = vmatprep.subr.mxu0 0.0
    %2968 = vmatpush2.xpose.msra.mxu0 0.0
    %2969 = vmatprep.subr.mxu0 0.0
    %2970 = vmatpush2.xpose.msra.mxu0 0.0
    %2971 = vmatprep.subr.mxu0 0.0
    %2972 = vmatpush2.xpose.msra.mxu0 0.0
    %2973 = vmatprep.subr.mxu0 0.0
    %2974 = vmatpush2.xpose.msra.mxu0 0.0
    %2975 = vmatprep.subr.mxu0 0.0
    %2976 = vmatpush2.xpose.msra.mxu0 0.0
    %2977 = vmatprep.subr.mxu0 0.0
    %2978 = vmatpush2.xpose.msra.mxu0 0.0
    %2979 = vmatprep.mubr.f32.mxu0 0.0
    %2980 = vmatmul.mubr.f32.gmra.mxu0 %v2911
    %v2981 = vpop.f32.mrf.mxu0
    %v2982 = vadd.f32 %v173, %v2981
    %v2983 = vpop.f32.mrf.mxu0
    %2984 = vdwg.mxu0
    %2986 = vrot.lane.b32.xlu0 %v2900, 96
    %v2987 = vpop.permute.xlu0 %2986
    %v2988 = vsel %vm270, %v2900, 0
    %v2990 = vsel %vm270, %v2987, 0
    %2992 = vmatprep.subr.mxu0 0.0
    %2993 = vmatpush1.xpose.msra.mxu0 0.0
    %2994 = vmatprep.subr.mxu0 0.0
    %2995 = vmatpush1.xpose.msra.mxu0 0.0
    %2996 = vmatprep.subr.mxu0 0.0
    %2997 = vmatpush1.xpose.msra.mxu0 0.0
    %2998 = vmatprep.subr.mxu0 0.0
    %2999 = vmatpush1.xpose.msra.mxu0 0.0
    %3000 = vmatprep.subr.mxu0 0.0
    %3001 = vmatpush1.xpose.msra.mxu0 0.0
    %3002 = vmatprep.subr.mxu0 0.0
    %3003 = vmatpush1.xpose.msra.mxu0 0.0
    %3004 = vmatprep.subr.mxu0 0.0
    %3005 = vmatpush1.xpose.msra.mxu0 0.0
    %3006 = vmatprep.subr.mxu0 0.0
    %3007 = vmatpush1.xpose.msra.mxu0 0.0
    %3008 = vmatprep.subr.mxu0 0.0
    %3009 = vmatpush1.xpose.msra.mxu0 0.0
    %3010 = vmatprep.subr.mxu0 0.0
    %3011 = vmatpush1.xpose.msra.mxu0 0.0
    %3012 = vmatprep.subr.mxu0 0.0
    %3013 = vmatpush1.xpose.msra.mxu0 0.0
    %3014 = vmatprep.subr.mxu0 0.0
    %3015 = vmatpush1.xpose.msra.mxu0 0.0
    %3016 = vmatprep.subr.mxu0 0.0
    %3017 = vmatpush1.xpose.msra.mxu0 0.0
    %3018 = vmatprep.subr.mxu0 0.0
    %3019 = vmatpush1.xpose.msra.mxu0 0.0
    %3020 = vmatprep.subr.mxu0 0.0
    %3021 = vmatpush1.xpose.msra.mxu0 0.0
    %3022 = vmatprep.subr.mxu0 0.0
    %3023 = vmatpush1.xpose.msra.mxu0 %v2990
    %3024 = vmatprep.subr.mxu0 0.0
    %3025 = vmatpush2.xpose.msra.mxu0 0.0
    %3026 = vmatprep.subr.mxu0 0.0
    %3027 = vmatpush2.xpose.msra.mxu0 0.0
    %3028 = vmatprep.subr.mxu0 0.0
    %3029 = vmatpush2.xpose.msra.mxu0 0.0
    %3030 = vmatprep.subr.mxu0 0.0
    %3031 = vmatpush2.xpose.msra.mxu0 0.0
    %3032 = vmatprep.subr.mxu0 0.0
    %3033 = vmatpush2.xpose.msra.mxu0 0.0
    %3034 = vmatprep.subr.mxu0 0.0
    %3035 = vmatpush2.xpose.msra.mxu0 0.0
    %3036 = vmatprep.subr.mxu0 0.0
    %3037 = vmatpush2.xpose.msra.mxu0 0.0
    %3038 = vmatprep.subr.mxu0 0.0
    %3039 = vmatpush2.xpose.msra.mxu0 0.0
    %3040 = vmatprep.subr.mxu0 0.0
    %3041 = vmatpush2.xpose.msra.mxu0 0.0
    %3042 = vmatprep.subr.mxu0 0.0
    %3043 = vmatpush2.xpose.msra.mxu0 0.0
    %3044 = vmatprep.subr.mxu0 0.0
    %3045 = vmatpush2.xpose.msra.mxu0 0.0
    %3046 = vmatprep.subr.mxu0 0.0
    %3047 = vmatpush2.xpose.msra.mxu0 0.0
    %3048 = vmatprep.subr.mxu0 0.0
    %3049 = vmatpush2.xpose.msra.mxu0 0.0
    %3050 = vmatprep.subr.mxu0 0.0
    %3051 = vmatpush2.xpose.msra.mxu0 0.0
    %3052 = vmatprep.subr.mxu0 0.0
    %3053 = vmatpush2.xpose.msra.mxu0 0.0
    %3054 = vmatprep.subr.mxu0 0.0
    %3055 = vmatpush2.xpose.msra.mxu0 0.0
    %3056 = vmatprep.mubr.f32.mxu0 0.0
    %3057 = vmatmul.mubr.f32.gmra.mxu0 %v2988
    %v3058 = vpop.f32.mrf.mxu0
    %v3059 = vadd.f32 %v174, %v3058
    %v3060 = vpop.f32.mrf.mxu0
    %3061 = vdwg.mxu0
    %v3062 = vsel %vm422, %v2982, -inf
    %3063 = vmax.xlane.f32.xlu0 %v3062
    %v3064 = vpop.xlane.xlu0 %3063
    %v3065 = vsel %vm422, %v3059, -inf
    %3066 = vmax.xlane.f32.xlu0 %v3065
    %v3067 = vpop.xlane.xlu0 %3066
    %v3068 = vsub.f32 %v2982, %v3064
    %v3069 = vsub.f32 %v3059, %v3067
    %v3070 = vmul.f32 %v3068, 1.442695
    %v3071 = vpow.pop %v3070
    %v3072 = vmul.f32 %v3069, 1.442695
    %v3073 = vpow.pop %v3072
    %v3074 = vsel %vm422, %v3071, 0.0
    %3075 = vadd.xlane.f32.xlu0 %v3074
    %v3076 = vpop.xlane.xlu0 %3075
    %v3077 = vsel %vm422, %v3073, 0.0
    %3078 = vadd.xlane.f32.xlu0 %v3077
    %v3079 = vpop.xlane.xlu0 %3078
    %v3080 = vrcp.pop %v3076
    %v3081 = vmul.f32 %v3071, %v3080
    %v3082 = vrcp.pop %v3079
    %v3083 = vmul.f32 %v3073, %v3082
    %v3084 = vcombine.high %v3081, 0.0
    %v3086 = vunpack.c.l.s4 1983009808
    %v3087 = vunpack.c.0.s8 %v3086
    %v3088 = vlaneseq
    %v3089 = vshrl.u32 %v3088, 7
    %v3090 = vsub.s32 %v3087, %v3089
    %v3091 = vrot.slane %v3081, %v3090
    %v3093 = vunpack.c.l.s4 1983009808
    %v3094 = vunpack.c.0.s8 %v3093
    %v3095 = vlaneseq
    %v3096 = vshrl.u32 %v3095, 7
    %v3097 = vsub.s32 %v3094, %v3096
    %v3098 = vrot.slane %v3084, %v3097
    %v3099 = vcombine.high %v3083, 0.0
    %v3101 = vunpack.c.l.s4 1983009808
    %v3102 = vunpack.c.0.s8 %v3101
    %v3103 = vlaneseq
    %v3104 = vshrl.u32 %v3103, 7
    %v3105 = vsub.s32 %v3102, %v3104
    %v3106 = vrot.slane %v3083, %v3105
    %v3108 = vunpack.c.l.s4 1983009808
    %v3109 = vunpack.c.0.s8 %v3108
    %v3110 = vlaneseq
    %v3111 = vshrl.u32 %v3110, 7
    %v3112 = vsub.s32 %v3109, %v3111
    %v3113 = vrot.slane %v3099, %v3112
    %v3114 = vcombine.low %v3091, %v3106
    %v3115 = vcombine.high %v3091, %v3106
    %v3117 = vunpack.c.l.s4 1934713408
    %v3118 = vunpack.c.0.s8 %v3117
    %v3119 = vlaneseq
    %v3120 = vshrl.u32 %v3119, 7
    %v3121 = vsub.s32 %v3118, %v3120
    %v3122 = vrot.slane %v3114, %v3121
    %v3124 = vunpack.c.l.s4 1934713408
    %v3125 = vunpack.c.0.s8 %v3124
    %v3126 = vlaneseq
    %v3127 = vshrl.u32 %v3126, 7
    %v3128 = vsub.s32 %v3125, %v3127
    %v3129 = vrot.slane %v3115, %v3128
    %v3130 = vcombine.low %v3098, %v3113
    %v3131 = vcombine.high %v3098, %v3113
    %v3133 = vunpack.c.l.s4 1934713408
    %v3134 = vunpack.c.0.s8 %v3133
    %v3135 = vlaneseq
    %v3136 = vshrl.u32 %v3135, 7
    %v3137 = vsub.s32 %v3134, %v3136
    %v3138 = vrot.slane %v3130, %v3137
    %v3140 = vunpack.c.l.s4 1934713408
    %v3141 = vunpack.c.0.s8 %v3140
    %v3142 = vlaneseq
    %v3143 = vshrl.u32 %v3142, 7
    %v3144 = vsub.s32 %v3141, %v3143
    %v3145 = vrot.slane %v3131, %v3144
    %v3146 = vcombine.high %v3122, 0.0
    %v3147 = vcombine.high %v3129, 0.0
    %v3148 = vcombine.high %v3138, 0.0
    %v3149 = vcombine.high %v3145, 0.0
    %3151 = vrot.lane.b32.xlu0 %v3146, 8
    %v3152 = vpop.permute.xlu0 %3151
    %3155 = vrot.lane.b32.xlu0 %v3129, 16
    %v3156 = vpop.permute.xlu0 %3155
    %3159 = vrot.lane.b32.xlu0 %v3147, 24
    %v3160 = vpop.permute.xlu0 %3159
    %3163 = vrot.lane.b32.xlu0 %v3138, 32
    %v3164 = vpop.permute.xlu0 %3163
    %3167 = vrot.lane.b32.xlu0 %v3148, 40
    %v3168 = vpop.permute.xlu0 %3167
    %3171 = vrot.lane.b32.xlu0 %v3145, 48
    %v3172 = vpop.permute.xlu0 %3171
    %3175 = vrot.lane.b32.xlu0 %v3149, 56
    %v3176 = vpop.permute.xlu0 %3175
    %v3178 = vsel %vm422, %v3122, %v3152
    %v3179 = vsel %vm270, %v3178, %v3156
    %v3180 = vsel %vm541, %v3179, %v3160
    %v3181 = vsel %vm181, %v3180, %v3164
    %v3182 = vsel %vm544, %v3181, %v3168
    %v3183 = vsel %vm546, %v3182, %v3172
    %v3184 = vsel %vm548, %v3183, %v3176
    %s3185 = scalar_lea.vmem %s18, 2
    %3186 = vst.msk [vmem:[%s3185] sm:$0x3] %vm550, %v3184
    %3187 = vrot.lane.b32.xlu0 %v2895, 64
    %v3188 = vpop.permute.xlu0 %3187
    %v3191 = vsel %vm422, %v3081, 0
    %3193 = vmatprep.subr.mxu0 0.0
    %3194 = vmatpush1.msra.mxu0 0.0
    %3195 = vmatprep.subr.mxu0 0.0
    %3196 = vmatpush1.msra.mxu0 0.0
    %3197 = vmatprep.subr.mxu0 0.0
    %3198 = vmatpush1.msra.mxu0 0.0
    %3199 = vmatprep.subr.mxu0 0.0
    %3200 = vmatpush1.msra.mxu0 0.0
    %3201 = vmatprep.subr.mxu0 0.0
    %3202 = vmatpush1.msra.mxu0 0.0
    %3203 = vmatprep.subr.mxu0 0.0
    %3204 = vmatpush1.msra.mxu0 0.0
    %3205 = vmatprep.subr.mxu0 0.0
    %3206 = vmatpush1.msra.mxu0 0.0
    %3207 = vmatprep.subr.mxu0 0.0
    %3208 = vmatpush1.msra.mxu0 0.0
    %3209 = vmatprep.subr.mxu0 0.0
    %3210 = vmatpush1.msra.mxu0 0.0
    %3211 = vmatprep.subr.mxu0 0.0
    %3212 = vmatpush1.msra.mxu0 0.0
    %3213 = vmatprep.subr.mxu0 0.0
    %3214 = vmatpush1.msra.mxu0 0.0
    %3215 = vmatprep.subr.mxu0 0.0
    %3216 = vmatpush1.msra.mxu0 0.0
    %3217 = vmatprep.subr.mxu0 0.0
    %3218 = vmatpush1.msra.mxu0 0.0
    %3219 = vmatprep.subr.mxu0 0.0
    %3220 = vmatpush1.msra.mxu0 0.0
    %3221 = vmatprep.subr.mxu0 0.0
    %3222 = vmatpush1.msra.mxu0 0.0
    %3223 = vmatprep.subr.mxu0 0.0
    %3224 = vmatpush1.msra.mxu0 %v3188
    %3225 = vmatprep.subr.mxu0 0.0
    %3226 = vmatpush2.msra.mxu0 0.0
    %3227 = vmatprep.subr.mxu0 0.0
    %3228 = vmatpush2.msra.mxu0 0.0
    %3229 = vmatprep.subr.mxu0 0.0
    %3230 = vmatpush2.msra.mxu0 0.0
    %3231 = vmatprep.subr.mxu0 0.0
    %3232 = vmatpush2.msra.mxu0 0.0
    %3233 = vmatprep.subr.mxu0 0.0
    %3234 = vmatpush2.msra.mxu0 0.0
    %3235 = vmatprep.subr.mxu0 0.0
    %3236 = vmatpush2.msra.mxu0 0.0
    %3237 = vmatprep.subr.mxu0 0.0
    %3238 = vmatpush2.msra.mxu0 0.0
    %3239 = vmatprep.subr.mxu0 0.0
    %3240 = vmatpush2.msra.mxu0 0.0
    %3241 = vmatprep.subr.mxu0 0.0
    %3242 = vmatpush2.msra.mxu0 0.0
    %3243 = vmatprep.subr.mxu0 0.0
    %3244 = vmatpush2.msra.mxu0 0.0
    %3245 = vmatprep.subr.mxu0 0.0
    %3246 = vmatpush2.msra.mxu0 0.0
    %3247 = vmatprep.subr.mxu0 0.0
    %3248 = vmatpush2.msra.mxu0 0.0
    %3249 = vmatprep.subr.mxu0 0.0
    %3250 = vmatpush2.msra.mxu0 0.0
    %3251 = vmatprep.subr.mxu0 0.0
    %3252 = vmatpush2.msra.mxu0 0.0
    %3253 = vmatprep.subr.mxu0 0.0
    %3254 = vmatpush2.msra.mxu0 0.0
    %3255 = vmatprep.subr.mxu0 0.0
    %3256 = vmatpush2.msra.mxu0 0.0
    %3257 = vmatprep.mubr.f32.mxu0 0.0
    %3258 = vmatmul.mubr.f32.gmra.mxu0 %v3191
    %v3259 = vpop.f32.mrf.mxu0
    %v3260 = vadd.f32 0.0, %v3259
    %v3261 = vpop.f32.mrf.mxu0
    %3262 = vdwg.mxu0
    %3263 = vrot.lane.b32.xlu0 %v2900, 64
    %v3264 = vpop.permute.xlu0 %3263
    %v3267 = vsel %vm422, %v3083, 0
    %3269 = vmatprep.subr.mxu0 0.0
    %3270 = vmatpush1.msra.mxu0 0.0
    %3271 = vmatprep.subr.mxu0 0.0
    %3272 = vmatpush1.msra.mxu0 0.0
    %3273 = vmatprep.subr.mxu0 0.0
    %3274 = vmatpush1.msra.mxu0 0.0
    %3275 = vmatprep.subr.mxu0 0.0
    %3276 = vmatpush1.msra.mxu0 0.0
    %3277 = vmatprep.subr.mxu0 0.0
    %3278 = vmatpush1.msra.mxu0 0.0
    %3279 = vmatprep.subr.mxu0 0.0
    %3280 = vmatpush1.msra.mxu0 0.0
    %3281 = vmatprep.subr.mxu0 0.0
    %3282 = vmatpush1.msra.mxu0 0.0
    %3283 = vmatprep.subr.mxu0 0.0
    %3284 = vmatpush1.msra.mxu0 0.0
    %3285 = vmatprep.subr.mxu0 0.0
    %3286 = vmatpush1.msra.mxu0 0.0
    %3287 = vmatprep.subr.mxu0 0.0
    %3288 = vmatpush1.msra.mxu0 0.0
    %3289 = vmatprep.subr.mxu0 0.0
    %3290 = vmatpush1.msra.mxu0 0.0
    %3291 = vmatprep.subr.mxu0 0.0
    %3292 = vmatpush1.msra.mxu0 0.0
    %3293 = vmatprep.subr.mxu0 0.0
    %3294 = vmatpush1.msra.mxu0 0.0
    %3295 = vmatprep.subr.mxu0 0.0
    %3296 = vmatpush1.msra.mxu0 0.0
    %3297 = vmatprep.subr.mxu0 0.0
    %3298 = vmatpush1.msra.mxu0 0.0
    %3299 = vmatprep.subr.mxu0 0.0
    %3300 = vmatpush1.msra.mxu0 %v3264
    %3301 = vmatprep.subr.mxu0 0.0
    %3302 = vmatpush2.msra.mxu0 0.0
    %3303 = vmatprep.subr.mxu0 0.0
    %3304 = vmatpush2.msra.mxu0 0.0
    %3305 = vmatprep.subr.mxu0 0.0
    %3306 = vmatpush2.msra.mxu0 0.0
    %3307 = vmatprep.subr.mxu0 0.0
    %3308 = vmatpush2.msra.mxu0 0.0
    %3309 = vmatprep.subr.mxu0 0.0
    %3310 = vmatpush2.msra.mxu0 0.0
    %3311 = vmatprep.subr.mxu0 0.0
    %3312 = vmatpush2.msra.mxu0 0.0
    %3313 = vmatprep.subr.mxu0 0.0
    %3314 = vmatpush2.msra.mxu0 0.0
    %3315 = vmatprep.subr.mxu0 0.0
    %3316 = vmatpush2.msra.mxu0 0.0
    %3317 = vmatprep.subr.mxu0 0.0
    %3318 = vmatpush2.msra.mxu0 0.0
    %3319 = vmatprep.subr.mxu0 0.0
    %3320 = vmatpush2.msra.mxu0 0.0
    %3321 = vmatprep.subr.mxu0 0.0
    %3322 = vmatpush2.msra.mxu0 0.0
    %3323 = vmatprep.subr.mxu0 0.0
    %3324 = vmatpush2.msra.mxu0 0.0
    %3325 = vmatprep.subr.mxu0 0.0
    %3326 = vmatpush2.msra.mxu0 0.0
    %3327 = vmatprep.subr.mxu0 0.0
    %3328 = vmatpush2.msra.mxu0 0.0
    %3329 = vmatprep.subr.mxu0 0.0
    %3330 = vmatpush2.msra.mxu0 0.0
    %3331 = vmatprep.subr.mxu0 0.0
    %3332 = vmatpush2.msra.mxu0 0.0
    %3333 = vmatprep.mubr.f32.mxu0 0.0
    %3334 = vmatmul.mubr.f32.gmra.mxu0 %v3267
    %v3335 = vpop.f32.mrf.mxu0
    %v3336 = vadd.f32 0.0, %v3335
    %v3337 = vpop.f32.mrf.mxu0
    %3338 = vdwg.mxu0
    %3339 = vrot.lane.b32.xlu0 %v2895, 112
    %v3340 = vpop.permute.xlu0 %3339
    %3341 = vrot.lane.b32.xlu0 %v2895, 80
    %v3342 = vpop.permute.xlu0 %3341
    %v3343 = vsel %vm270, %v3340, 0
    %v3345 = vsel %vm270, %v3342, 0
    %3347 = vmatprep.subr.mxu0 0.0
    %3348 = vmatpush1.xpose.msra.mxu0 0.0
    %3349 = vmatprep.subr.mxu0 0.0
    %3350 = vmatpush1.xpose.msra.mxu0 0.0
    %3351 = vmatprep.subr.mxu0 0.0
    %3352 = vmatpush1.xpose.msra.mxu0 0.0
    %3353 = vmatprep.subr.mxu0 0.0
    %3354 = vmatpush1.xpose.msra.mxu0 0.0
    %3355 = vmatprep.subr.mxu0 0.0
    %3356 = vmatpush1.xpose.msra.mxu0 0.0
    %3357 = vmatprep.subr.mxu0 0.0
    %3358 = vmatpush1.xpose.msra.mxu0 0.0
    %3359 = vmatprep.subr.mxu0 0.0
    %3360 = vmatpush1.xpose.msra.mxu0 0.0
    %3361 = vmatprep.subr.mxu0 0.0
    %3362 = vmatpush1.xpose.msra.mxu0 0.0
    %3363 = vmatprep.subr.mxu0 0.0
    %3364 = vmatpush1.xpose.msra.mxu0 0.0
    %3365 = vmatprep.subr.mxu0 0.0
    %3366 = vmatpush1.xpose.msra.mxu0 0.0
    %3367 = vmatprep.subr.mxu0 0.0
    %3368 = vmatpush1.xpose.msra.mxu0 0.0
    %3369 = vmatprep.subr.mxu0 0.0
    %3370 = vmatpush1.xpose.msra.mxu0 0.0
    %3371 = vmatprep.subr.mxu0 0.0
    %3372 = vmatpush1.xpose.msra.mxu0 0.0
    %3373 = vmatprep.subr.mxu0 0.0
    %3374 = vmatpush1.xpose.msra.mxu0 0.0
    %3375 = vmatprep.subr.mxu0 0.0
    %3376 = vmatpush1.xpose.msra.mxu0 0.0
    %3377 = vmatprep.subr.mxu0 0.0
    %3378 = vmatpush1.xpose.msra.mxu0 %v3345
    %3379 = vmatprep.subr.mxu0 0.0
    %3380 = vmatpush2.xpose.msra.mxu0 0.0
    %3381 = vmatprep.subr.mxu0 0.0
    %3382 = vmatpush2.xpose.msra.mxu0 0.0
    %3383 = vmatprep.subr.mxu0 0.0
    %3384 = vmatpush2.xpose.msra.mxu0 0.0
    %3385 = vmatprep.subr.mxu0 0.0
    %3386 = vmatpush2.xpose.msra.mxu0 0.0
    %3387 = vmatprep.subr.mxu0 0.0
    %3388 = vmatpush2.xpose.msra.mxu0 0.0
    %3389 = vmatprep.subr.mxu0 0.0
    %3390 = vmatpush2.xpose.msra.mxu0 0.0
    %3391 = vmatprep.subr.mxu0 0.0
    %3392 = vmatpush2.xpose.msra.mxu0 0.0
    %3393 = vmatprep.subr.mxu0 0.0
    %3394 = vmatpush2.xpose.msra.mxu0 0.0
    %3395 = vmatprep.subr.mxu0 0.0
    %3396 = vmatpush2.xpose.msra.mxu0 0.0
    %3397 = vmatprep.subr.mxu0 0.0
    %3398 = vmatpush2.xpose.msra.mxu0 0.0
    %3399 = vmatprep.subr.mxu0 0.0
    %3400 = vmatpush2.xpose.msra.mxu0 0.0
    %3401 = vmatprep.subr.mxu0 0.0
    %3402 = vmatpush2.xpose.msra.mxu0 0.0
    %3403 = vmatprep.subr.mxu0 0.0
    %3404 = vmatpush2.xpose.msra.mxu0 0.0
    %3405 = vmatprep.subr.mxu0 0.0
    %3406 = vmatpush2.xpose.msra.mxu0 0.0
    %3407 = vmatprep.subr.mxu0 0.0
    %3408 = vmatpush2.xpose.msra.mxu0 0.0
    %3409 = vmatprep.subr.mxu0 0.0
    %3410 = vmatpush2.xpose.msra.mxu0 0.0
    %3411 = vmatprep.mubr.f32.mxu0 0.0
    %3412 = vmatmul.mubr.f32.gmra.mxu0 %v3343
    %v3413 = vpop.f32.mrf.mxu0
    %v3414 = vadd.f32 %v173, %v3413
    %v3415 = vpop.f32.mrf.mxu0
    %3416 = vdwg.mxu0
    %3417 = vrot.lane.b32.xlu0 %v2900, 112
    %v3418 = vpop.permute.xlu0 %3417
    %3419 = vrot.lane.b32.xlu0 %v2900, 80
    %v3420 = vpop.permute.xlu0 %3419
    %v3421 = vsel %vm270, %v3418, 0
    %v3423 = vsel %vm270, %v3420, 0
    %3425 = vmatprep.subr.mxu0 0.0
    %3426 = vmatpush1.xpose.msra.mxu0 0.0
    %3427 = vmatprep.subr.mxu0 0.0
    %3428 = vmatpush1.xpose.msra.mxu0 0.0
    %3429 = vmatprep.subr.mxu0 0.0
    %3430 = vmatpush1.xpose.msra.mxu0 0.0
    %3431 = vmatprep.subr.mxu0 0.0
    %3432 = vmatpush1.xpose.msra.mxu0 0.0
    %3433 = vmatprep.subr.mxu0 0.0
    %3434 = vmatpush1.xpose.msra.mxu0 0.0
    %3435 = vmatprep.subr.mxu0 0.0
    %3436 = vmatpush1.xpose.msra.mxu0 0.0
    %3437 = vmatprep.subr.mxu0 0.0
    %3438 = vmatpush1.xpose.msra.mxu0 0.0
    %3439 = vmatprep.subr.mxu0 0.0
    %3440 = vmatpush1.xpose.msra.mxu0 0.0
    %3441 = vmatprep.subr.mxu0 0.0
    %3442 = vmatpush1.xpose.msra.mxu0 0.0
    %3443 = vmatprep.subr.mxu0 0.0
    %3444 = vmatpush1.xpose.msra.mxu0 0.0
    %3445 = vmatprep.subr.mxu0 0.0
    %3446 = vmatpush1.xpose.msra.mxu0 0.0
    %3447 = vmatprep.subr.mxu0 0.0
    %3448 = vmatpush1.xpose.msra.mxu0 0.0
    %3449 = vmatprep.subr.mxu0 0.0
    %3450 = vmatpush1.xpose.msra.mxu0 0.0
    %3451 = vmatprep.subr.mxu0 0.0
    %3452 = vmatpush1.xpose.msra.mxu0 0.0
    %3453 = vmatprep.subr.mxu0 0.0
    %3454 = vmatpush1.xpose.msra.mxu0 0.0
    %3455 = vmatprep.subr.mxu0 0.0
    %3456 = vmatpush1.xpose.msra.mxu0 %v3423
    %3457 = vmatprep.subr.mxu0 0.0
    %3458 = vmatpush2.xpose.msra.mxu0 0.0
    %3459 = vmatprep.subr.mxu0 0.0
    %3460 = vmatpush2.xpose.msra.mxu0 0.0
    %3461 = vmatprep.subr.mxu0 0.0
    %3462 = vmatpush2.xpose.msra.mxu0 0.0
    %3463 = vmatprep.subr.mxu0 0.0
    %3464 = vmatpush2.xpose.msra.mxu0 0.0
    %3465 = vmatprep.subr.mxu0 0.0
    %3466 = vmatpush2.xpose.msra.mxu0 0.0
    %3467 = vmatprep.subr.mxu0 0.0
    %3468 = vmatpush2.xpose.msra.mxu0 0.0
    %3469 = vmatprep.subr.mxu0 0.0
    %3470 = vmatpush2.xpose.msra.mxu0 0.0
    %3471 = vmatprep.subr.mxu0 0.0
    %3472 = vmatpush2.xpose.msra.mxu0 0.0
    %3473 = vmatprep.subr.mxu0 0.0
    %3474 = vmatpush2.xpose.msra.mxu0 0.0
    %3475 = vmatprep.subr.mxu0 0.0
    %3476 = vmatpush2.xpose.msra.mxu0 0.0
    %3477 = vmatprep.subr.mxu0 0.0
    %3478 = vmatpush2.xpose.msra.mxu0 0.0
    %3479 = vmatprep.subr.mxu0 0.0
    %3480 = vmatpush2.xpose.msra.mxu0 0.0
    %3481 = vmatprep.subr.mxu0 0.0
    %3482 = vmatpush2.xpose.msra.mxu0 0.0
    %3483 = vmatprep.subr.mxu0 0.0
    %3484 = vmatpush2.xpose.msra.mxu0 0.0
    %3485 = vmatprep.subr.mxu0 0.0
    %3486 = vmatpush2.xpose.msra.mxu0 0.0
    %3487 = vmatprep.subr.mxu0 0.0
    %3488 = vmatpush2.xpose.msra.mxu0 0.0
    %3489 = vmatprep.mubr.f32.mxu0 0.0
    %3490 = vmatmul.mubr.f32.gmra.mxu0 %v3421
    %v3491 = vpop.f32.mrf.mxu0
    %v3492 = vadd.f32 %v174, %v3491
    %v3493 = vpop.f32.mrf.mxu0
    %3494 = vdwg.mxu0
    %v3495 = vsel %vm422, %v3414, -inf
    %3496 = vmax.xlane.f32.xlu0 %v3495
    %v3497 = vpop.xlane.xlu0 %3496
    %v3498 = vsel %vm422, %v3492, -inf
    %3499 = vmax.xlane.f32.xlu0 %v3498
    %v3500 = vpop.xlane.xlu0 %3499
    %v3501 = vsub.f32 %v3414, %v3497
    %v3502 = vsub.f32 %v3492, %v3500
    %v3503 = vmul.f32 %v3501, 1.442695
    %v3504 = vpow.pop %v3503
    %v3505 = vmul.f32 %v3502, 1.442695
    %v3506 = vpow.pop %v3505
    %v3507 = vsel %vm422, %v3504, 0.0
    %3508 = vadd.xlane.f32.xlu0 %v3507
    %v3509 = vpop.xlane.xlu0 %3508
    %v3510 = vsel %vm422, %v3506, 0.0
    %3511 = vadd.xlane.f32.xlu0 %v3510
    %v3512 = vpop.xlane.xlu0 %3511
    %v3513 = vrcp.pop %v3509
    %v3514 = vmul.f32 %v3504, %v3513
    %v3515 = vrcp.pop %v3512
    %v3516 = vmul.f32 %v3506, %v3515
    %v3517 = vcombine.high %v3514, 0.0
    %v3519 = vunpack.c.l.s4 1983009808
    %v3520 = vunpack.c.0.s8 %v3519
    %v3521 = vlaneseq
    %v3522 = vshrl.u32 %v3521, 7
    %v3523 = vsub.s32 %v3520, %v3522
    %v3524 = vrot.slane %v3514, %v3523
    %v3526 = vunpack.c.l.s4 1983009808
    %v3527 = vunpack.c.0.s8 %v3526
    %v3528 = vlaneseq
    %v3529 = vshrl.u32 %v3528, 7
    %v3530 = vsub.s32 %v3527, %v3529
    %v3531 = vrot.slane %v3517, %v3530
    %v3532 = vcombine.high %v3516, 0.0
    %v3534 = vunpack.c.l.s4 1983009808
    %v3535 = vunpack.c.0.s8 %v3534
    %v3536 = vlaneseq
    %v3537 = vshrl.u32 %v3536, 7
    %v3538 = vsub.s32 %v3535, %v3537
    %v3539 = vrot.slane %v3516, %v3538
    %v3541 = vunpack.c.l.s4 1983009808
    %v3542 = vunpack.c.0.s8 %v3541
    %v3543 = vlaneseq
    %v3544 = vshrl.u32 %v3543, 7
    %v3545 = vsub.s32 %v3542, %v3544
    %v3546 = vrot.slane %v3532, %v3545
    %v3547 = vcombine.low %v3524, %v3539
    %v3548 = vcombine.high %v3524, %v3539
    %v3550 = vunpack.c.l.s4 1934713408
    %v3551 = vunpack.c.0.s8 %v3550
    %v3552 = vlaneseq
    %v3553 = vshrl.u32 %v3552, 7
    %v3554 = vsub.s32 %v3551, %v3553
    %v3555 = vrot.slane %v3547, %v3554
    %v3557 = vunpack.c.l.s4 1934713408
    %v3558 = vunpack.c.0.s8 %v3557
    %v3559 = vlaneseq
    %v3560 = vshrl.u32 %v3559, 7
    %v3561 = vsub.s32 %v3558, %v3560
    %v3562 = vrot.slane %v3548, %v3561
    %v3563 = vcombine.low %v3531, %v3546
    %v3564 = vcombine.high %v3531, %v3546
    %v3566 = vunpack.c.l.s4 1934713408
    %v3567 = vunpack.c.0.s8 %v3566
    %v3568 = vlaneseq
    %v3569 = vshrl.u32 %v3568, 7
    %v3570 = vsub.s32 %v3567, %v3569
    %v3571 = vrot.slane %v3563, %v3570
    %v3573 = vunpack.c.l.s4 1934713408
    %v3574 = vunpack.c.0.s8 %v3573
    %v3575 = vlaneseq
    %v3576 = vshrl.u32 %v3575, 7
    %v3577 = vsub.s32 %v3574, %v3576
    %v3578 = vrot.slane %v3564, %v3577
    %v3579 = vcombine.high %v3555, 0.0
    %v3580 = vcombine.high %v3562, 0.0
    %v3581 = vcombine.high %v3571, 0.0
    %v3582 = vcombine.high %v3578, 0.0
    %3584 = vrot.lane.b32.xlu0 %v3579, 8
    %v3585 = vpop.permute.xlu0 %3584
    %3588 = vrot.lane.b32.xlu0 %v3562, 16
    %v3589 = vpop.permute.xlu0 %3588
    %3592 = vrot.lane.b32.xlu0 %v3580, 24
    %v3593 = vpop.permute.xlu0 %3592
    %3596 = vrot.lane.b32.xlu0 %v3571, 32
    %v3597 = vpop.permute.xlu0 %3596
    %3600 = vrot.lane.b32.xlu0 %v3581, 40
    %v3601 = vpop.permute.xlu0 %3600
    %3604 = vrot.lane.b32.xlu0 %v3578, 48
    %v3605 = vpop.permute.xlu0 %3604
    %3608 = vrot.lane.b32.xlu0 %v3582, 56
    %v3609 = vpop.permute.xlu0 %3608
    %v3611 = vsel %vm422, %v3555, %v3585
    %v3612 = vsel %vm270, %v3611, %v3589
    %v3613 = vsel %vm541, %v3612, %v3593
    %v3614 = vsel %vm181, %v3613, %v3597
    %v3615 = vsel %vm544, %v3614, %v3601
    %v3616 = vsel %vm546, %v3615, %v3605
    %v3617 = vsel %vm548, %v3616, %v3609
    %3619 = vrot.lane.b32.xlu0 %v3617, 64
    %v3620 = vpop.permute.xlu0 %3619
    %3622 = vst.msk [vmem:[%s3185] sm:$0x3] %vm987, %v3620
    %3623 = vrot.lane.b32.xlu0 %v2895, 48
    %v3624 = vpop.permute.xlu0 %3623
    %v3627 = vsel %vm422, %v3514, 0
    %3629 = vmatprep.subr.mxu0 0.0
    %3630 = vmatpush1.msra.mxu0 0.0
    %3631 = vmatprep.subr.mxu0 0.0
    %3632 = vmatpush1.msra.mxu0 0.0
    %3633 = vmatprep.subr.mxu0 0.0
    %3634 = vmatpush1.msra.mxu0 0.0
    %3635 = vmatprep.subr.mxu0 0.0
    %3636 = vmatpush1.msra.mxu0 0.0
    %3637 = vmatprep.subr.mxu0 0.0
    %3638 = vmatpush1.msra.mxu0 0.0
    %3639 = vmatprep.subr.mxu0 0.0
    %3640 = vmatpush1.msra.mxu0 0.0
    %3641 = vmatprep.subr.mxu0 0.0
    %3642 = vmatpush1.msra.mxu0 0.0
    %3643 = vmatprep.subr.mxu0 0.0
    %3644 = vmatpush1.msra.mxu0 0.0
    %3645 = vmatprep.subr.mxu0 0.0
    %3646 = vmatpush1.msra.mxu0 0.0
    %3647 = vmatprep.subr.mxu0 0.0
    %3648 = vmatpush1.msra.mxu0 0.0
    %3649 = vmatprep.subr.mxu0 0.0
    %3650 = vmatpush1.msra.mxu0 0.0
    %3651 = vmatprep.subr.mxu0 0.0
    %3652 = vmatpush1.msra.mxu0 0.0
    %3653 = vmatprep.subr.mxu0 0.0
    %3654 = vmatpush1.msra.mxu0 0.0
    %3655 = vmatprep.subr.mxu0 0.0
    %3656 = vmatpush1.msra.mxu0 0.0
    %3657 = vmatprep.subr.mxu0 0.0
    %3658 = vmatpush1.msra.mxu0 0.0
    %3659 = vmatprep.subr.mxu0 0.0
    %3660 = vmatpush1.msra.mxu0 %v3624
    %3661 = vmatprep.subr.mxu0 0.0
    %3662 = vmatpush2.msra.mxu0 0.0
    %3663 = vmatprep.subr.mxu0 0.0
    %3664 = vmatpush2.msra.mxu0 0.0
    %3665 = vmatprep.subr.mxu0 0.0
    %3666 = vmatpush2.msra.mxu0 0.0
    %3667 = vmatprep.subr.mxu0 0.0
    %3668 = vmatpush2.msra.mxu0 0.0
    %3669 = vmatprep.subr.mxu0 0.0
    %3670 = vmatpush2.msra.mxu0 0.0
    %3671 = vmatprep.subr.mxu0 0.0
    %3672 = vmatpush2.msra.mxu0 0.0
    %3673 = vmatprep.subr.mxu0 0.0
    %3674 = vmatpush2.msra.mxu0 0.0
    %3675 = vmatprep.subr.mxu0 0.0
    %3676 = vmatpush2.msra.mxu0 0.0
    %3677 = vmatprep.subr.mxu0 0.0
    %3678 = vmatpush2.msra.mxu0 0.0
    %3679 = vmatprep.subr.mxu0 0.0
    %3680 = vmatpush2.msra.mxu0 0.0
    %3681 = vmatprep.subr.mxu0 0.0
    %3682 = vmatpush2.msra.mxu0 0.0
    %3683 = vmatprep.subr.mxu0 0.0
    %3684 = vmatpush2.msra.mxu0 0.0
    %3685 = vmatprep.subr.mxu0 0.0
    %3686 = vmatpush2.msra.mxu0 0.0
    %3687 = vmatprep.subr.mxu0 0.0
    %3688 = vmatpush2.msra.mxu0 0.0
    %3689 = vmatprep.subr.mxu0 0.0
    %3690 = vmatpush2.msra.mxu0 0.0
    %3691 = vmatprep.subr.mxu0 0.0
    %3692 = vmatpush2.msra.mxu0 0.0
    %3693 = vmatprep.mubr.f32.mxu0 0.0
    %3694 = vmatmul.mubr.f32.gmra.mxu0 %v3627
    %v3695 = vpop.f32.mrf.mxu0
    %v3696 = vadd.f32 0.0, %v3695
    %v3697 = vpop.f32.mrf.mxu0
    %3698 = vdwg.mxu0
    %3699 = vrot.lane.b32.xlu0 %v2900, 48
    %v3700 = vpop.permute.xlu0 %3699
    %v3703 = vsel %vm422, %v3516, 0
    %3705 = vmatprep.subr.mxu0 0.0
    %3706 = vmatpush1.msra.mxu0 0.0
    %3707 = vmatprep.subr.mxu0 0.0
    %3708 = vmatpush1.msra.mxu0 0.0
    %3709 = vmatprep.subr.mxu0 0.0
    %3710 = vmatpush1.msra.mxu0 0.0
    %3711 = vmatprep.subr.mxu0 0.0
    %3712 = vmatpush1.msra.mxu0 0.0
    %3713 = vmatprep.subr.mxu0 0.0
    %3714 = vmatpush1.msra.mxu0 0.0
    %3715 = vmatprep.subr.mxu0 0.0
    %3716 = vmatpush1.msra.mxu0 0.0
    %3717 = vmatprep.subr.mxu0 0.0
    %3718 = vmatpush1.msra.mxu0 0.0
    %3719 = vmatprep.subr.mxu0 0.0
    %3720 = vmatpush1.msra.mxu0 0.0
    %3721 = vmatprep.subr.mxu0 0.0
    %3722 = vmatpush1.msra.mxu0 0.0
    %3723 = vmatprep.subr.mxu0 0.0
    %3724 = vmatpush1.msra.mxu0 0.0
    %3725 = vmatprep.subr.mxu0 0.0
    %3726 = vmatpush1.msra.mxu0 0.0
    %3727 = vmatprep.subr.mxu0 0.0
    %3728 = vmatpush1.msra.mxu0 0.0
    %3729 = vmatprep.subr.mxu0 0.0
    %3730 = vmatpush1.msra.mxu0 0.0
    %3731 = vmatprep.subr.mxu0 0.0
    %3732 = vmatpush1.msra.mxu0 0.0
    %3733 = vmatprep.subr.mxu0 0.0
    %3734 = vmatpush1.msra.mxu0 0.0
    %3735 = vmatprep.subr.mxu0 0.0
    %3736 = vmatpush1.msra.mxu0 %v3700
    %3737 = vmatprep.subr.mxu0 0.0
    %3738 = vmatpush2.msra.mxu0 0.0
    %3739 = vmatprep.subr.mxu0 0.0
    %3740 = vmatpush2.msra.mxu0 0.0
    %3741 = vmatprep.subr.mxu0 0.0
    %3742 = vmatpush2.msra.mxu0 0.0
    %3743 = vmatprep.subr.mxu0 0.0
    %3744 = vmatpush2.msra.mxu0 0.0
    %3745 = vmatprep.subr.mxu0 0.0
    %3746 = vmatpush2.msra.mxu0 0.0
    %3747 = vmatprep.subr.mxu0 0.0
    %3748 = vmatpush2.msra.mxu0 0.0
    %3749 = vmatprep.subr.mxu0 0.0
    %3750 = vmatpush2.msra.mxu0 0.0
    %3751 = vmatprep.subr.mxu0 0.0
    %3752 = vmatpush2.msra.mxu0 0.0
    %3753 = vmatprep.subr.mxu0 0.0
    %3754 = vmatpush2.msra.mxu0 0.0
    %3755 = vmatprep.subr.mxu0 0.0
    %3756 = vmatpush2.msra.mxu0 0.0
    %3757 = vmatprep.subr.mxu0 0.0
    %3758 = vmatpush2.msra.mxu0 0.0
    %3759 = vmatprep.subr.mxu0 0.0
    %3760 = vmatpush2.msra.mxu0 0.0
    %3761 = vmatprep.subr.mxu0 0.0
    %3762 = vmatpush2.msra.mxu0 0.0
    %3763 = vmatprep.subr.mxu0 0.0
    %3764 = vmatpush2.msra.mxu0 0.0
    %3765 = vmatprep.subr.mxu0 0.0
    %3766 = vmatpush2.msra.mxu0 0.0
    %3767 = vmatprep.subr.mxu0 0.0
    %3768 = vmatpush2.msra.mxu0 0.0
    %3769 = vmatprep.mubr.f32.mxu0 0.0
    %3770 = vmatmul.mubr.f32.gmra.mxu0 %v3703
    %v3771 = vpop.f32.mrf.mxu0
    %v3772 = vadd.f32 0.0, %v3771
    %v3773 = vpop.f32.mrf.mxu0
    %3774 = vdwg.mxu0
    %v3776 = vsel %vm270, %v3696, 0
    %v3779 = vsel %vm270, %v3772, 0
    %3781 = vmatprep.subr.mxu0 0.0
    %3782 = vmatpush1.msra.mxu0 0.0
    %3783 = vmatprep.subr.mxu0 0.0
    %3784 = vmatpush1.msra.mxu0 0.0
    %3785 = vmatprep.subr.mxu0 0.0
    %3786 = vmatpush1.msra.mxu0 0.0
    %3787 = vmatprep.subr.mxu0 0.0
    %3788 = vmatpush1.msra.mxu0 0.0
    %3789 = vmatprep.subr.mxu0 0.0
    %3790 = vmatpush1.msra.mxu0 0.0
    %3791 = vmatprep.subr.mxu0 0.0
    %3792 = vmatpush1.msra.mxu0 0.0
    %3793 = vmatprep.subr.mxu0 0.0
    %3794 = vmatpush1.msra.mxu0 0.0
    %3795 = vmatprep.subr.mxu0 0.0
    %3796 = vmatpush1.msra.mxu0 0.0
    %3797 = vmatprep.subr.mxu0 0.0
    %3798 = vmatpush1.msra.mxu0 0.0
    %3799 = vmatprep.subr.mxu0 0.0
    %3800 = vmatpush1.msra.mxu0 0.0
    %3801 = vmatprep.subr.mxu0 0.0
    %3802 = vmatpush1.msra.mxu0 0.0
    %3803 = vmatprep.subr.mxu0 0.0
    %3804 = vmatpush1.msra.mxu0 0.0
    %3805 = vmatprep.subr.mxu0 0.0
    %3806 = vmatpush1.msra.mxu0 0.0
    %3807 = vmatprep.subr.mxu0 0.0
    %3808 = vmatpush1.msra.mxu0 0.0
    %3809 = vmatprep.subr.mxu0 0.0
    %3810 = vmatpush1.msra.mxu0 %v2907
    %3811 = vmatprep.subr.mxu0 0.0
    %3812 = vmatpush1.msra.mxu0 %v2906
    %3813 = vmatprep.subr.mxu0 0.0
    %3814 = vmatpush2.msra.mxu0 0.0
    %3815 = vmatprep.subr.mxu0 0.0
    %3816 = vmatpush2.msra.mxu0 0.0
    %3817 = vmatprep.subr.mxu0 0.0
    %3818 = vmatpush2.msra.mxu0 0.0
    %3819 = vmatprep.subr.mxu0 0.0
    %3820 = vmatpush2.msra.mxu0 0.0
    %3821 = vmatprep.subr.mxu0 0.0
    %3822 = vmatpush2.msra.mxu0 0.0
    %3823 = vmatprep.subr.mxu0 0.0
    %3824 = vmatpush2.msra.mxu0 0.0
    %3825 = vmatprep.subr.mxu0 0.0
    %3826 = vmatpush2.msra.mxu0 0.0
    %3827 = vmatprep.subr.mxu0 0.0
    %3828 = vmatpush2.msra.mxu0 0.0
    %3829 = vmatprep.subr.mxu0 0.0
    %3830 = vmatpush2.msra.mxu0 0.0
    %3831 = vmatprep.subr.mxu0 0.0
    %3832 = vmatpush2.msra.mxu0 0.0
    %3833 = vmatprep.subr.mxu0 0.0
    %3834 = vmatpush2.msra.mxu0 0.0
    %3835 = vmatprep.subr.mxu0 0.0
    %3836 = vmatpush2.msra.mxu0 0.0
    %3837 = vmatprep.subr.mxu0 0.0
    %3838 = vmatpush2.msra.mxu0 0.0
    %3839 = vmatprep.subr.mxu0 0.0
    %3840 = vmatpush2.msra.mxu0 0.0
    %3841 = vmatprep.subr.mxu0 0.0
    %3842 = vmatpush2.msra.mxu0 0.0
    %3843 = vmatprep.subr.mxu0 0.0
    %3844 = vmatpush2.msra.mxu0 0.0
    %3845 = vmatprep.mubr.f32.mxu0 0.0
    %3846 = vmatmul.mubr.f32.gmra.mxu0 %v3776
    %v3847 = vpop.f32.mrf.mxu0
    %v3848 = vadd.f32 0.0, %v3847
    %v3849 = vpop.f32.mrf.mxu0
    %3850 = vmatprep.mubr.f32.mxu0 0.0
    %3851 = vmatmul.mubr.f32.gmra.mxu0 %v3779
    %v3852 = vpop.f32.mrf.mxu0
    %v3853 = vadd.f32 0.0, %v3852
    %v3854 = vpop.f32.mrf.mxu0
    %3855 = vdwg.mxu0
    %v3857 = vsel %vm270, %v3260, 0
    %v3860 = vsel %vm270, %v3336, 0
    %3862 = vmatprep.subr.mxu0 0.0
    %3863 = vmatpush1.msra.mxu0 0.0
    %3864 = vmatprep.subr.mxu0 0.0
    %3865 = vmatpush1.msra.mxu0 0.0
    %3866 = vmatprep.subr.mxu0 0.0
    %3867 = vmatpush1.msra.mxu0 0.0
    %3868 = vmatprep.subr.mxu0 0.0
    %3869 = vmatpush1.msra.mxu0 0.0
    %3870 = vmatprep.subr.mxu0 0.0
    %3871 = vmatpush1.msra.mxu0 0.0
    %3872 = vmatprep.subr.mxu0 0.0
    %3873 = vmatpush1.msra.mxu0 0.0
    %3874 = vmatprep.subr.mxu0 0.0
    %3875 = vmatpush1.msra.mxu0 0.0
    %3876 = vmatprep.subr.mxu0 0.0
    %3877 = vmatpush1.msra.mxu0 0.0
    %3878 = vmatprep.subr.mxu0 0.0
    %3879 = vmatpush1.msra.mxu0 0.0
    %3880 = vmatprep.subr.mxu0 0.0
    %3881 = vmatpush1.msra.mxu0 0.0
    %3882 = vmatprep.subr.mxu0 0.0
    %3883 = vmatpush1.msra.mxu0 0.0
    %3884 = vmatprep.subr.mxu0 0.0
    %3885 = vmatpush1.msra.mxu0 0.0
    %3886 = vmatprep.subr.mxu0 0.0
    %3887 = vmatpush1.msra.mxu0 0.0
    %3888 = vmatprep.subr.mxu0 0.0
    %3889 = vmatpush1.msra.mxu0 0.0
    %3890 = vmatprep.subr.mxu0 0.0
    %3891 = vmatpush1.msra.mxu0 %v2905
    %3892 = vmatprep.subr.mxu0 0.0
    %3893 = vmatpush1.msra.mxu0 %v2904
    %3894 = vmatprep.subr.mxu0 0.0
    %3895 = vmatpush2.msra.mxu0 0.0
    %3896 = vmatprep.subr.mxu0 0.0
    %3897 = vmatpush2.msra.mxu0 0.0
    %3898 = vmatprep.subr.mxu0 0.0
    %3899 = vmatpush2.msra.mxu0 0.0
    %3900 = vmatprep.subr.mxu0 0.0
    %3901 = vmatpush2.msra.mxu0 0.0
    %3902 = vmatprep.subr.mxu0 0.0
    %3903 = vmatpush2.msra.mxu0 0.0
    %3904 = vmatprep.subr.mxu0 0.0
    %3905 = vmatpush2.msra.mxu0 0.0
    %3906 = vmatprep.subr.mxu0 0.0
    %3907 = vmatpush2.msra.mxu0 0.0
    %3908 = vmatprep.subr.mxu0 0.0
    %3909 = vmatpush2.msra.mxu0 0.0
    %3910 = vmatprep.subr.mxu0 0.0
    %3911 = vmatpush2.msra.mxu0 0.0
    %3912 = vmatprep.subr.mxu0 0.0
    %3913 = vmatpush2.msra.mxu0 0.0
    %3914 = vmatprep.subr.mxu0 0.0
    %3915 = vmatpush2.msra.mxu0 0.0
    %3916 = vmatprep.subr.mxu0 0.0
    %3917 = vmatpush2.msra.mxu0 0.0
    %3918 = vmatprep.subr.mxu0 0.0
    %3919 = vmatpush2.msra.mxu0 0.0
    %3920 = vmatprep.subr.mxu0 0.0
    %3921 = vmatpush2.msra.mxu0 0.0
    %3922 = vmatprep.subr.mxu0 0.0
    %3923 = vmatpush2.msra.mxu0 0.0
    %3924 = vmatprep.subr.mxu0 0.0
    %3925 = vmatpush2.msra.mxu0 0.0
    %3926 = vmatprep.mubr.f32.mxu0 0.0
    %3927 = vmatmul.mubr.f32.gmra.mxu0 %v3857
    %v3928 = vpop.f32.mrf.mxu0
    %v3929 = vadd.f32 %v3848, %v3928
    %v3930 = vpop.f32.mrf.mxu0
    %3931 = vmatprep.mubr.f32.mxu0 0.0
    %3932 = vmatmul.mubr.f32.gmra.mxu0 %v3860
    %v3933 = vpop.f32.mrf.mxu0
    %v3934 = vadd.f32 %v3853, %v3933
    %v3935 = vpop.f32.mrf.mxu0
    %3936 = vdwg.mxu0
    %v3937 = vadd.f32 %v3929, %v2815
    %v3938 = vadd.f32 %v3934, %v2816
    %s3939 = scalar_lea.vmem %s6, 1
    %v3940 = vld [vmem:[%s3939] sm:$0x1]
    %s3941 = scalar_lea.vmem %s7, 1
    %v3942 = vld [vmem:[%s3941] sm:$0x1]
    %v3943 = vsel %vm181, %v3937, 0.0
    %3944 = vadd.xlane.f32.xlu0 %v3943
    %v3945 = vpop.xlane.xlu0 %3944
    %v3946 = vsel %vm181, %v3938, 0.0
    %3947 = vadd.xlane.f32.xlu0 %v3946
    %v3948 = vpop.xlane.xlu0 %3947
    %v3949 = vmul.f32 %v3945, %v1313
    %v3950 = vmul.f32 %v3948, %v1313
    %v3951 = vsub.f32 %v3937, %v3949
    %v3952 = vsub.f32 %v3938, %v3950
    %v3953 = vmul.f32 %v3951, %v3951
    %v3954 = vmul.f32 %v3952, %v3952
    %v3955 = vsel %vm181, %v3953, 0.0
    %3956 = vadd.xlane.f32.xlu0 %v3955
    %v3957 = vpop.xlane.xlu0 %3956
    %v3958 = vsel %vm181, %v3954, 0.0
    %3959 = vadd.xlane.f32.xlu0 %v3958
    %v3960 = vpop.xlane.xlu0 %3959
    %v3961 = vmul.f32 %v3957, %v1313
    %v3962 = vmul.f32 %v3960, %v1313
    %v3963 = vadd.f32 %v3961, 1e-05
    %v3964 = vadd.f32 %v3962, 1e-05
    %v3965 = vrsqrt.pop %v3963
    %v3966 = vrsqrt.pop %v3964
    %v3967 = vmul.f32 %v3951, %v3965
    %v3968 = vmul.f32 %v3952, %v3966
    %v3970 = vlaneseq
    %v3971 = vshrl.u32 %v3970, 7
    %v3972 = vsub.s32 0, %v3971
    %v3973 = vrot.slane %v3940, %v3972
    %v3975 = vmul.f32 %v3967, %v3973
    %v3976 = vmul.f32 %v3968, %v3973
    %v3978 = vlaneseq
    %v3979 = vshrl.u32 %v3978, 7
    %v3980 = vsub.s32 0, %v3979
    %v3981 = vrot.slane %v3942, %v3980
    %v3983 = vadd.f32 %v3975, %v3981
    %v3984 = vadd.f32 %v3976, %v3981
    %s3985 = scalar_lea.vmem %s8, 32
    %v3986 = vld [vmem:[%s3985] sm:$0xff]
    %v3987 = vld [vmem:[%s3985 + $0x8] sm:$0xff]
    %v3988 = vld [vmem:[%s3985 + $0x10] sm:$0xff]
    %v3989 = vld [vmem:[%s3985 + $0x18] sm:$0xff]
    %v3991 = vsel %vm181, %v3983, 0
    %v3994 = vsel %vm181, %v3984, 0
    %3996 = vmatprep.subr.mxu0 0.0
    %3997 = vmatpush1.msra.mxu0 0.0
    %3998 = vmatprep.subr.mxu0 0.0
    %3999 = vmatpush1.msra.mxu0 0.0
    %4000 = vmatprep.subr.mxu0 0.0
    %4001 = vmatpush1.msra.mxu0 0.0
    %4002 = vmatprep.subr.mxu0 0.0
    %4003 = vmatpush1.msra.mxu0 0.0
    %4004 = vmatprep.subr.mxu0 0.0
    %4005 = vmatpush1.msra.mxu0 0.0
    %4006 = vmatprep.subr.mxu0 0.0
    %4007 = vmatpush1.msra.mxu0 0.0
    %4008 = vmatprep.subr.mxu0 0.0
    %4009 = vmatpush1.msra.mxu0 0.0
    %4010 = vmatprep.subr.mxu0 0.0
    %4011 = vmatpush1.msra.mxu0 0.0
    %4012 = vmatprep.subr.mxu0 0.0
    %4013 = vmatpush1.msra.mxu0 0.0
    %4014 = vmatprep.subr.mxu0 0.0
    %4015 = vmatpush1.msra.mxu0 0.0
    %4016 = vmatprep.subr.mxu0 0.0
    %4017 = vmatpush1.msra.mxu0 0.0
    %4018 = vmatprep.subr.mxu0 0.0
    %4019 = vmatpush1.msra.mxu0 0.0
    %4020 = vmatprep.subr.mxu0 0.0
    %4021 = vmatpush1.msra.mxu0 %v3989
    %4022 = vmatprep.subr.mxu0 0.0
    %4023 = vmatpush1.msra.mxu0 %v3988
    %4024 = vmatprep.subr.mxu0 0.0
    %4025 = vmatpush1.msra.mxu0 %v3987
    %4026 = vmatprep.subr.mxu0 0.0
    %4027 = vmatpush1.msra.mxu0 %v3986
    %4028 = vmatprep.subr.mxu0 0.0
    %4029 = vmatpush2.msra.mxu0 0.0
    %4030 = vmatprep.subr.mxu0 0.0
    %4031 = vmatpush2.msra.mxu0 0.0
    %4032 = vmatprep.subr.mxu0 0.0
    %4033 = vmatpush2.msra.mxu0 0.0
    %4034 = vmatprep.subr.mxu0 0.0
    %4035 = vmatpush2.msra.mxu0 0.0
    %4036 = vmatprep.subr.mxu0 0.0
    %4037 = vmatpush2.msra.mxu0 0.0
    %4038 = vmatprep.subr.mxu0 0.0
    %4039 = vmatpush2.msra.mxu0 0.0
    %4040 = vmatprep.subr.mxu0 0.0
    %4041 = vmatpush2.msra.mxu0 0.0
    %4042 = vmatprep.subr.mxu0 0.0
    %4043 = vmatpush2.msra.mxu0 0.0
    %4044 = vmatprep.subr.mxu0 0.0
    %4045 = vmatpush2.msra.mxu0 0.0
    %4046 = vmatprep.subr.mxu0 0.0
    %4047 = vmatpush2.msra.mxu0 0.0
    %4048 = vmatprep.subr.mxu0 0.0
    %4049 = vmatpush2.msra.mxu0 0.0
    %4050 = vmatprep.subr.mxu0 0.0
    %4051 = vmatpush2.msra.mxu0 0.0
    %4052 = vmatprep.subr.mxu0 0.0
    %4053 = vmatpush2.msra.mxu0 0.0
    %4054 = vmatprep.subr.mxu0 0.0
    %4055 = vmatpush2.msra.mxu0 0.0
    %4056 = vmatprep.subr.mxu0 0.0
    %4057 = vmatpush2.msra.mxu0 0.0
    %4058 = vmatprep.subr.mxu0 0.0
    %4059 = vmatpush2.msra.mxu0 0.0
    %4060 = vmatprep.mubr.f32.mxu0 0.0
    %4061 = vmatmul.mubr.f32.gmra.mxu0 %v3991
    %v4062 = vpop.f32.mrf.mxu0
    %v4063 = vadd.f32 0.0, %v4062
    %v4064 = vpop.f32.mrf.mxu0
    %4065 = vmatprep.mubr.f32.mxu0 0.0
    %4066 = vmatmul.mubr.f32.gmra.mxu0 %v3994
    %v4067 = vpop.f32.mrf.mxu0
    %v4068 = vadd.f32 0.0, %v4067
    %v4069 = vpop.f32.mrf.mxu0
    %4070 = vdwg.mxu0
    %s4071 = scalar_lea.vmem [#allocation5], 32
    %v4072 = vld [vmem:[%s4071] sm:$0xff]
    %v4073 = vld [vmem:[%s4071 + $0x8] sm:$0xff]
    %v4074 = vld [vmem:[%s4071 + $0x10] sm:$0xff]
    %v4075 = vld [vmem:[%s4071 + $0x18] sm:$0xff]
    %4076 = vmatprep.subr.mxu0 0.0
    %4077 = vmatpush1.msra.mxu0 0.0
    %4078 = vmatprep.subr.mxu0 0.0
    %4079 = vmatpush1.msra.mxu0 0.0
    %4080 = vmatprep.subr.mxu0 0.0
    %4081 = vmatpush1.msra.mxu0 0.0
    %4082 = vmatprep.subr.mxu0 0.0
    %4083 = vmatpush1.msra.mxu0 0.0
    %4084 = vmatprep.subr.mxu0 0.0
    %4085 = vmatpush1.msra.mxu0 0.0
    %4086 = vmatprep.subr.mxu0 0.0
    %4087 = vmatpush1.msra.mxu0 0.0
    %4088 = vmatprep.subr.mxu0 0.0
    %4089 = vmatpush1.msra.mxu0 0.0
    %4090 = vmatprep.subr.mxu0 0.0
    %4091 = vmatpush1.msra.mxu0 0.0
    %4092 = vmatprep.subr.mxu0 0.0
    %4093 = vmatpush1.msra.mxu0 0.0
    %4094 = vmatprep.subr.mxu0 0.0
    %4095 = vmatpush1.msra.mxu0 0.0
    %4096 = vmatprep.subr.mxu0 0.0
    %4097 = vmatpush1.msra.mxu0 0.0
    %4098 = vmatprep.subr.mxu0 0.0
    %4099 = vmatpush1.msra.mxu0 0.0
    %4100 = vmatprep.subr.mxu0 0.0
    %4101 = vmatpush1.msra.mxu0 %v4075
    %4102 = vmatprep.subr.mxu0 0.0
    %4103 = vmatpush1.msra.mxu0 %v4074
    %4104 = vmatprep.subr.mxu0 0.0
    %4105 = vmatpush1.msra.mxu0 %v4073
    %4106 = vmatprep.subr.mxu0 0.0
    %4107 = vmatpush1.msra.mxu0 %v4072
    %4108 = vmatprep.subr.mxu0 0.0
    %4109 = vmatpush2.msra.mxu0 0.0
    %4110 = vmatprep.subr.mxu0 0.0
    %4111 = vmatpush2.msra.mxu0 0.0
    %4112 = vmatprep.subr.mxu0 0.0
    %4113 = vmatpush2.msra.mxu0 0.0
    %4114 = vmatprep.subr.mxu0 0.0
    %4115 = vmatpush2.msra.mxu0 0.0
    %4116 = vmatprep.subr.mxu0 0.0
    %4117 = vmatpush2.msra.mxu0 0.0
    %4118 = vmatprep.subr.mxu0 0.0
    %4119 = vmatpush2.msra.mxu0 0.0
    %4120 = vmatprep.subr.mxu0 0.0
    %4121 = vmatpush2.msra.mxu0 0.0
    %4122 = vmatprep.subr.mxu0 0.0
    %4123 = vmatpush2.msra.mxu0 0.0
    %4124 = vmatprep.subr.mxu0 0.0
    %4125 = vmatpush2.msra.mxu0 0.0
    %4126 = vmatprep.subr.mxu0 0.0
    %4127 = vmatpush2.msra.mxu0 0.0
    %4128 = vmatprep.subr.mxu0 0.0
    %4129 = vmatpush2.msra.mxu0 0.0
    %4130 = vmatprep.subr.mxu0 0.0
    %4131 = vmatpush2.msra.mxu0 0.0
    %4132 = vmatprep.subr.mxu0 0.0
    %4133 = vmatpush2.msra.mxu0 0.0
    %4134 = vmatprep.subr.mxu0 0.0
    %4135 = vmatpush2.msra.mxu0 0.0
    %4136 = vmatprep.subr.mxu0 0.0
    %4137 = vmatpush2.msra.mxu0 0.0
    %4138 = vmatprep.subr.mxu0 0.0
    %4139 = vmatpush2.msra.mxu0 0.0
    %4140 = vmatprep.mubr.f32.mxu0 0.0
    %4141 = vmatmul.mubr.f32.gmra.mxu0 %v1440
    %v4142 = vpop.f32.mrf.mxu0
    %v4143 = vadd.f32 0.0, %v4142
    %v4144 = vpop.f32.mrf.mxu0
    %4145 = vmatprep.mubr.f32.mxu0 0.0
    %4146 = vmatmul.mubr.f32.gmra.mxu0 %v1443
    %v4147 = vpop.f32.mrf.mxu0
    %v4148 = vadd.f32 0.0, %v4147
    %v4149 = vpop.f32.mrf.mxu0
    %4150 = vdwg.mxu0
    %s4151 = scalar_lea.vmem [#allocation7], 32
    %v4152 = vld [vmem:[%s4151] sm:$0xff]
    %v4153 = vld [vmem:[%s4151 + $0x8] sm:$0xff]
    %v4154 = vld [vmem:[%s4151 + $0x10] sm:$0xff]
    %v4155 = vld [vmem:[%s4151 + $0x18] sm:$0xff]
    %v4157 = vsel %vm270, %v4063, 0
    %v4160 = vsel %vm270, %v4143, 0
    %4162 = vmatprep.subr.mxu0 0.0
    %4163 = vmatpush1.xpose.msra.mxu0 0.0
    %4164 = vmatprep.subr.mxu0 0.0
    %4165 = vmatpush1.xpose.msra.mxu0 0.0
    %4166 = vmatprep.subr.mxu0 0.0
    %4167 = vmatpush1.xpose.msra.mxu0 0.0
    %4168 = vmatprep.subr.mxu0 0.0
    %4169 = vmatpush1.xpose.msra.mxu0 0.0
    %4170 = vmatprep.subr.mxu0 0.0
    %4171 = vmatpush1.xpose.msra.mxu0 0.0
    %4172 = vmatprep.subr.mxu0 0.0
    %4173 = vmatpush1.xpose.msra.mxu0 0.0
    %4174 = vmatprep.subr.mxu0 0.0
    %4175 = vmatpush1.xpose.msra.mxu0 0.0
    %4176 = vmatprep.subr.mxu0 0.0
    %4177 = vmatpush1.xpose.msra.mxu0 0.0
    %4178 = vmatprep.subr.mxu0 0.0
    %4179 = vmatpush1.xpose.msra.mxu0 0.0
    %4180 = vmatprep.subr.mxu0 0.0
    %4181 = vmatpush1.xpose.msra.mxu0 0.0
    %4182 = vmatprep.subr.mxu0 0.0
    %4183 = vmatpush1.xpose.msra.mxu0 0.0
    %4184 = vmatprep.subr.mxu0 0.0
    %4185 = vmatpush1.xpose.msra.mxu0 0.0
    %4186 = vmatprep.subr.mxu0 0.0
    %4187 = vmatpush1.xpose.msra.mxu0 0.0
    %4188 = vmatprep.subr.mxu0 0.0
    %4189 = vmatpush1.xpose.msra.mxu0 0.0
    %4190 = vmatprep.subr.mxu0 0.0
    %4191 = vmatpush1.xpose.msra.mxu0 0.0
    %4192 = vmatprep.subr.mxu0 0.0
    %4193 = vmatpush1.xpose.msra.mxu0 %v4160
    %4194 = vmatprep.subr.mxu0 0.0
    %4195 = vmatpush2.xpose.msra.mxu0 0.0
    %4196 = vmatprep.subr.mxu0 0.0
    %4197 = vmatpush2.xpose.msra.mxu0 0.0
    %4198 = vmatprep.subr.mxu0 0.0
    %4199 = vmatpush2.xpose.msra.mxu0 0.0
    %4200 = vmatprep.subr.mxu0 0.0
    %4201 = vmatpush2.xpose.msra.mxu0 0.0
    %4202 = vmatprep.subr.mxu0 0.0
    %4203 = vmatpush2.xpose.msra.mxu0 0.0
    %4204 = vmatprep.subr.mxu0 0.0
    %4205 = vmatpush2.xpose.msra.mxu0 0.0
    %4206 = vmatprep.subr.mxu0 0.0
    %4207 = vmatpush2.xpose.msra.mxu0 0.0
    %4208 = vmatprep.subr.mxu0 0.0
    %4209 = vmatpush2.xpose.msra.mxu0 0.0
    %4210 = vmatprep.subr.mxu0 0.0
    %4211 = vmatpush2.xpose.msra.mxu0 0.0
    %4212 = vmatprep.subr.mxu0 0.0
    %4213 = vmatpush2.xpose.msra.mxu0 0.0
    %4214 = vmatprep.subr.mxu0 0.0
    %4215 = vmatpush2.xpose.msra.mxu0 0.0
    %4216 = vmatprep.subr.mxu0 0.0
    %4217 = vmatpush2.xpose.msra.mxu0 0.0
    %4218 = vmatprep.subr.mxu0 0.0
    %4219 = vmatpush2.xpose.msra.mxu0 0.0
    %4220 = vmatprep.subr.mxu0 0.0
    %4221 = vmatpush2.xpose.msra.mxu0 0.0
    %4222 = vmatprep.subr.mxu0 0.0
    %4223 = vmatpush2.xpose.msra.mxu0 0.0
    %4224 = vmatprep.subr.mxu0 0.0
    %4225 = vmatpush2.xpose.msra.mxu0 0.0
    %4226 = vmatprep.mubr.f32.mxu0 0.0
    %4227 = vmatmul.mubr.f32.gmra.mxu0 %v4157
    %v4228 = vpop.f32.mrf.mxu0
    %v4229 = vadd.f32 %v175, %v4228
    %v4230 = vpop.f32.mrf.mxu0
    %4231 = vdwg.mxu0
    %v4233 = vsel %vm270, %v4068, 0
    %v4236 = vsel %vm270, %v4148, 0
    %4238 = vmatprep.subr.mxu0 0.0
    %4239 = vmatpush1.xpose.msra.mxu0 0.0
    %4240 = vmatprep.subr.mxu0 0.0
    %4241 = vmatpush1.xpose.msra.mxu0 0.0
    %4242 = vmatprep.subr.mxu0 0.0
    %4243 = vmatpush1.xpose.msra.mxu0 0.0
    %4244 = vmatprep.subr.mxu0 0.0
    %4245 = vmatpush1.xpose.msra.mxu0 0.0
    %4246 = vmatprep.subr.mxu0 0.0
    %4247 = vmatpush1.xpose.msra.mxu0 0.0
    %4248 = vmatprep.subr.mxu0 0.0
    %4249 = vmatpush1.xpose.msra.mxu0 0.0
    %4250 = vmatprep.subr.mxu0 0.0
    %4251 = vmatpush1.xpose.msra.mxu0 0.0
    %4252 = vmatprep.subr.mxu0 0.0
    %4253 = vmatpush1.xpose.msra.mxu0 0.0
    %4254 = vmatprep.subr.mxu0 0.0
    %4255 = vmatpush1.xpose.msra.mxu0 0.0
    %4256 = vmatprep.subr.mxu0 0.0
    %4257 = vmatpush1.xpose.msra.mxu0 0.0
    %4258 = vmatprep.subr.mxu0 0.0
    %4259 = vmatpush1.xpose.msra.mxu0 0.0
    %4260 = vmatprep.subr.mxu0 0.0
    %4261 = vmatpush1.xpose.msra.mxu0 0.0
    %4262 = vmatprep.subr.mxu0 0.0
    %4263 = vmatpush1.xpose.msra.mxu0 0.0
    %4264 = vmatprep.subr.mxu0 0.0
    %4265 = vmatpush1.xpose.msra.mxu0 0.0
    %4266 = vmatprep.subr.mxu0 0.0
    %4267 = vmatpush1.xpose.msra.mxu0 0.0
    %4268 = vmatprep.subr.mxu0 0.0
    %4269 = vmatpush1.xpose.msra.mxu0 %v4236
    %4270 = vmatprep.subr.mxu0 0.0
    %4271 = vmatpush2.xpose.msra.mxu0 0.0
    %4272 = vmatprep.subr.mxu0 0.0
    %4273 = vmatpush2.xpose.msra.mxu0 0.0
    %4274 = vmatprep.subr.mxu0 0.0
    %4275 = vmatpush2.xpose.msra.mxu0 0.0
    %4276 = vmatprep.subr.mxu0 0.0
    %4277 = vmatpush2.xpose.msra.mxu0 0.0
    %4278 = vmatprep.subr.mxu0 0.0
    %4279 = vmatpush2.xpose.msra.mxu0 0.0
    %4280 = vmatprep.subr.mxu0 0.0
    %4281 = vmatpush2.xpose.msra.mxu0 0.0
    %4282 = vmatprep.subr.mxu0 0.0
    %4283 = vmatpush2.xpose.msra.mxu0 0.0
    %4284 = vmatprep.subr.mxu0 0.0
    %4285 = vmatpush2.xpose.msra.mxu0 0.0
    %4286 = vmatprep.subr.mxu0 0.0
    %4287 = vmatpush2.xpose.msra.mxu0 0.0
    %4288 = vmatprep.subr.mxu0 0.0
    %4289 = vmatpush2.xpose.msra.mxu0 0.0
    %4290 = vmatprep.subr.mxu0 0.0
    %4291 = vmatpush2.xpose.msra.mxu0 0.0
    %4292 = vmatprep.subr.mxu0 0.0
    %4293 = vmatpush2.xpose.msra.mxu0 0.0
    %4294 = vmatprep.subr.mxu0 0.0
    %4295 = vmatpush2.xpose.msra.mxu0 0.0
    %4296 = vmatprep.subr.mxu0 0.0
    %4297 = vmatpush2.xpose.msra.mxu0 0.0
    %4298 = vmatprep.subr.mxu0 0.0
    %4299 = vmatpush2.xpose.msra.mxu0 0.0
    %4300 = vmatprep.subr.mxu0 0.0
    %4301 = vmatpush2.xpose.msra.mxu0 0.0
    %4302 = vmatprep.mubr.f32.mxu0 0.0
    %4303 = vmatmul.mubr.f32.gmra.mxu0 %v4233
    %v4304 = vpop.f32.mrf.mxu0
    %v4305 = vadd.f32 %v176, %v4304
    %v4306 = vpop.f32.mrf.mxu0
    %4307 = vdwg.mxu0
    %v4308 = vsel %vm422, %v4229, -inf
    %4309 = vmax.xlane.f32.xlu0 %v4308
    %v4310 = vpop.xlane.xlu0 %4309
    %v4311 = vsel %vm422, %v4305, -inf
    %4312 = vmax.xlane.f32.xlu0 %v4311
    %v4313 = vpop.xlane.xlu0 %4312
    %v4314 = vsub.f32 %v4229, %v4310
    %v4315 = vsub.f32 %v4305, %v4313
    %v4316 = vmul.f32 %v4314, 1.442695
    %v4317 = vpow.pop %v4316
    %v4318 = vmul.f32 %v4315, 1.442695
    %v4319 = vpow.pop %v4318
    %v4320 = vsel %vm422, %v4317, 0.0
    %4321 = vadd.xlane.f32.xlu0 %v4320
    %v4322 = vpop.xlane.xlu0 %4321
    %v4323 = vsel %vm422, %v4319, 0.0
    %4324 = vadd.xlane.f32.xlu0 %v4323
    %v4325 = vpop.xlane.xlu0 %4324
    %v4326 = vrcp.pop %v4322
    %v4327 = vmul.f32 %v4317, %v4326
    %v4328 = vrcp.pop %v4325
    %v4329 = vmul.f32 %v4319, %v4328
    %v4330 = vcombine.high %v4327, 0.0
    %v4332 = vunpack.c.l.s4 1983009808
    %v4333 = vunpack.c.0.s8 %v4332
    %v4334 = vlaneseq
    %v4335 = vshrl.u32 %v4334, 7
    %v4336 = vsub.s32 %v4333, %v4335
    %v4337 = vrot.slane %v4327, %v4336
    %v4339 = vunpack.c.l.s4 1983009808
    %v4340 = vunpack.c.0.s8 %v4339
    %v4341 = vlaneseq
    %v4342 = vshrl.u32 %v4341, 7
    %v4343 = vsub.s32 %v4340, %v4342
    %v4344 = vrot.slane %v4330, %v4343
    %v4345 = vcombine.high %v4329, 0.0
    %v4347 = vunpack.c.l.s4 1983009808
    %v4348 = vunpack.c.0.s8 %v4347
    %v4349 = vlaneseq
    %v4350 = vshrl.u32 %v4349, 7
    %v4351 = vsub.s32 %v4348, %v4350
    %v4352 = vrot.slane %v4329, %v4351
    %v4354 = vunpack.c.l.s4 1983009808
    %v4355 = vunpack.c.0.s8 %v4354
    %v4356 = vlaneseq
    %v4357 = vshrl.u32 %v4356, 7
    %v4358 = vsub.s32 %v4355, %v4357
    %v4359 = vrot.slane %v4345, %v4358
    %v4360 = vcombine.low %v4337, %v4352
    %v4361 = vcombine.high %v4337, %v4352
    %v4363 = vunpack.c.l.s4 1934713408
    %v4364 = vunpack.c.0.s8 %v4363
    %v4365 = vlaneseq
    %v4366 = vshrl.u32 %v4365, 7
    %v4367 = vsub.s32 %v4364, %v4366
    %v4368 = vrot.slane %v4360, %v4367
    %v4370 = vunpack.c.l.s4 1934713408
    %v4371 = vunpack.c.0.s8 %v4370
    %v4372 = vlaneseq
    %v4373 = vshrl.u32 %v4372, 7
    %v4374 = vsub.s32 %v4371, %v4373
    %v4375 = vrot.slane %v4361, %v4374
    %v4376 = vcombine.low %v4344, %v4359
    %v4377 = vcombine.high %v4344, %v4359
    %v4379 = vunpack.c.l.s4 1934713408
    %v4380 = vunpack.c.0.s8 %v4379
    %v4381 = vlaneseq
    %v4382 = vshrl.u32 %v4381, 7
    %v4383 = vsub.s32 %v4380, %v4382
    %v4384 = vrot.slane %v4376, %v4383
    %v4386 = vunpack.c.l.s4 1934713408
    %v4387 = vunpack.c.0.s8 %v4386
    %v4388 = vlaneseq
    %v4389 = vshrl.u32 %v4388, 7
    %v4390 = vsub.s32 %v4387, %v4389
    %v4391 = vrot.slane %v4377, %v4390
    %v4392 = vcombine.high %v4368, 0.0
    %v4393 = vcombine.high %v4375, 0.0
    %v4394 = vcombine.high %v4384, 0.0
    %v4395 = vcombine.high %v4391, 0.0
    %4397 = vrot.lane.b32.xlu0 %v4392, 8
    %v4398 = vpop.permute.xlu0 %4397
    %4401 = vrot.lane.b32.xlu0 %v4375, 16
    %v4402 = vpop.permute.xlu0 %4401
    %4405 = vrot.lane.b32.xlu0 %v4393, 24
    %v4406 = vpop.permute.xlu0 %4405
    %4409 = vrot.lane.b32.xlu0 %v4384, 32
    %v4410 = vpop.permute.xlu0 %4409
    %4413 = vrot.lane.b32.xlu0 %v4394, 40
    %v4414 = vpop.permute.xlu0 %4413
    %4417 = vrot.lane.b32.xlu0 %v4391, 48
    %v4418 = vpop.permute.xlu0 %4417
    %4421 = vrot.lane.b32.xlu0 %v4395, 56
    %v4422 = vpop.permute.xlu0 %4421
    %v4424 = vsel %vm422, %v4368, %v4398
    %v4425 = vsel %vm270, %v4424, %v4402
    %v4426 = vsel %vm541, %v4425, %v4406
    %v4427 = vsel %vm181, %v4426, %v4410
    %v4428 = vsel %vm544, %v4427, %v4414
    %v4429 = vsel %vm546, %v4428, %v4418
    %v4430 = vsel %vm548, %v4429, %v4422
    %s4431 = scalar_lea.vmem %s19, 2
    %4432 = vst.msk [vmem:[%s4431] sm:$0x3] %vm550, %v4430
    %4433 = vrot.lane.b32.xlu0 %v4143, 96
    %v4434 = vpop.permute.xlu0 %4433
    %v4437 = vsel %vm422, %v4327, 0
    %4439 = vmatprep.subr.mxu0 0.0
    %4440 = vmatpush1.msra.mxu0 0.0
    %4441 = vmatprep.subr.mxu0 0.0
    %4442 = vmatpush1.msra.mxu0 0.0
    %4443 = vmatprep.subr.mxu0 0.0
    %4444 = vmatpush1.msra.mxu0 0.0
    %4445 = vmatprep.subr.mxu0 0.0
    %4446 = vmatpush1.msra.mxu0 0.0
    %4447 = vmatprep.subr.mxu0 0.0
    %4448 = vmatpush1.msra.mxu0 0.0
    %4449 = vmatprep.subr.mxu0 0.0
    %4450 = vmatpush1.msra.mxu0 0.0
    %4451 = vmatprep.subr.mxu0 0.0
    %4452 = vmatpush1.msra.mxu0 0.0
    %4453 = vmatprep.subr.mxu0 0.0
    %4454 = vmatpush1.msra.mxu0 0.0
    %4455 = vmatprep.subr.mxu0 0.0
    %4456 = vmatpush1.msra.mxu0 0.0
    %4457 = vmatprep.subr.mxu0 0.0
    %4458 = vmatpush1.msra.mxu0 0.0
    %4459 = vmatprep.subr.mxu0 0.0
    %4460 = vmatpush1.msra.mxu0 0.0
    %4461 = vmatprep.subr.mxu0 0.0
    %4462 = vmatpush1.msra.mxu0 0.0
    %4463 = vmatprep.subr.mxu0 0.0
    %4464 = vmatpush1.msra.mxu0 0.0
    %4465 = vmatprep.subr.mxu0 0.0
    %4466 = vmatpush1.msra.mxu0 0.0
    %4467 = vmatprep.subr.mxu0 0.0
    %4468 = vmatpush1.msra.mxu0 0.0
    %4469 = vmatprep.subr.mxu0 0.0
    %4470 = vmatpush1.msra.mxu0 %v4434
    %4471 = vmatprep.subr.mxu0 0.0
    %4472 = vmatpush2.msra.mxu0 0.0
    %4473 = vmatprep.subr.mxu0 0.0
    %4474 = vmatpush2.msra.mxu0 0.0
    %4475 = vmatprep.subr.mxu0 0.0
    %4476 = vmatpush2.msra.mxu0 0.0
    %4477 = vmatprep.subr.mxu0 0.0
    %4478 = vmatpush2.msra.mxu0 0.0
    %4479 = vmatprep.subr.mxu0 0.0
    %4480 = vmatpush2.msra.mxu0 0.0
    %4481 = vmatprep.subr.mxu0 0.0
    %4482 = vmatpush2.msra.mxu0 0.0
    %4483 = vmatprep.subr.mxu0 0.0
    %4484 = vmatpush2.msra.mxu0 0.0
    %4485 = vmatprep.subr.mxu0 0.0
    %4486 = vmatpush2.msra.mxu0 0.0
    %4487 = vmatprep.subr.mxu0 0.0
    %4488 = vmatpush2.msra.mxu0 0.0
    %4489 = vmatprep.subr.mxu0 0.0
    %4490 = vmatpush2.msra.mxu0 0.0
    %4491 = vmatprep.subr.mxu0 0.0
    %4492 = vmatpush2.msra.mxu0 0.0
    %4493 = vmatprep.subr.mxu0 0.0
    %4494 = vmatpush2.msra.mxu0 0.0
    %4495 = vmatprep.subr.mxu0 0.0
    %4496 = vmatpush2.msra.mxu0 0.0
    %4497 = vmatprep.subr.mxu0 0.0
    %4498 = vmatpush2.msra.mxu0 0.0
    %4499 = vmatprep.subr.mxu0 0.0
    %4500 = vmatpush2.msra.mxu0 0.0
    %4501 = vmatprep.subr.mxu0 0.0
    %4502 = vmatpush2.msra.mxu0 0.0
    %4503 = vmatprep.mubr.f32.mxu0 0.0
    %4504 = vmatmul.mubr.f32.gmra.mxu0 %v4437
    %v4505 = vpop.f32.mrf.mxu0
    %v4506 = vadd.f32 0.0, %v4505
    %v4507 = vpop.f32.mrf.mxu0
    %4508 = vdwg.mxu0
    %4509 = vrot.lane.b32.xlu0 %v4148, 96
    %v4510 = vpop.permute.xlu0 %4509
    %v4513 = vsel %vm422, %v4329, 0
    %4515 = vmatprep.subr.mxu0 0.0
    %4516 = vmatpush1.msra.mxu0 0.0
    %4517 = vmatprep.subr.mxu0 0.0
    %4518 = vmatpush1.msra.mxu0 0.0
    %4519 = vmatprep.subr.mxu0 0.0
    %4520 = vmatpush1.msra.mxu0 0.0
    %4521 = vmatprep.subr.mxu0 0.0
    %4522 = vmatpush1.msra.mxu0 0.0
    %4523 = vmatprep.subr.mxu0 0.0
    %4524 = vmatpush1.msra.mxu0 0.0
    %4525 = vmatprep.subr.mxu0 0.0
    %4526 = vmatpush1.msra.mxu0 0.0
    %4527 = vmatprep.subr.mxu0 0.0
    %4528 = vmatpush1.msra.mxu0 0.0
    %4529 = vmatprep.subr.mxu0 0.0
    %4530 = vmatpush1.msra.mxu0 0.0
    %4531 = vmatprep.subr.mxu0 0.0
    %4532 = vmatpush1.msra.mxu0 0.0
    %4533 = vmatprep.subr.mxu0 0.0
    %4534 = vmatpush1.msra.mxu0 0.0
    %4535 = vmatprep.subr.mxu0 0.0
    %4536 = vmatpush1.msra.mxu0 0.0
    %4537 = vmatprep.subr.mxu0 0.0
    %4538 = vmatpush1.msra.mxu0 0.0
    %4539 = vmatprep.subr.mxu0 0.0
    %4540 = vmatpush1.msra.mxu0 0.0
    %4541 = vmatprep.subr.mxu0 0.0
    %4542 = vmatpush1.msra.mxu0 0.0
    %4543 = vmatprep.subr.mxu0 0.0
    %4544 = vmatpush1.msra.mxu0 0.0
    %4545 = vmatprep.subr.mxu0 0.0
    %4546 = vmatpush1.msra.mxu0 %v4510
    %4547 = vmatprep.subr.mxu0 0.0
    %4548 = vmatpush2.msra.mxu0 0.0
    %4549 = vmatprep.subr.mxu0 0.0
    %4550 = vmatpush2.msra.mxu0 0.0
    %4551 = vmatprep.subr.mxu0 0.0
    %4552 = vmatpush2.msra.mxu0 0.0
    %4553 = vmatprep.subr.mxu0 0.0
    %4554 = vmatpush2.msra.mxu0 0.0
    %4555 = vmatprep.subr.mxu0 0.0
    %4556 = vmatpush2.msra.mxu0 0.0
    %4557 = vmatprep.subr.mxu0 0.0
    %4558 = vmatpush2.msra.mxu0 0.0
    %4559 = vmatprep.subr.mxu0 0.0
    %4560 = vmatpush2.msra.mxu0 0.0
    %4561 = vmatprep.subr.mxu0 0.0
    %4562 = vmatpush2.msra.mxu0 0.0
    %4563 = vmatprep.subr.mxu0 0.0
    %4564 = vmatpush2.msra.mxu0 0.0
    %4565 = vmatprep.subr.mxu0 0.0
    %4566 = vmatpush2.msra.mxu0 0.0
    %4567 = vmatprep.subr.mxu0 0.0
    %4568 = vmatpush2.msra.mxu0 0.0
    %4569 = vmatprep.subr.mxu0 0.0
    %4570 = vmatpush2.msra.mxu0 0.0
    %4571 = vmatprep.subr.mxu0 0.0
    %4572 = vmatpush2.msra.mxu0 0.0
    %4573 = vmatprep.subr.mxu0 0.0
    %4574 = vmatpush2.msra.mxu0 0.0
    %4575 = vmatprep.subr.mxu0 0.0
    %4576 = vmatpush2.msra.mxu0 0.0
    %4577 = vmatprep.subr.mxu0 0.0
    %4578 = vmatpush2.msra.mxu0 0.0
    %4579 = vmatprep.mubr.f32.mxu0 0.0
    %4580 = vmatmul.mubr.f32.gmra.mxu0 %v4513
    %v4581 = vpop.f32.mrf.mxu0
    %v4582 = vadd.f32 0.0, %v4581
    %v4583 = vpop.f32.mrf.mxu0
    %4584 = vdwg.mxu0
    %4585 = vrot.lane.b32.xlu0 %v4063, 112
    %v4586 = vpop.permute.xlu0 %4585
    %4587 = vrot.lane.b32.xlu0 %v4143, 112
    %v4588 = vpop.permute.xlu0 %4587
    %v4589 = vsel %vm270, %v4586, 0
    %v4591 = vsel %vm270, %v4588, 0
    %4593 = vmatprep.subr.mxu0 0.0
    %4594 = vmatpush1.xpose.msra.mxu0 0.0
    %4595 = vmatprep.subr.mxu0 0.0
    %4596 = vmatpush1.xpose.msra.mxu0 0.0
    %4597 = vmatprep.subr.mxu0 0.0
    %4598 = vmatpush1.xpose.msra.mxu0 0.0
    %4599 = vmatprep.subr.mxu0 0.0
    %4600 = vmatpush1.xpose.msra.mxu0 0.0
    %4601 = vmatprep.subr.mxu0 0.0
    %4602 = vmatpush1.xpose.msra.mxu0 0.0
    %4603 = vmatprep.subr.mxu0 0.0
    %4604 = vmatpush1.xpose.msra.mxu0 0.0
    %4605 = vmatprep.subr.mxu0 0.0
    %4606 = vmatpush1.xpose.msra.mxu0 0.0
    %4607 = vmatprep.subr.mxu0 0.0
    %4608 = vmatpush1.xpose.msra.mxu0 0.0
    %4609 = vmatprep.subr.mxu0 0.0
    %4610 = vmatpush1.xpose.msra.mxu0 0.0
    %4611 = vmatprep.subr.mxu0 0.0
    %4612 = vmatpush1.xpose.msra.mxu0 0.0
    %4613 = vmatprep.subr.mxu0 0.0
    %4614 = vmatpush1.xpose.msra.mxu0 0.0
    %4615 = vmatprep.subr.mxu0 0.0
    %4616 = vmatpush1.xpose.msra.mxu0 0.0
    %4617 = vmatprep.subr.mxu0 0.0
    %4618 = vmatpush1.xpose.msra.mxu0 0.0
    %4619 = vmatprep.subr.mxu0 0.0
    %4620 = vmatpush1.xpose.msra.mxu0 0.0
    %4621 = vmatprep.subr.mxu0 0.0
    %4622 = vmatpush1.xpose.msra.mxu0 0.0
    %4623 = vmatprep.subr.mxu0 0.0
    %4624 = vmatpush1.xpose.msra.mxu0 %v4591
    %4625 = vmatprep.subr.mxu0 0.0
    %4626 = vmatpush2.xpose.msra.mxu0 0.0
    %4627 = vmatprep.subr.mxu0 0.0
    %4628 = vmatpush2.xpose.msra.mxu0 0.0
    %4629 = vmatprep.subr.mxu0 0.0
    %4630 = vmatpush2.xpose.msra.mxu0 0.0
    %4631 = vmatprep.subr.mxu0 0.0
    %4632 = vmatpush2.xpose.msra.mxu0 0.0
    %4633 = vmatprep.subr.mxu0 0.0
    %4634 = vmatpush2.xpose.msra.mxu0 0.0
    %4635 = vmatprep.subr.mxu0 0.0
    %4636 = vmatpush2.xpose.msra.mxu0 0.0
    %4637 = vmatprep.subr.mxu0 0.0
    %4638 = vmatpush2.xpose.msra.mxu0 0.0
    %4639 = vmatprep.subr.mxu0 0.0
    %4640 = vmatpush2.xpose.msra.mxu0 0.0
    %4641 = vmatprep.subr.mxu0 0.0
    %4642 = vmatpush2.xpose.msra.mxu0 0.0
    %4643 = vmatprep.subr.mxu0 0.0
    %4644 = vmatpush2.xpose.msra.mxu0 0.0
    %4645 = vmatprep.subr.mxu0 0.0
    %4646 = vmatpush2.xpose.msra.mxu0 0.0
    %4647 = vmatprep.subr.mxu0 0.0
    %4648 = vmatpush2.xpose.msra.mxu0 0.0
    %4649 = vmatprep.subr.mxu0 0.0
    %4650 = vmatpush2.xpose.msra.mxu0 0.0
    %4651 = vmatprep.subr.mxu0 0.0
    %4652 = vmatpush2.xpose.msra.mxu0 0.0
    %4653 = vmatprep.subr.mxu0 0.0
    %4654 = vmatpush2.xpose.msra.mxu0 0.0
    %4655 = vmatprep.subr.mxu0 0.0
    %4656 = vmatpush2.xpose.msra.mxu0 0.0
    %4657 = vmatprep.mubr.f32.mxu0 0.0
    %4658 = vmatmul.mubr.f32.gmra.mxu0 %v4589
    %v4659 = vpop.f32.mrf.mxu0
    %v4660 = vadd.f32 %v175, %v4659
    %v4661 = vpop.f32.mrf.mxu0
    %4662 = vdwg.mxu0
    %4663 = vrot.lane.b32.xlu0 %v4068, 112
    %v4664 = vpop.permute.xlu0 %4663
    %4665 = vrot.lane.b32.xlu0 %v4148, 112
    %v4666 = vpop.permute.xlu0 %4665
    %v4667 = vsel %vm270, %v4664, 0
    %v4669 = vsel %vm270, %v4666, 0
    %4671 = vmatprep.subr.mxu0 0.0
    %4672 = vmatpush1.xpose.msra.mxu0 0.0
    %4673 = vmatprep.subr.mxu0 0.0
    %4674 = vmatpush1.xpose.msra.mxu0 0.0
    %4675 = vmatprep.subr.mxu0 0.0
    %4676 = vmatpush1.xpose.msra.mxu0 0.0
    %4677 = vmatprep.subr.mxu0 0.0
    %4678 = vmatpush1.xpose.msra.mxu0 0.0
    %4679 = vmatprep.subr.mxu0 0.0
    %4680 = vmatpush1.xpose.msra.mxu0 0.0
    %4681 = vmatprep.subr.mxu0 0.0
    %4682 = vmatpush1.xpose.msra.mxu0 0.0
    %4683 = vmatprep.subr.mxu0 0.0
    %4684 = vmatpush1.xpose.msra.mxu0 0.0
    %4685 = vmatprep.subr.mxu0 0.0
    %4686 = vmatpush1.xpose.msra.mxu0 0.0
    %4687 = vmatprep.subr.mxu0 0.0
    %4688 = vmatpush1.xpose.msra.mxu0 0.0
    %4689 = vmatprep.subr.mxu0 0.0
    %4690 = vmatpush1.xpose.msra.mxu0 0.0
    %4691 = vmatprep.subr.mxu0 0.0
    %4692 = vmatpush1.xpose.msra.mxu0 0.0
    %4693 = vmatprep.subr.mxu0 0.0
    %4694 = vmatpush1.xpose.msra.mxu0 0.0
    %4695 = vmatprep.subr.mxu0 0.0
    %4696 = vmatpush1.xpose.msra.mxu0 0.0
    %4697 = vmatprep.subr.mxu0 0.0
    %4698 = vmatpush1.xpose.msra.mxu0 0.0
    %4699 = vmatprep.subr.mxu0 0.0
    %4700 = vmatpush1.xpose.msra.mxu0 0.0
    %4701 = vmatprep.subr.mxu0 0.0
    %4702 = vmatpush1.xpose.msra.mxu0 %v4669
    %4703 = vmatprep.subr.mxu0 0.0
    %4704 = vmatpush2.xpose.msra.mxu0 0.0
    %4705 = vmatprep.subr.mxu0 0.0
    %4706 = vmatpush2.xpose.msra.mxu0 0.0
    %4707 = vmatprep.subr.mxu0 0.0
    %4708 = vmatpush2.xpose.msra.mxu0 0.0
    %4709 = vmatprep.subr.mxu0 0.0
    %4710 = vmatpush2.xpose.msra.mxu0 0.0
    %4711 = vmatprep.subr.mxu0 0.0
    %4712 = vmatpush2.xpose.msra.mxu0 0.0
    %4713 = vmatprep.subr.mxu0 0.0
    %4714 = vmatpush2.xpose.msra.mxu0 0.0
    %4715 = vmatprep.subr.mxu0 0.0
    %4716 = vmatpush2.xpose.msra.mxu0 0.0
    %4717 = vmatprep.subr.mxu0 0.0
    %4718 = vmatpush2.xpose.msra.mxu0 0.0
    %4719 = vmatprep.subr.mxu0 0.0
    %4720 = vmatpush2.xpose.msra.mxu0 0.0
    %4721 = vmatprep.subr.mxu0 0.0
    %4722 = vmatpush2.xpose.msra.mxu0 0.0
    %4723 = vmatprep.subr.mxu0 0.0
    %4724 = vmatpush2.xpose.msra.mxu0 0.0
    %4725 = vmatprep.subr.mxu0 0.0
    %4726 = vmatpush2.xpose.msra.mxu0 0.0
    %4727 = vmatprep.subr.mxu0 0.0
    %4728 = vmatpush2.xpose.msra.mxu0 0.0
    %4729 = vmatprep.subr.mxu0 0.0
    %4730 = vmatpush2.xpose.msra.mxu0 0.0
    %4731 = vmatprep.subr.mxu0 0.0
    %4732 = vmatpush2.xpose.msra.mxu0 0.0
    %4733 = vmatprep.subr.mxu0 0.0
    %4734 = vmatpush2.xpose.msra.mxu0 0.0
    %4735 = vmatprep.mubr.f32.mxu0 0.0
    %4736 = vmatmul.mubr.f32.gmra.mxu0 %v4667
    %v4737 = vpop.f32.mrf.mxu0
    %v4738 = vadd.f32 %v176, %v4737
    %v4739 = vpop.f32.mrf.mxu0
    %4740 = vdwg.mxu0
    %v4741 = vsel %vm422, %v4660, -inf
    %4742 = vmax.xlane.f32.xlu0 %v4741
    %v4743 = vpop.xlane.xlu0 %4742
    %v4744 = vsel %vm422, %v4738, -inf
    %4745 = vmax.xlane.f32.xlu0 %v4744
    %v4746 = vpop.xlane.xlu0 %4745
    %v4747 = vsub.f32 %v4660, %v4743
    %v4748 = vsub.f32 %v4738, %v4746
    %v4749 = vmul.f32 %v4747, 1.442695
    %v4750 = vpow.pop %v4749
    %v4751 = vmul.f32 %v4748, 1.442695
    %v4752 = vpow.pop %v4751
    %v4753 = vsel %vm422, %v4750, 0.0
    %4754 = vadd.xlane.f32.xlu0 %v4753
    %v4755 = vpop.xlane.xlu0 %4754
    %v4756 = vsel %vm422, %v4752, 0.0
    %4757 = vadd.xlane.f32.xlu0 %v4756
    %v4758 = vpop.xlane.xlu0 %4757
    %v4759 = vrcp.pop %v4755
    %v4760 = vmul.f32 %v4750, %v4759
    %v4761 = vrcp.pop %v4758
    %v4762 = vmul.f32 %v4752, %v4761
    %v4763 = vcombine.high %v4760, 0.0
    %v4765 = vunpack.c.l.s4 1983009808
    %v4766 = vunpack.c.0.s8 %v4765
    %v4767 = vlaneseq
    %v4768 = vshrl.u32 %v4767, 7
    %v4769 = vsub.s32 %v4766, %v4768
    %v4770 = vrot.slane %v4760, %v4769
    %v4772 = vunpack.c.l.s4 1983009808
    %v4773 = vunpack.c.0.s8 %v4772
    %v4774 = vlaneseq
    %v4775 = vshrl.u32 %v4774, 7
    %v4776 = vsub.s32 %v4773, %v4775
    %v4777 = vrot.slane %v4763, %v4776
    %v4778 = vcombine.high %v4762, 0.0
    %v4780 = vunpack.c.l.s4 1983009808
    %v4781 = vunpack.c.0.s8 %v4780
    %v4782 = vlaneseq
    %v4783 = vshrl.u32 %v4782, 7
    %v4784 = vsub.s32 %v4781, %v4783
    %v4785 = vrot.slane %v4762, %v4784
    %v4787 = vunpack.c.l.s4 1983009808
    %v4788 = vunpack.c.0.s8 %v4787
    %v4789 = vlaneseq
    %v4790 = vshrl.u32 %v4789, 7
    %v4791 = vsub.s32 %v4788, %v4790
    %v4792 = vrot.slane %v4778, %v4791
    %v4793 = vcombine.low %v4770, %v4785
    %v4794 = vcombine.high %v4770, %v4785
    %v4796 = vunpack.c.l.s4 1934713408
    %v4797 = vunpack.c.0.s8 %v4796
    %v4798 = vlaneseq
    %v4799 = vshrl.u32 %v4798, 7
    %v4800 = vsub.s32 %v4797, %v4799
    %v4801 = vrot.slane %v4793, %v4800
    %v4803 = vunpack.c.l.s4 1934713408
    %v4804 = vunpack.c.0.s8 %v4803
    %v4805 = vlaneseq
    %v4806 = vshrl.u32 %v4805, 7
    %v4807 = vsub.s32 %v4804, %v4806
    %v4808 = vrot.slane %v4794, %v4807
    %v4809 = vcombine.low %v4777, %v4792
    %v4810 = vcombine.high %v4777, %v4792
    %v4812 = vunpack.c.l.s4 1934713408
    %v4813 = vunpack.c.0.s8 %v4812
    %v4814 = vlaneseq
    %v4815 = vshrl.u32 %v4814, 7
    %v4816 = vsub.s32 %v4813, %v4815
    %v4817 = vrot.slane %v4809, %v4816
    %v4819 = vunpack.c.l.s4 1934713408
    %v4820 = vunpack.c.0.s8 %v4819
    %v4821 = vlaneseq
    %v4822 = vshrl.u32 %v4821, 7
    %v4823 = vsub.s32 %v4820, %v4822
    %v4824 = vrot.slane %v4810, %v4823
    %v4825 = vcombine.high %v4801, 0.0
    %v4826 = vcombine.high %v4808, 0.0
    %v4827 = vcombine.high %v4817, 0.0
    %v4828 = vcombine.high %v4824, 0.0
    %4830 = vrot.lane.b32.xlu0 %v4825, 8
    %v4831 = vpop.permute.xlu0 %4830
    %4834 = vrot.lane.b32.xlu0 %v4808, 16
    %v4835 = vpop.permute.xlu0 %4834
    %4838 = vrot.lane.b32.xlu0 %v4826, 24
    %v4839 = vpop.permute.xlu0 %4838
    %4842 = vrot.lane.b32.xlu0 %v4817, 32
    %v4843 = vpop.permute.xlu0 %4842
    %4846 = vrot.lane.b32.xlu0 %v4827, 40
    %v4847 = vpop.permute.xlu0 %4846
    %4850 = vrot.lane.b32.xlu0 %v4824, 48
    %v4851 = vpop.permute.xlu0 %4850
    %4854 = vrot.lane.b32.xlu0 %v4828, 56
    %v4855 = vpop.permute.xlu0 %4854
    %v4857 = vsel %vm422, %v4801, %v4831
    %v4858 = vsel %vm270, %v4857, %v4835
    %v4859 = vsel %vm541, %v4858, %v4839
    %v4860 = vsel %vm181, %v4859, %v4843
    %v4861 = vsel %vm544, %v4860, %v4847
    %v4862 = vsel %vm546, %v4861, %v4851
    %v4863 = vsel %vm548, %v4862, %v4855
    %4865 = vrot.lane.b32.xlu0 %v4863, 64
    %v4866 = vpop.permute.xlu0 %4865
    %4868 = vst.msk [vmem:[%s4431] sm:$0x3] %vm987, %v4866
    %4869 = vrot.lane.b32.xlu0 %v4143, 80
    %v4870 = vpop.permute.xlu0 %4869
    %v4873 = vsel %vm422, %v4760, 0
    %4875 = vmatprep.subr.mxu0 0.0
    %4876 = vmatpush1.msra.mxu0 0.0
    %4877 = vmatprep.subr.mxu0 0.0
    %4878 = vmatpush1.msra.mxu0 0.0
    %4879 = vmatprep.subr.mxu0 0.0
    %4880 = vmatpush1.msra.mxu0 0.0
    %4881 = vmatprep.subr.mxu0 0.0
    %4882 = vmatpush1.msra.mxu0 0.0
    %4883 = vmatprep.subr.mxu0 0.0
    %4884 = vmatpush1.msra.mxu0 0.0
    %4885 = vmatprep.subr.mxu0 0.0
    %4886 = vmatpush1.msra.mxu0 0.0
    %4887 = vmatprep.subr.mxu0 0.0
    %4888 = vmatpush1.msra.mxu0 0.0
    %4889 = vmatprep.subr.mxu0 0.0
    %4890 = vmatpush1.msra.mxu0 0.0
    %4891 = vmatprep.subr.mxu0 0.0
    %4892 = vmatpush1.msra.mxu0 0.0
    %4893 = vmatprep.subr.mxu0 0.0
    %4894 = vmatpush1.msra.mxu0 0.0
    %4895 = vmatprep.subr.mxu0 0.0
    %4896 = vmatpush1.msra.mxu0 0.0
    %4897 = vmatprep.subr.mxu0 0.0
    %4898 = vmatpush1.msra.mxu0 0.0
    %4899 = vmatprep.subr.mxu0 0.0
    %4900 = vmatpush1.msra.mxu0 0.0
    %4901 = vmatprep.subr.mxu0 0.0
    %4902 = vmatpush1.msra.mxu0 0.0
    %4903 = vmatprep.subr.mxu0 0.0
    %4904 = vmatpush1.msra.mxu0 0.0
    %4905 = vmatprep.subr.mxu0 0.0
    %4906 = vmatpush1.msra.mxu0 %v4870
    %4907 = vmatprep.subr.mxu0 0.0
    %4908 = vmatpush2.msra.mxu0 0.0
    %4909 = vmatprep.subr.mxu0 0.0
    %4910 = vmatpush2.msra.mxu0 0.0
    %4911 = vmatprep.subr.mxu0 0.0
    %4912 = vmatpush2.msra.mxu0 0.0
    %4913 = vmatprep.subr.mxu0 0.0
    %4914 = vmatpush2.msra.mxu0 0.0
    %4915 = vmatprep.subr.mxu0 0.0
    %4916 = vmatpush2.msra.mxu0 0.0
    %4917 = vmatprep.subr.mxu0 0.0
    %4918 = vmatpush2.msra.mxu0 0.0
    %4919 = vmatprep.subr.mxu0 0.0
    %4920 = vmatpush2.msra.mxu0 0.0
    %4921 = vmatprep.subr.mxu0 0.0
    %4922 = vmatpush2.msra.mxu0 0.0
    %4923 = vmatprep.subr.mxu0 0.0
    %4924 = vmatpush2.msra.mxu0 0.0
    %4925 = vmatprep.subr.mxu0 0.0
    %4926 = vmatpush2.msra.mxu0 0.0
    %4927 = vmatprep.subr.mxu0 0.0
    %4928 = vmatpush2.msra.mxu0 0.0
    %4929 = vmatprep.subr.mxu0 0.0
    %4930 = vmatpush2.msra.mxu0 0.0
    %4931 = vmatprep.subr.mxu0 0.0
    %4932 = vmatpush2.msra.mxu0 0.0
    %4933 = vmatprep.subr.mxu0 0.0
    %4934 = vmatpush2.msra.mxu0 0.0
    %4935 = vmatprep.subr.mxu0 0.0
    %4936 = vmatpush2.msra.mxu0 0.0
    %4937 = vmatprep.subr.mxu0 0.0
    %4938 = vmatpush2.msra.mxu0 0.0
    %4939 = vmatprep.mubr.f32.mxu0 0.0
    %4940 = vmatmul.mubr.f32.gmra.mxu0 %v4873
    %v4941 = vpop.f32.mrf.mxu0
    %v4942 = vadd.f32 0.0, %v4941
    %v4943 = vpop.f32.mrf.mxu0
    %4944 = vdwg.mxu0
    %4945 = vrot.lane.b32.xlu0 %v4148, 80
    %v4946 = vpop.permute.xlu0 %4945
    %v4949 = vsel %vm422, %v4762, 0
    %4951 = vmatprep.subr.mxu0 0.0
    %4952 = vmatpush1.msra.mxu0 0.0
    %4953 = vmatprep.subr.mxu0 0.0
    %4954 = vmatpush1.msra.mxu0 0.0
    %4955 = vmatprep.subr.mxu0 0.0
    %4956 = vmatpush1.msra.mxu0 0.0
    %4957 = vmatprep.subr.mxu0 0.0
    %4958 = vmatpush1.msra.mxu0 0.0
    %4959 = vmatprep.subr.mxu0 0.0
    %4960 = vmatpush1.msra.mxu0 0.0
    %4961 = vmatprep.subr.mxu0 0.0
    %4962 = vmatpush1.msra.mxu0 0.0
    %4963 = vmatprep.subr.mxu0 0.0
    %4964 = vmatpush1.msra.mxu0 0.0
    %4965 = vmatprep.subr.mxu0 0.0
    %4966 = vmatpush1.msra.mxu0 0.0
    %4967 = vmatprep.subr.mxu0 0.0
    %4968 = vmatpush1.msra.mxu0 0.0
    %4969 = vmatprep.subr.mxu0 0.0
    %4970 = vmatpush1.msra.mxu0 0.0
    %4971 = vmatprep.subr.mxu0 0.0
    %4972 = vmatpush1.msra.mxu0 0.0
    %4973 = vmatprep.subr.mxu0 0.0
    %4974 = vmatpush1.msra.mxu0 0.0
    %4975 = vmatprep.subr.mxu0 0.0
    %4976 = vmatpush1.msra.mxu0 0.0
    %4977 = vmatprep.subr.mxu0 0.0
    %4978 = vmatpush1.msra.mxu0 0.0
    %4979 = vmatprep.subr.mxu0 0.0
    %4980 = vmatpush1.msra.mxu0 0.0
    %4981 = vmatprep.subr.mxu0 0.0
    %4982 = vmatpush1.msra.mxu0 %v4946
    %4983 = vmatprep.subr.mxu0 0.0
    %4984 = vmatpush2.msra.mxu0 0.0
    %4985 = vmatprep.subr.mxu0 0.0
    %4986 = vmatpush2.msra.mxu0 0.0
    %4987 = vmatprep.subr.mxu0 0.0
    %4988 = vmatpush2.msra.mxu0 0.0
    %4989 = vmatprep.subr.mxu0 0.0
    %4990 = vmatpush2.msra.mxu0 0.0
    %4991 = vmatprep.subr.mxu0 0.0
    %4992 = vmatpush2.msra.mxu0 0.0
    %4993 = vmatprep.subr.mxu0 0.0
    %4994 = vmatpush2.msra.mxu0 0.0
    %4995 = vmatprep.subr.mxu0 0.0
    %4996 = vmatpush2.msra.mxu0 0.0
    %4997 = vmatprep.subr.mxu0 0.0
    %4998 = vmatpush2.msra.mxu0 0.0
    %4999 = vmatprep.subr.mxu0 0.0
    %5000 = vmatpush2.msra.mxu0 0.0
    %5001 = vmatprep.subr.mxu0 0.0
    %5002 = vmatpush2.msra.mxu0 0.0
    %5003 = vmatprep.subr.mxu0 0.0
    %5004 = vmatpush2.msra.mxu0 0.0
    %5005 = vmatprep.subr.mxu0 0.0
    %5006 = vmatpush2.msra.mxu0 0.0
    %5007 = vmatprep.subr.mxu0 0.0
    %5008 = vmatpush2.msra.mxu0 0.0
    %5009 = vmatprep.subr.mxu0 0.0
    %5010 = vmatpush2.msra.mxu0 0.0
    %5011 = vmatprep.subr.mxu0 0.0
    %5012 = vmatpush2.msra.mxu0 0.0
    %5013 = vmatprep.subr.mxu0 0.0
    %5014 = vmatpush2.msra.mxu0 0.0
    %5015 = vmatprep.mubr.f32.mxu0 0.0
    %5016 = vmatmul.mubr.f32.gmra.mxu0 %v4949
    %v5017 = vpop.f32.mrf.mxu0
    %v5018 = vadd.f32 0.0, %v5017
    %v5019 = vpop.f32.mrf.mxu0
    %5020 = vdwg.mxu0
    %v5022 = vsel %vm270, %v4942, 0
    %v5025 = vsel %vm270, %v5018, 0
    %5027 = vmatprep.subr.mxu0 0.0
    %5028 = vmatpush1.msra.mxu0 0.0
    %5029 = vmatprep.subr.mxu0 0.0
    %5030 = vmatpush1.msra.mxu0 0.0
    %5031 = vmatprep.subr.mxu0 0.0
    %5032 = vmatpush1.msra.mxu0 0.0
    %5033 = vmatprep.subr.mxu0 0.0
    %5034 = vmatpush1.msra.mxu0 0.0
    %5035 = vmatprep.subr.mxu0 0.0
    %5036 = vmatpush1.msra.mxu0 0.0
    %5037 = vmatprep.subr.mxu0 0.0
    %5038 = vmatpush1.msra.mxu0 0.0
    %5039 = vmatprep.subr.mxu0 0.0
    %5040 = vmatpush1.msra.mxu0 0.0
    %5041 = vmatprep.subr.mxu0 0.0
    %5042 = vmatpush1.msra.mxu0 0.0
    %5043 = vmatprep.subr.mxu0 0.0
    %5044 = vmatpush1.msra.mxu0 0.0
    %5045 = vmatprep.subr.mxu0 0.0
    %5046 = vmatpush1.msra.mxu0 0.0
    %5047 = vmatprep.subr.mxu0 0.0
    %5048 = vmatpush1.msra.mxu0 0.0
    %5049 = vmatprep.subr.mxu0 0.0
    %5050 = vmatpush1.msra.mxu0 0.0
    %5051 = vmatprep.subr.mxu0 0.0
    %5052 = vmatpush1.msra.mxu0 0.0
    %5053 = vmatprep.subr.mxu0 0.0
    %5054 = vmatpush1.msra.mxu0 0.0
    %5055 = vmatprep.subr.mxu0 0.0
    %5056 = vmatpush1.msra.mxu0 %v4155
    %5057 = vmatprep.subr.mxu0 0.0
    %5058 = vmatpush1.msra.mxu0 %v4154
    %5059 = vmatprep.subr.mxu0 0.0
    %5060 = vmatpush2.msra.mxu0 0.0
    %5061 = vmatprep.subr.mxu0 0.0
    %5062 = vmatpush2.msra.mxu0 0.0
    %5063 = vmatprep.subr.mxu0 0.0
    %5064 = vmatpush2.msra.mxu0 0.0
    %5065 = vmatprep.subr.mxu0 0.0
    %5066 = vmatpush2.msra.mxu0 0.0
    %5067 = vmatprep.subr.mxu0 0.0
    %5068 = vmatpush2.msra.mxu0 0.0
    %5069 = vmatprep.subr.mxu0 0.0
    %5070 = vmatpush2.msra.mxu0 0.0
    %5071 = vmatprep.subr.mxu0 0.0
    %5072 = vmatpush2.msra.mxu0 0.0
    %5073 = vmatprep.subr.mxu0 0.0
    %5074 = vmatpush2.msra.mxu0 0.0
    %5075 = vmatprep.subr.mxu0 0.0
    %5076 = vmatpush2.msra.mxu0 0.0
    %5077 = vmatprep.subr.mxu0 0.0
    %5078 = vmatpush2.msra.mxu0 0.0
    %5079 = vmatprep.subr.mxu0 0.0
    %5080 = vmatpush2.msra.mxu0 0.0
    %5081 = vmatprep.subr.mxu0 0.0
    %5082 = vmatpush2.msra.mxu0 0.0
    %5083 = vmatprep.subr.mxu0 0.0
    %5084 = vmatpush2.msra.mxu0 0.0
    %5085 = vmatprep.subr.mxu0 0.0
    %5086 = vmatpush2.msra.mxu0 0.0
    %5087 = vmatprep.subr.mxu0 0.0
    %5088 = vmatpush2.msra.mxu0 0.0
    %5089 = vmatprep.subr.mxu0 0.0
    %5090 = vmatpush2.msra.mxu0 0.0
    %5091 = vmatprep.mubr.f32.mxu0 0.0
    %5092 = vmatmul.mubr.f32.gmra.mxu0 %v5022
    %v5093 = vpop.f32.mrf.mxu0
    %v5094 = vadd.f32 0.0, %v5093
    %v5095 = vpop.f32.mrf.mxu0
    %5096 = vmatprep.mubr.f32.mxu0 0.0
    %5097 = vmatmul.mubr.f32.gmra.mxu0 %v5025
    %v5098 = vpop.f32.mrf.mxu0
    %v5099 = vadd.f32 0.0, %v5098
    %v5100 = vpop.f32.mrf.mxu0
    %5101 = vdwg.mxu0
    %v5103 = vsel %vm270, %v4506, 0
    %v5106 = vsel %vm270, %v4582, 0
    %5108 = vmatprep.subr.mxu0 0.0
    %5109 = vmatpush1.msra.mxu0 0.0
    %5110 = vmatprep.subr.mxu0 0.0
    %5111 = vmatpush1.msra.mxu0 0.0
    %5112 = vmatprep.subr.mxu0 0.0
    %5113 = vmatpush1.msra.mxu0 0.0
    %5114 = vmatprep.subr.mxu0 0.0
    %5115 = vmatpush1.msra.mxu0 0.0
    %5116 = vmatprep.subr.mxu0 0.0
    %5117 = vmatpush1.msra.mxu0 0.0
    %5118 = vmatprep.subr.mxu0 0.0
    %5119 = vmatpush1.msra.mxu0 0.0
    %5120 = vmatprep.subr.mxu0 0.0
    %5121 = vmatpush1.msra.mxu0 0.0
    %5122 = vmatprep.subr.mxu0 0.0
    %5123 = vmatpush1.msra.mxu0 0.0
    %5124 = vmatprep.subr.mxu0 0.0
    %5125 = vmatpush1.msra.mxu0 0.0
    %5126 = vmatprep.subr.mxu0 0.0
    %5127 = vmatpush1.msra.mxu0 0.0
    %5128 = vmatprep.subr.mxu0 0.0
    %5129 = vmatpush1.msra.mxu0 0.0
    %5130 = vmatprep.subr.mxu0 0.0
    %5131 = vmatpush1.msra.mxu0 0.0
    %5132 = vmatprep.subr.mxu0 0.0
    %5133 = vmatpush1.msra.mxu0 0.0
    %5134 = vmatprep.subr.mxu0 0.0
    %5135 = vmatpush1.msra.mxu0 0.0
    %5136 = vmatprep.subr.mxu0 0.0
    %5137 = vmatpush1.msra.mxu0 %v4153
    %5138 = vmatprep.subr.mxu0 0.0
    %5139 = vmatpush1.msra.mxu0 %v4152
    %5140 = vmatprep.subr.mxu0 0.0
    %5141 = vmatpush2.msra.mxu0 0.0
    %5142 = vmatprep.subr.mxu0 0.0
    %5143 = vmatpush2.msra.mxu0 0.0
    %5144 = vmatprep.subr.mxu0 0.0
    %5145 = vmatpush2.msra.mxu0 0.0
    %5146 = vmatprep.subr.mxu0 0.0
    %5147 = vmatpush2.msra.mxu0 0.0
    %5148 = vmatprep.subr.mxu0 0.0
    %5149 = vmatpush2.msra.mxu0 0.0
    %5150 = vmatprep.subr.mxu0 0.0
    %5151 = vmatpush2.msra.mxu0 0.0
    %5152 = vmatprep.subr.mxu0 0.0
    %5153 = vmatpush2.msra.mxu0 0.0
    %5154 = vmatprep.subr.mxu0 0.0
    %5155 = vmatpush2.msra.mxu0 0.0
    %5156 = vmatprep.subr.mxu0 0.0
    %5157 = vmatpush2.msra.mxu0 0.0
    %5158 = vmatprep.subr.mxu0 0.0
    %5159 = vmatpush2.msra.mxu0 0.0
    %5160 = vmatprep.subr.mxu0 0.0
    %5161 = vmatpush2.msra.mxu0 0.0
    %5162 = vmatprep.subr.mxu0 0.0
    %5163 = vmatpush2.msra.mxu0 0.0
    %5164 = vmatprep.subr.mxu0 0.0
    %5165 = vmatpush2.msra.mxu0 0.0
    %5166 = vmatprep.subr.mxu0 0.0
    %5167 = vmatpush2.msra.mxu0 0.0
    %5168 = vmatprep.subr.mxu0 0.0
    %5169 = vmatpush2.msra.mxu0 0.0
    %5170 = vmatprep.subr.mxu0 0.0
    %5171 = vmatpush2.msra.mxu0 0.0
    %5172 = vmatprep.mubr.f32.mxu0 0.0
    %5173 = vmatmul.mubr.f32.gmra.mxu0 %v5103
    %v5174 = vpop.f32.mrf.mxu0
    %v5175 = vadd.f32 %v5094, %v5174
    %v5176 = vpop.f32.mrf.mxu0
    %5177 = vmatprep.mubr.f32.mxu0 0.0
    %5178 = vmatmul.mubr.f32.gmra.mxu0 %v5106
    %v5179 = vpop.f32.mrf.mxu0
    %v5180 = vadd.f32 %v5099, %v5179
    %v5181 = vpop.f32.mrf.mxu0
    %5182 = vdwg.mxu0
    %v5183 = vadd.f32 %v5175, %v3983
    %v5184 = vadd.f32 %v5180, %v3984
    %s5185 = scalar_lea.vmem [#allocation8], 1
    %v5186 = vld [vmem:[%s5185] sm:$0x1]
    %s5187 = scalar_lea.vmem [#allocation10], 1
    %v5188 = vld [vmem:[%s5187] sm:$0x1]
    %v5189 = vsel %vm181, %v5183, 0.0
    %5190 = vadd.xlane.f32.xlu0 %v5189
    %v5191 = vpop.xlane.xlu0 %5190
    %v5192 = vsel %vm181, %v5184, 0.0
    %5193 = vadd.xlane.f32.xlu0 %v5192
    %v5194 = vpop.xlane.xlu0 %5193
    %v5195 = vmul.f32 %v5191, %v1313
    %v5196 = vmul.f32 %v5194, %v1313
    %v5197 = vsub.f32 %v5183, %v5195
    %v5198 = vsub.f32 %v5184, %v5196
    %v5199 = vmul.f32 %v5197, %v5197
    %v5200 = vmul.f32 %v5198, %v5198
    %v5201 = vsel %vm181, %v5199, 0.0
    %5202 = vadd.xlane.f32.xlu0 %v5201
    %v5203 = vpop.xlane.xlu0 %5202
    %v5204 = vsel %vm181, %v5200, 0.0
    %5205 = vadd.xlane.f32.xlu0 %v5204
    %v5206 = vpop.xlane.xlu0 %5205
    %v5207 = vmul.f32 %v5203, %v1313
    %v5208 = vmul.f32 %v5206, %v1313
    %v5209 = vadd.f32 %v5207, 1e-05
    %v5210 = vadd.f32 %v5208, 1e-05
    %v5211 = vrsqrt.pop %v5209
    %v5212 = vrsqrt.pop %v5210
    %v5213 = vmul.f32 %v5197, %v5211
    %v5214 = vmul.f32 %v5198, %v5212
    %v5216 = vlaneseq
    %v5217 = vshrl.u32 %v5216, 7
    %v5218 = vsub.s32 0, %v5217
    %v5219 = vrot.slane %v5186, %v5218
    %v5221 = vmul.f32 %v5213, %v5219
    %v5222 = vmul.f32 %v5214, %v5219
    %v5224 = vlaneseq
    %v5225 = vshrl.u32 %v5224, 7
    %v5226 = vsub.s32 0, %v5225
    %v5227 = vrot.slane %v5188, %v5226
    %v5229 = vadd.f32 %v5221, %v5227
    %v5230 = vadd.f32 %v5222, %v5227
    %s5231 = scalar_lea.vmem [#allocation11], 32
    %v5232 = vld [vmem:[%s5231] sm:$0xff]
    %v5233 = vld [vmem:[%s5231 + $0x8] sm:$0xff]
    %v5234 = vld [vmem:[%s5231 + $0x10] sm:$0xff]
    %v5235 = vld [vmem:[%s5231 + $0x18] sm:$0xff]
    %v5237 = vsel %vm181, %v5229, 0
    %v5240 = vsel %vm181, %v5230, 0
    %5242 = vmatprep.subr.mxu0 0.0
    %5243 = vmatpush1.msra.mxu0 0.0
    %5244 = vmatprep.subr.mxu0 0.0
    %5245 = vmatpush1.msra.mxu0 0.0
    %5246 = vmatprep.subr.mxu0 0.0
    %5247 = vmatpush1.msra.mxu0 0.0
    %5248 = vmatprep.subr.mxu0 0.0
    %5249 = vmatpush1.msra.mxu0 0.0
    %5250 = vmatprep.subr.mxu0 0.0
    %5251 = vmatpush1.msra.mxu0 0.0
    %5252 = vmatprep.subr.mxu0 0.0
    %5253 = vmatpush1.msra.mxu0 0.0
    %5254 = vmatprep.subr.mxu0 0.0
    %5255 = vmatpush1.msra.mxu0 0.0
    %5256 = vmatprep.subr.mxu0 0.0
    %5257 = vmatpush1.msra.mxu0 0.0
    %5258 = vmatprep.subr.mxu0 0.0
    %5259 = vmatpush1.msra.mxu0 0.0
    %5260 = vmatprep.subr.mxu0 0.0
    %5261 = vmatpush1.msra.mxu0 0.0
    %5262 = vmatprep.subr.mxu0 0.0
    %5263 = vmatpush1.msra.mxu0 0.0
    %5264 = vmatprep.subr.mxu0 0.0
    %5265 = vmatpush1.msra.mxu0 0.0
    %5266 = vmatprep.subr.mxu0 0.0
    %5267 = vmatpush1.msra.mxu0 %v5235
    %5268 = vmatprep.subr.mxu0 0.0
    %5269 = vmatpush1.msra.mxu0 %v5234
    %5270 = vmatprep.subr.mxu0 0.0
    %5271 = vmatpush1.msra.mxu0 %v5233
    %5272 = vmatprep.subr.mxu0 0.0
    %5273 = vmatpush1.msra.mxu0 %v5232
    %5274 = vmatprep.subr.mxu0 0.0
    %5275 = vmatpush2.msra.mxu0 0.0
    %5276 = vmatprep.subr.mxu0 0.0
    %5277 = vmatpush2.msra.mxu0 0.0
    %5278 = vmatprep.subr.mxu0 0.0
    %5279 = vmatpush2.msra.mxu0 0.0
    %5280 = vmatprep.subr.mxu0 0.0
    %5281 = vmatpush2.msra.mxu0 0.0
    %5282 = vmatprep.subr.mxu0 0.0
    %5283 = vmatpush2.msra.mxu0 0.0
    %5284 = vmatprep.subr.mxu0 0.0
    %5285 = vmatpush2.msra.mxu0 0.0
    %5286 = vmatprep.subr.mxu0 0.0
    %5287 = vmatpush2.msra.mxu0 0.0
    %5288 = vmatprep.subr.mxu0 0.0
    %5289 = vmatpush2.msra.mxu0 0.0
    %5290 = vmatprep.subr.mxu0 0.0
    %5291 = vmatpush2.msra.mxu0 0.0
    %5292 = vmatprep.subr.mxu0 0.0
    %5293 = vmatpush2.msra.mxu0 0.0
    %5294 = vmatprep.subr.mxu0 0.0
    %5295 = vmatpush2.msra.mxu0 0.0
    %5296 = vmatprep.subr.mxu0 0.0
    %5297 = vmatpush2.msra.mxu0 0.0
    %5298 = vmatprep.subr.mxu0 0.0
    %5299 = vmatpush2.msra.mxu0 0.0
    %5300 = vmatprep.subr.mxu0 0.0
    %5301 = vmatpush2.msra.mxu0 0.0
    %5302 = vmatprep.subr.mxu0 0.0
    %5303 = vmatpush2.msra.mxu0 0.0
    %5304 = vmatprep.subr.mxu0 0.0
    %5305 = vmatpush2.msra.mxu0 0.0
    %5306 = vmatprep.mubr.f32.mxu0 0.0
    %5307 = vmatmul.mubr.f32.gmra.mxu0 %v5237
    %v5308 = vpop.f32.mrf.mxu0
    %v5309 = vadd.f32 0.0, %v5308
    %v5310 = vpop.f32.mrf.mxu0
    %5311 = vmatprep.mubr.f32.mxu0 0.0
    %5312 = vmatmul.mubr.f32.gmra.mxu0 %v5240
    %v5313 = vpop.f32.mrf.mxu0
    %v5314 = vadd.f32 0.0, %v5313
    %v5315 = vpop.f32.mrf.mxu0
    %5316 = vdwg.mxu0
    %v5317 = vmax.f32 %v5309, 0.0
    %v5318 = vmax.f32 %v5314, 0.0
    %s5319 = scalar_lea.vmem %s14, 64
    %v5320 = vld [vmem:[%s5319] sm:$0xff]
    %v5321 = vld [vmem:[%s5319 + $0x8] sm:$0xff]
    %v5322 = vld [vmem:[%s5319 + $0x10] sm:$0xff]
    %v5323 = vld [vmem:[%s5319 + $0x18] sm:$0xff]
    %v5324 = vld [vmem:[%s5319 + $0x20] sm:$0xff]
    %v5325 = vld [vmem:[%s5319 + $0x28] sm:$0xff]
    %v5326 = vld [vmem:[%s5319 + $0x30] sm:$0xff]
    %v5327 = vld [vmem:[%s5319 + $0x38] sm:$0xff]
    %v5329 = vsel %vm2691, %v5317, 0
    %v5332 = vsel %vm2691, %v5318, 0
    %5334 = vmatprep.subr.mxu0 0.0
    %5335 = vmatpush1.msra.mxu0 0.0
    %5336 = vmatprep.subr.mxu0 0.0
    %5337 = vmatpush1.msra.mxu0 0.0
    %5338 = vmatprep.subr.mxu0 0.0
    %5339 = vmatpush1.msra.mxu0 0.0
    %5340 = vmatprep.subr.mxu0 0.0
    %5341 = vmatpush1.msra.mxu0 0.0
    %5342 = vmatprep.subr.mxu0 0.0
    %5343 = vmatpush1.msra.mxu0 0.0
    %5344 = vmatprep.subr.mxu0 0.0
    %5345 = vmatpush1.msra.mxu0 0.0
    %5346 = vmatprep.subr.mxu0 0.0
    %5347 = vmatpush1.msra.mxu0 0.0
    %5348 = vmatprep.subr.mxu0 0.0
    %5349 = vmatpush1.msra.mxu0 0.0
    %5350 = vmatprep.subr.mxu0 0.0
    %5351 = vmatpush1.msra.mxu0 %v5327
    %5352 = vmatprep.subr.mxu0 0.0
    %5353 = vmatpush1.msra.mxu0 %v5326
    %5354 = vmatprep.subr.mxu0 0.0
    %5355 = vmatpush1.msra.mxu0 %v5325
    %5356 = vmatprep.subr.mxu0 0.0
    %5357 = vmatpush1.msra.mxu0 %v5324
    %5358 = vmatprep.subr.mxu0 0.0
    %5359 = vmatpush1.msra.mxu0 %v5323
    %5360 = vmatprep.subr.mxu0 0.0
    %5361 = vmatpush1.msra.mxu0 %v5322
    %5362 = vmatprep.subr.mxu0 0.0
    %5363 = vmatpush1.msra.mxu0 %v5321
    %5364 = vmatprep.subr.mxu0 0.0
    %5365 = vmatpush1.msra.mxu0 %v5320
    %5366 = vmatprep.subr.mxu0 0.0
    %5367 = vmatpush2.msra.mxu0 0.0
    %5368 = vmatprep.subr.mxu0 0.0
    %5369 = vmatpush2.msra.mxu0 0.0
    %5370 = vmatprep.subr.mxu0 0.0
    %5371 = vmatpush2.msra.mxu0 0.0
    %5372 = vmatprep.subr.mxu0 0.0
    %5373 = vmatpush2.msra.mxu0 0.0
    %5374 = vmatprep.subr.mxu0 0.0
    %5375 = vmatpush2.msra.mxu0 0.0
    %5376 = vmatprep.subr.mxu0 0.0
    %5377 = vmatpush2.msra.mxu0 0.0
    %5378 = vmatprep.subr.mxu0 0.0
    %5379 = vmatpush2.msra.mxu0 0.0
    %5380 = vmatprep.subr.mxu0 0.0
    %5381 = vmatpush2.msra.mxu0 0.0
    %5382 = vmatprep.subr.mxu0 0.0
    %5383 = vmatpush2.msra.mxu0 0.0
    %5384 = vmatprep.subr.mxu0 0.0
    %5385 = vmatpush2.msra.mxu0 0.0
    %5386 = vmatprep.subr.mxu0 0.0
    %5387 = vmatpush2.msra.mxu0 0.0
    %5388 = vmatprep.subr.mxu0 0.0
    %5389 = vmatpush2.msra.mxu0 0.0
    %5390 = vmatprep.subr.mxu0 0.0
    %5391 = vmatpush2.msra.mxu0 0.0
    %5392 = vmatprep.subr.mxu0 0.0
    %5393 = vmatpush2.msra.mxu0 0.0
    %5394 = vmatprep.subr.mxu0 0.0
    %5395 = vmatpush2.msra.mxu0 0.0
    %5396 = vmatprep.subr.mxu0 0.0
    %5397 = vmatpush2.msra.mxu0 0.0
    %5398 = vmatprep.mubr.f32.mxu0 0.0
    %5399 = vmatmul.mubr.f32.gmra.mxu0 %v5329
    %v5400 = vpop.f32.mrf.mxu0
    %v5401 = vadd.f32 %v5229, %v5400
    %v5402 = vpop.f32.mrf.mxu0
    %5403 = vmatprep.mubr.f32.mxu0 0.0
    %5404 = vmatmul.mubr.f32.gmra.mxu0 %v5332
    %v5405 = vpop.f32.mrf.mxu0
    %v5406 = vadd.f32 %v5230, %v5405
    %v5407 = vpop.f32.mrf.mxu0
    %5408 = vdwg.mxu0
    %s5409 = scalar_lea.vmem [#allocation13], 1
    %v5410 = vld [vmem:[%s5409] sm:$0x1]
    %s5411 = scalar_lea.vmem [#allocation14], 1
    %v5412 = vld [vmem:[%s5411] sm:$0x1]
    %v5413 = vsel %vm181, %v5401, 0.0
    %5414 = vadd.xlane.f32.xlu0 %v5413
    %v5415 = vpop.xlane.xlu0 %5414
    %v5416 = vsel %vm181, %v5406, 0.0
    %5417 = vadd.xlane.f32.xlu0 %v5416
    %v5418 = vpop.xlane.xlu0 %5417
    %v5419 = vmul.f32 %v5415, %v1313
    %v5420 = vmul.f32 %v5418, %v1313
    %v5421 = vsub.f32 %v5401, %v5419
    %v5422 = vsub.f32 %v5406, %v5420
    %v5423 = vmul.f32 %v5421, %v5421
    %v5424 = vmul.f32 %v5422, %v5422
    %v5425 = vsel %vm181, %v5423, 0.0
    %5426 = vadd.xlane.f32.xlu0 %v5425
    %v5427 = vpop.xlane.xlu0 %5426
    %v5428 = vsel %vm181, %v5424, 0.0
    %5429 = vadd.xlane.f32.xlu0 %v5428
    %v5430 = vpop.xlane.xlu0 %5429
    %v5431 = vmul.f32 %v5427, %v1313
    %v5432 = vmul.f32 %v5430, %v1313
    %v5433 = vadd.f32 %v5431, 1e-05
    %v5434 = vadd.f32 %v5432, 1e-05
    %v5435 = vrsqrt.pop %v5433
    %v5436 = vrsqrt.pop %v5434
    %v5437 = vmul.f32 %v5421, %v5435
    %v5438 = vmul.f32 %v5422, %v5436
    %v5440 = vlaneseq
    %v5441 = vshrl.u32 %v5440, 7
    %v5442 = vsub.s32 0, %v5441
    %v5443 = vrot.slane %v5410, %v5442
    %v5445 = vmul.f32 %v5437, %v5443
    %v5446 = vmul.f32 %v5438, %v5443
    %v5448 = vlaneseq
    %v5449 = vshrl.u32 %v5448, 7
    %v5450 = vsub.s32 0, %v5449
    %v5451 = vrot.slane %v5412, %v5450
    %v5453 = vadd.f32 %v5445, %v5451
    %v5454 = vadd.f32 %v5446, %v5451
    %5455 = vst.msk [vmem:[#allocation16] sm:$0xff] %vm181, %v5453
    %5456 = vst.msk [vmem:[#allocation16 + $0x8] sm:$0xff] %vm181, %v5454
    // Predicated region
    $region102: #{decoder_forward.1} parent=1 // pred_check
      _
    $region103: #{decoder_forward.1} parent=1 // pred_check_branch
      %5458 = sbr.rel (0) target = $region105
    $region104: #{decoder_forward.1} parent=1 // pred_region
      %s5460 = ssub.s32 256, 256
      %5461 = vsyncadd [#allocation4], %s5460
      %s5462 = sshll.u32 [#allocation16], 4
      %s5463 = int_to_ptr.vmem [resolvable:$true] %s5462
      %5468 = dma.vmem_to_hbm [thread:$0]  %s5463, 256, %s17, [#allocation4], 128, 128, 8
    $region105: #{decoder_forward.1} parent=1 // pred_fallthru
      _
    // Predicated region
    $region106: #{decoder_forward.1} parent=1 // pred_check
      _
    $region107: #{decoder_forward.1} parent=1 // pred_check_branch
      %5470 = sbr.rel (0) target = $region109
    $region108: #{decoder_forward.1} parent=1 // pred_region
      _
    $region109: #{decoder_forward.1} parent=1 // pred_fallthru
      _
    // Predicated region
    $region110: #{decoder_forward.1} parent=1 // pred_check
      _
    $region111: #{decoder_forward.1} parent=1 // pred_check_branch
      %5472 = sbr.rel (0) target = $region113
    $region112: #{decoder_forward.1} parent=1 // pred_region
      _
    $region113: #{decoder_forward.1} parent=1 // pred_fallthru
      _
    // Predicated region
    $region114: #{decoder_forward.1} parent=1 // pred_check
      _
    $region115: #{decoder_forward.1} parent=1 // pred_check_branch
      %5474 = sbr.rel (0) target = $region117
    $region116: #{decoder_forward.1} parent=1 // pred_region
      %5475 = dma.done [#allocation4], 256
    $region117: #{decoder_forward.1} parent=1 // pred_fallthru
      _
    // Predicated region
    $region118: #{decoder_forward.1} parent=1 // pred_check
      _
    $region119: #{decoder_forward.1} parent=1 // pred_check_branch
      %5477 = sbr.rel (0) target = $region121
    $region120: #{decoder_forward.1} parent=1 // pred_region
      _
    $region121: #{decoder_forward.1} parent=1 // pred_fallthru
      _
    // Predicated region
    $region122: #{decoder_forward.1} parent=1 // pred_check
      _
    $region123: #{decoder_forward.1} parent=1 // pred_check_branch
      %5479 = sbr.rel (0) target = $region125
    $region124: #{decoder_forward.1} parent=1 // pred_region
      _
    $region125: #{decoder_forward.1} parent=1 // pred_fallthru
      _
    %5480 = vsyncpa [#allocation3], 1
    %5481 = vsyncpa [#allocation6], 1
    %5482 = vsyncpa [#allocation9], 1
    %5483 = vsyncpa [#allocation12], 1
    %5484 = vsyncpa [#allocation15], 1
    %5485 = vsyncpa [#allocation4], 1

</llo_original>
